<compile_context>
chip_gen: v7x
topology: tpu7x:2x2x1
jax: 0.10.0
libtpu: 0.0.40
codegen_flags: <defaults>
</compile_context>

<pallas_src>
import jax
import jax.numpy as jnp
from jax import lax
from jax.experimental import pallas as pl
from jax.experimental.pallas import tpu as pltpu

BN_EPS = 1e-5
VMEM_LIMIT_BYTES = 48 * 1024 * 1024  # > 16/32 MiB defaults, < v7x 64 MiB physical


# ----------------------------------------------------------------------------
# Pallas kernels
# ----------------------------------------------------------------------------
def _sage_agg_first_kernel(a_ref, xs_ref, xd_ref, wl_ref, wr_ref, b_ref,
                           scale_ref, shift_ref, out_ref, acc_ref):
    """out = BN(ReLU( (A @ X_src) @ Wl + X_dst @ Wr + b )); used when F_src <= H.

    Grid = (dst row tiles, src/K tiles); acc_ref accumulates A @ X_src in f32.
    """
    k = pl.program_id(1)

    @pl.when(k == 0)
    def _():
        acc_ref[...] = jnp.zeros_like(acc_ref)

    acc_ref[...] += jnp.dot(a_ref[...], xs_ref[...],
                            preferred_element_type=jnp.float32)

    @pl.when(k == pl.num_programs(1) - 1)
    def _():
        agg = acc_ref[...].astype(wl_ref.dtype)
        h = (jnp.dot(agg, wl_ref[...], preferred_element_type=jnp.float32)
             + jnp.dot(xd_ref[...], wr_ref[...], preferred_element_type=jnp.float32)
             + b_ref[...])
        out_ref[...] = (jnp.maximum(h, 0.0) * scale_ref[...]
                        + shift_ref[...]).astype(out_ref.dtype)


def _sage_proj_first_kernel(a_ref, ps_ref, xd_ref, wr_ref, b_ref,
                            scale_ref, shift_ref, out_ref, acc_ref):
    """out = BN(ReLU( A @ (X_src @ Wl) + X_dst @ Wr + b )); used when F_src > H.

    ps_ref holds the pre-projected sources (X_src @ Wl), computed once by
    _project_kernel instead of per destination-row tile.  The root/dst path
    seeds the accumulator at k == 0 so the Wr matmul overlaps the K-loop.
    """
    k = pl.program_id(1)

    @pl.when(k == 0)
    def _():
        acc_ref[...] = (jnp.dot(xd_ref[...], wr_ref[...],
                                preferred_element_type=jnp.float32)
                        + b_ref[...])

    acc_ref[...] += jnp.dot(a_ref[...], ps_ref[...],
                            preferred_element_type=jnp.float32)

    @pl.when(k == pl.num_programs(1) - 1)
    def _():
        out_ref[...] = (jnp.maximum(acc_ref[...], 0.0) * scale_ref[...]
                        + shift_ref[...]).astype(out_ref.dtype)


def _project_kernel(x_ref, w_ref, out_ref):
    """Row-tiled projection X_src @ Wl -> bf16 (used by the proj-first path)."""
    out_ref[...] = jnp.dot(x_ref[...], w_ref[...],
                           preferred_element_type=jnp.float32).astype(out_ref.dtype)


def _edge_mlp_kernel(lf_ref, tf_ref, w1l_ref, w1t_ref, b1_ref, w2_ref, b2_ref,
                     out_ref):
    """edge_predictor: Linear(2H,H) -> ReLU -> (Dropout=id) -> Linear(H,1).

    cat([lig, tgt]) @ W1.T == lig @ W1[:, :H].T + tgt @ W1[:, H:].T.
    The H->1 head is a (1,H)x(H,TILE_E) contraction so the per-edge scores are
    written as a lane-dense (1, TILE_E) row (dense vst, no masked column store).
    """
    h = (jnp.dot(lf_ref[...], w1l_ref[...], preferred_element_type=jnp.float32)
         + jnp.dot(tf_ref[...], w1t_ref[...], preferred_element_type=jnp.float32)
         + b1_ref[...])
    h = jnp.maximum(h, 0.0)
    s = lax.dot_general(w2_ref[...], h,
                        dimension_numbers=(((1,), (1,)), ((), ())),
                        preferred_element_type=jnp.float32)   # (1, TILE_E)
    out_ref[...] = s + b2_ref[...]


# ----------------------------------------------------------------------------
# Tiling / padding helpers
# ----------------------------------------------------------------------------
def _round_up(x, m):
    return (x + m - 1) // m * m


def _pick_tile(pad, candidates):
    for c in candidates:
        if pad >= c and pad % c == 0:
            return c
    return pad


def _pad_and_tiles(n):
    """Padded node count + (dst row tile, src contraction tile) for a node type."""
    pad = _round_up(max(n, 1), 128)
    tile_m = _pick_tile(pad, (256, 128))        # destination-row tile
    tile_k = _pick_tile(pad, (512, 256, 128))   # contraction (source) tile
    return pad, tile_m, tile_k


def _pad_edges(e):
    if e <= 1024:
        pad = _round_up(max(e, 1), 8)
        return pad, pad
    pad = _round_up(e, 256)
    return pad, 256


def _pad_rows(x, n_pad):
    n = x.shape[0]
    if n_pad == n:
        return x
    return jnp.concatenate(
        [x, jnp.zeros((n_pad - n, x.shape[1]), x.dtype)], axis=0)


def _norm_adj(dst_idx, src_idx, n_dst_pad, n_src_pad):
    """Row-normalized adjacency so A @ X_src == scatter-mean of neighbours (bf16)."""
    a = jnp.zeros((n_dst_pad, n_src_pad), jnp.float32).at[dst_idx, src_idx].add(1.0)
    deg = a.sum(axis=1, keepdims=True)
    return (a / jnp.maximum(deg, 1.0)).astype(jnp.bfloat16)


def _bn_affine(bn):
    scale = bn["gamma"] * jax.lax.rsqrt(bn["var"] + BN_EPS)
    shift = bn["beta"] - bn["mean"] * scale
    return scale, shift


# ----------------------------------------------------------------------------
# Pallas wrappers
# ----------------------------------------------------------------------------
def _project(x_src, wl, tile):
    n, f = x_src.shape
    h = wl.shape[1]
    return pl.pallas_call(
        _project_kernel,
        out_shape=jax.ShapeDtypeStruct((n, h), jnp.bfloat16),
        grid_spec=pltpu.PrefetchScalarGridSpec(
            num_scalar_prefetch=0,
            grid=(n // tile,),
            in_specs=[pl.BlockSpec((tile, f), lambda i: (i, 0)),
                      pl.BlockSpec((f, h), lambda i: (0, 0))],
            out_specs=pl.BlockSpec((tile, h), lambda i: (i, 0))),
        compiler_params=pltpu.CompilerParams(
            dimension_semantics=("parallel",),
            vmem_limit_bytes=VMEM_LIMIT_BYTES),
    )(x_src, wl)


def sage_relation(a, x_src, x_dst, p, bn_scale, bn_shift, *,
                  tile_m, tile_k, src_tile):
    """One bipartite SAGEConv relation + ReLU + BatchNorm(eval). Returns bf16."""
    n_dst, n_src = a.shape
    f_src = x_src.shape[1]
    f_dst = x_dst.shape[1]
    hdim = p["wr"].shape[1]
    wl = p["wl"].astype(jnp.bfloat16)
    wr = p["wr"].astype(jnp.bfloat16)
    b = p["b"]
    proj_first = f_src > hdim  # project-then-aggregate when it shrinks the A matmul

    grid = (n_dst // tile_m, n_src // tile_k)

    if proj_first:
        p_src = _project(x_src, wl, src_tile)       # (n_src, H) bf16, computed once
        kernel = _sage_proj_first_kernel
        acc_width = hdim
        args = (a, p_src, x_dst, wr, b, bn_scale, bn_shift)
        in_specs = [
            pl.BlockSpec((tile_m, tile_k), lambda i, k: (i, k)),   # A tile
            pl.BlockSpec((tile_k, hdim), lambda i, k: (k, 0)),     # projected src
            pl.BlockSpec((tile_m, f_dst), lambda i, k: (i, 0)),    # x_dst tile
            pl.BlockSpec((f_dst, hdim), lambda i, k: (0, 0)),      # Wr
            pl.BlockSpec((1, hdim), lambda i, k: (0, 0)),          # bias
            pl.BlockSpec((1, hdim), lambda i, k: (0, 0)),          # BN scale
            pl.BlockSpec((1, hdim), lambda i, k: (0, 0)),          # BN shift
        ]
    else:
        kernel = _sage_agg_first_kernel
        acc_width = f_src
        args = (a, x_src, x_dst, wl, wr, b, bn_scale, bn_shift)
        in_specs = [
            pl.BlockSpec((tile_m, tile_k), lambda i, k: (i, k)),   # A tile
            pl.BlockSpec((tile_k, f_src), lambda i, k: (k, 0)),    # x_src K-tile
            pl.BlockSpec((tile_m, f_dst), lambda i, k: (i, 0)),    # x_dst tile
            pl.BlockSpec((f_src, hdim), lambda i, k: (0, 0)),      # Wl
            pl.BlockSpec((f_dst, hdim), lambda i, k: (0, 0)),      # Wr
            pl.BlockSpec((1, hdim), lambda i, k: (0, 0)),          # bias
            pl.BlockSpec((1, hdim), lambda i, k: (0, 0)),          # BN scale
            pl.BlockSpec((1, hdim), lambda i, k: (0, 0)),          # BN shift
        ]

    return pl.pallas_call(
        kernel,
        out_shape=jax.ShapeDtypeStruct((n_dst, hdim), jnp.bfloat16),
        grid_spec=pltpu.PrefetchScalarGridSpec(
            num_scalar_prefetch=0,
            grid=grid,
            in_specs=in_specs,
            out_specs=pl.BlockSpec((tile_m, hdim), lambda i, k: (i, 0)),
            scratch_shapes=[pltpu.VMEM((tile_m, acc_width), jnp.float32)]),
        compiler_params=pltpu.CompilerParams(
            dimension_semantics=("parallel", "arbitrary"),
            vmem_limit_bytes=VMEM_LIMIT_BYTES),
    )(*args)


def edge_mlp(lig_feats, tgt_feats, p, *, tile_e):
    e_pad, hdim = lig_feats.shape
    args = (lig_feats, tgt_feats,
            p["w1l"].astype(jnp.bfloat16), p["w1t"].astype(jnp.bfloat16),
            p["b1"], p["w2"], p["b2"])
    in_specs = [
        pl.BlockSpec((tile_e, hdim), lambda i: (i, 0)),
        pl.BlockSpec((tile_e, hdim), lambda i: (i, 0)),
        pl.BlockSpec((hdim, hdim), lambda i: (0, 0)),
        pl.BlockSpec((hdim, hdim), lambda i: (0, 0)),
        pl.BlockSpec((1, hdim), lambda i: (0, 0)),
        pl.BlockSpec((1, hdim), lambda i: (0, 0)),
        pl.BlockSpec((1, 1), lambda i: (0, 0)),
    ]
    # Scores come out as a lane-dense (1, E_pad) row.
    return pl.pallas_call(
        _edge_mlp_kernel,
        out_shape=jax.ShapeDtypeStruct((1, e_pad), jnp.float32),
        grid_spec=pltpu.PrefetchScalarGridSpec(
            num_scalar_prefetch=0,
            grid=(e_pad // tile_e,),
            in_specs=in_specs,
            out_specs=pl.BlockSpec((1, tile_e), lambda i: (0, i))),
        compiler_params=pltpu.CompilerParams(
            dimension_semantics=("parallel",),
            vmem_limit_bytes=VMEM_LIMIT_BYTES),
    )(*args)


# ----------------------------------------------------------------------------
# Parameter init + full forward
# ----------------------------------------------------------------------------
def init_params(key, lig_in, tgt_in, hidden):
    ks = iter(jax.random.split(key, 32))

    def w(shape, scale=0.05):
        return scale * jax.random.normal(next(ks), shape, dtype=jnp.float32)

    def sage(f_src, f_dst):
        # weights pre-transposed so kernels compute x @ W (no in-kernel .T)
        return {"wl": w((f_src, hidden)),            # lin_l : aggregated src -> hidden
                "wr": w((f_dst, hidden)),            # lin_r : dst (root) -> hidden
                "b":  w((1, hidden))}                # single bias (lin_l's; lin_r has none)

    def bn():
        return {"gamma": 1.0 + 0.1 * jax.random.normal(next(ks), (1, hidden), jnp.float32),
                "beta":  0.1 * jax.random.normal(next(ks), (1, hidden), jnp.float32),
                "mean":  0.1 * jax.random.normal(next(ks), (1, hidden), jnp.float32),
                "var":   1.0 + 0.1 * jnp.abs(jax.random.normal(next(ks), (1, hidden), jnp.float32))}

    w1 = w((hidden, 2 * hidden))                     # Linear(2H, H).weight
    return {
        "conv1_lt": sage(lig_in, tgt_in),            # ('ligand','binds_to','target')
        "conv1_tl": sage(tgt_in, lig_in),            # ('target','binds_to','ligand')
        "bn1": bn(),
        "conv2_lt": sage(hidden, hidden),
        "conv2_tl": sage(hidden, hidden),
        "bn2": bn(),
        "edge": {"w1l": w1[:, :hidden].T,            # acts on ligand half of concat
                 "w1t": w1[:, hidden:].T,            # acts on target half of concat
                 "b1":  w((1, hidden)),
                 "w2":  w((1, hidden)),              # Linear(H,1).weight as row vector
                 "b2":  w((1, 1))},
    }


def hetero_gnn_forward(params, x_lig, x_tgt, edge_index):
    src = edge_index[0]                              # ligand indices
    dst = edge_index[1]                              # target indices
    n_lig, n_tgt = x_lig.shape[0], x_tgt.shape[0]
    n_edge = src.shape[0]

    nl_pad, lig_tile_m, lig_tile_k = _pad_and_tiles(n_lig)
    nt_pad, tgt_tile_m, tgt_tile_k = _pad_and_tiles(n_tgt)

    xl = _pad_rows(x_lig, nl_pad).astype(jnp.bfloat16)
    xt = _pad_rows(x_tgt, nt_pad).astype(jnp.bfloat16)

    a_l2t = _norm_adj(dst, src, nt_pad, nl_pad)      # targets aggregate ligand srcs
    a_t2l = _norm_adj(src, dst, nl_pad, nt_pad)      # ligands aggregate target srcs

    s1, sh1 = _bn_affine(params["bn1"])              # fold BN once, outside the grid
    s2, sh2 = _bn_affine(params["bn2"])

    # ---- layer 1 (+ ReLU + BN1; dropout = identity in eval mode) ----
    xt1 = sage_relation(a_l2t, xl, xt, params["conv1_lt"], s1, sh1,
                        tile_m=tgt_tile_m, tile_k=lig_tile_k, src_tile=lig_tile_m)
    xl1 = sage_relation(a_t2l, xt, xl, params["conv1_tl"], s1, sh1,
                        tile_m=lig_tile_m, tile_k=tgt_tile_k, src_tile=tgt_tile_m)

    # ---- layer 2 (+ ReLU + BN2) ----
    xt2 = sage_relation(a_l2t, xl1, xt1, params["conv2_lt"], s2, sh2,
                        tile_m=tgt_tile_m, tile_k=lig_tile_k, src_tile=lig_tile_m)
    xl2 = sage_relation(a_t2l, xt1, xl1, params["conv2_tl"], s2, sh2,
                        tile_m=lig_tile_m, tile_k=tgt_tile_k, src_tile=tgt_tile_m)

    # ---- per-edge gather (XLA glue) + tiled edge MLP ----
    e_pad, tile_e = _pad_edges(n_edge)
    if e_pad > n_edge:
        pad_idx = jnp.zeros((e_pad - n_edge,), src.dtype)
        src_p = jnp.concatenate([src, pad_idx])
        dst_p = jnp.concatenate([dst, pad_idx])
    else:
        src_p, dst_p = src, dst
    lig_feats = jnp.take(xl2, src_p, axis=0)         # (E_pad, H) bf16
    tgt_feats = jnp.take(xt2, dst_p, axis=0)         # (E_pad, H) bf16

    out = edge_mlp(lig_feats, tgt_feats, params["edge"], tile_e=tile_e)
    return out[0, :n_edge]                           # squeeze(-1), drop edge padding


# ----------------------------------------------------------------------------
# Demo
# ----------------------------------------------------------------------------
if __name__ == "__main__":
    # small shapes consistent with the module's constructor arguments
    # (real model: 32 / 1280 / 256); HIDDEN kept a multiple of 128 for
    # lane-dense outputs, TGT_IN > HIDDEN so the proj-first path is exercised.
    LIG_IN, TGT_IN, HIDDEN = 32, 256, 128
    N_LIG, N_TGT, N_EDGE = 12, 6, 20

    key = jax.random.PRNGKey(0)
    k_xl, k_xt, k_src, k_dst, k_params = jax.random.split(key, 5)

    x_lig = jax.random.normal(k_xl, (N_LIG, LIG_IN), dtype=jnp.float32)
    x_tgt = jax.random.normal(k_xt, (N_TGT, TGT_IN), dtype=jnp.float32)
    edge_index = jnp.stack([
        jax.random.randint(k_src, (N_EDGE,), 0, N_LIG),
        jax.random.randint(k_dst, (N_EDGE,), 0, N_TGT),
    ], axis=0).astype(jnp.int32)

    params = init_params(k_params, LIG_IN, TGT_IN, HIDDEN)

    forward = jax.jit(hetero_gnn_forward)
    out = forward(params, x_lig, x_tgt, edge_index)
    out = jax.block_until_ready(out)
    assert out.shape == (N_EDGE,)
    print("KERNEL_OK")
</pallas_src>

<mosaic_0001>
module attributes {stable_mosaic.version = 11 : i64} {
  func.func @_project_kernel(%arg0: i32, %arg1: memref<128x256xbf16, #tpu.memory_space<vmem>>, %arg2: memref<256x128xbf16, #tpu.memory_space<vmem>>, %arg3: memref<128x128xbf16, #tpu.memory_space<vmem>>) attributes {dimension_semantics = [#tpu.dimension_semantics<parallel>], iteration_bounds = array<i64: 1>, scalar_prefetch = 0 : i64, scratch_operands = 0 : i64, tpu.core_type = #tpu.core_type<tc>, window_params = [{transform_indices = @transform_0, window_bounds = array<i64: 128, 256>}, {pipeline_mode = #tpu.pipeline_mode<synchronous>, transform_indices = @transform_1, window_bounds = array<i64: 256, 128>}, {transform_indices = @transform_2, window_bounds = array<i64: 128, 128>}]} {
    %c0 = arith.constant 0 : index
    %c0_0 = arith.constant 0 : index
    %0 = vector.load %arg1[%c0, %c0_0] : memref<128x256xbf16, #tpu.memory_space<vmem>>, vector<128x256xbf16>
    %c0_1 = arith.constant 0 : index
    %c0_2 = arith.constant 0 : index
    %1 = vector.load %arg2[%c0_1, %c0_2] : memref<256x128xbf16, #tpu.memory_space<vmem>>, vector<256x128xbf16>
    %cst = arith.constant dense<0.000000e+00> : vector<128x128xf32>
    %2 = tpu.matmul %0, %1, %cst {dimension_numbers = #tpu.dot_dimension_numbers<[1], [0], [0], [1], [0, 0, 1, 1], [], []>} : vector<128x256xbf16>, vector<256x128xbf16>, vector<128x128xf32> -> vector<128x128xf32>
    %3 = arith.truncf %2 : vector<128x128xf32> to vector<128x128xbf16>
    %c0_3 = arith.constant 0 : index
    %c0_4 = arith.constant 0 : index
    %4 = vector.load %arg3[%c0_3, %c0_4] : memref<128x128xbf16, #tpu.memory_space<vmem>>, vector<128x128xbf16>
    tpu.vector_store %arg3[%c0_3, %c0_4], %3 {strides = array<i32>} : memref<128x128xbf16, #tpu.memory_space<vmem>>, vector<128x128xbf16>,
    return
  }
  func.func @transform_0(%arg0: i32) -> (i32, i32) {
    %c0_i32 = arith.constant 0 : i32
    %c0_i32_0 = arith.constant 0 : i32
    return %arg0, %c0_i32 : i32, i32
  }
  func.func @transform_1(%arg0: i32) -> (i32, i32) {
    %c0_i32 = arith.constant 0 : i32
    %c0_i32_0 = arith.constant 0 : i32
    %c0_i32_1 = arith.constant 0 : i32
    return %c0_i32, %c0_i32_0 : i32, i32
  }
  func.func @transform_2(%arg0: i32) -> (i32, i32) {
    %c0_i32 = arith.constant 0 : i32
    %c0_i32_0 = arith.constant 0 : i32
    return %arg0, %c0_i32 : i32, i32
  }
}

module attributes {stable_mosaic.version = 11 : i64} {
  func.func @_sage_agg_first_kernel(%arg0: i32, %arg1: i32, %arg2: memref<128x128xbf16, #tpu.memory_space<vmem>>, %arg3: memref<128x32xbf16, #tpu.memory_space<vmem>>, %arg4: memref<128x256xbf16, #tpu.memory_space<vmem>>, %arg5: memref<32x128xbf16, #tpu.memory_space<vmem>>, %arg6: memref<256x128xbf16, #tpu.memory_space<vmem>>, %arg7: memref<1x128xf32, #tpu.memory_space<vmem>>, %arg8: memref<1x128xf32, #tpu.memory_space<vmem>>, %arg9: memref<1x128xf32, #tpu.memory_space<vmem>>, %arg10: memref<128x128xbf16, #tpu.memory_space<vmem>>, %arg11: memref<128x32xf32, #tpu.memory_space<vmem>>) attributes {dimension_semantics = [#tpu.dimension_semantics<parallel>, #tpu.dimension_semantics<arbitrary>], iteration_bounds = array<i64: 1, 1>, scalar_prefetch = 0 : i64, scratch_operands = 1 : i64, tpu.core_type = #tpu.core_type<tc>, window_params = [{transform_indices = @transform_0, window_bounds = array<i64: 128, 128>}, {transform_indices = @transform_1, window_bounds = array<i64: 128, 32>}, {transform_indices = @transform_2, window_bounds = array<i64: 128, 256>}, {pipeline_mode = #tpu.pipeline_mode<synchronous>, transform_indices = @transform_3, window_bounds = array<i64: 32, 128>}, {pipeline_mode = #tpu.pipeline_mode<synchronous>, transform_indices = @transform_4, window_bounds = array<i64: 256, 128>}, {pipeline_mode = #tpu.pipeline_mode<synchronous>, transform_indices = @transform_5, window_bounds = array<i64: 1, 128>}, {pipeline_mode = #tpu.pipeline_mode<synchronous>, transform_indices = @transform_6, window_bounds = array<i64: 1, 128>}, {pipeline_mode = #tpu.pipeline_mode<synchronous>, transform_indices = @transform_7, window_bounds = array<i64: 1, 128>}, {transform_indices = @transform_8, window_bounds = array<i64: 128, 128>}]} {
    %c0_i32 = arith.constant 0 : i32
    %0 = arith.cmpi eq, %arg1, %c0_i32 : i32
    %1 = arith.extui %0 : i1 to i32
    %c0_i32_0 = arith.constant 0 : i32
    %2 = arith.cmpi ne, %1, %c0_i32_0 : i32
    scf.if %2 {
      %cst_10 = arith.constant 0.000000e+00 : f32
      %12 = vector.broadcast %cst_10 : f32 to vector<128x32xf32>
      %c0_11 = arith.constant 0 : index
      %c0_12 = arith.constant 0 : index
      %13 = vector.load %arg11[%c0_11, %c0_12] : memref<128x32xf32, #tpu.memory_space<vmem>>, vector<128x32xf32>
      tpu.vector_store %arg11[%c0_11, %c0_12], %12 {strides = array<i32>} : memref<128x32xf32, #tpu.memory_space<vmem>>, vector<128x32xf32>,
    } else {
    }
    %c0 = arith.constant 0 : index
    %c0_1 = arith.constant 0 : index
    %3 = vector.load %arg11[%c0, %c0_1] : memref<128x32xf32, #tpu.memory_space<vmem>>, vector<128x32xf32>
    %c0_2 = arith.constant 0 : index
    %c0_3 = arith.constant 0 : index
    %4 = vector.load %arg2[%c0_2, %c0_3] : memref<128x128xbf16, #tpu.memory_space<vmem>>, vector<128x128xbf16>
    %c0_4 = arith.constant 0 : index
    %c0_5 = arith.constant 0 : index
    %5 = vector.load %arg3[%c0_4, %c0_5] : memref<128x32xbf16, #tpu.memory_space<vmem>>, vector<128x32xbf16>
    %cst = arith.constant dense<0.000000e+00> : vector<128x32xf32>
    %6 = tpu.matmul %4, %5, %cst {dimension_numbers = #tpu.dot_dimension_numbers<[1], [0], [0], [1], [0, 0, 1, 1], [], []>} : vector<128x128xbf16>, vector<128x32xbf16>, vector<128x32xf32> -> vector<128x32xf32>
    %7 = arith.addf %3, %6 : vector<128x32xf32>
    %c0_6 = arith.constant 0 : index
    %c0_7 = arith.constant 0 : index
    %8 = vector.load %arg11[%c0_6, %c0_7] : memref<128x32xf32, #tpu.memory_space<vmem>>, vector<128x32xf32>
    tpu.vector_store %arg11[%c0_6, %c0_7], %7 {strides = array<i32>} : memref<128x32xf32, #tpu.memory_space<vmem>>, vector<128x32xf32>,
    %c0_i32_8 = arith.constant 0 : i32
    %9 = arith.cmpi eq, %arg1, %c0_i32_8 : i32
    %10 = arith.extui %9 : i1 to i32
    %c0_i32_9 = arith.constant 0 : i32
    %11 = arith.cmpi ne, %10, %c0_i32_9 : i32
    scf.if %11 {
      %c0_10 = arith.constant 0 : index
      %c0_11 = arith.constant 0 : index
      %12 = vector.load %arg11[%c0_10, %c0_11] : memref<128x32xf32, #tpu.memory_space<vmem>>, vector<128x32xf32>
      %13 = arith.truncf %12 : vector<128x32xf32> to vector<128x32xbf16>
      %c0_12 = arith.constant 0 : index
      %c0_13 = arith.constant 0 : index
      %14 = vector.load %arg5[%c0_12, %c0_13] : memref<32x128xbf16, #tpu.memory_space<vmem>>, vector<32x128xbf16>
      %cst_14 = arith.constant dense<0.000000e+00> : vector<128x128xf32>
      %15 = tpu.matmul %13, %14, %cst_14 {dimension_numbers = #tpu.dot_dimension_numbers<[1], [0], [0], [1], [0, 0, 1, 1], [], []>} : vector<128x32xbf16>, vector<32x128xbf16>, vector<128x128xf32> -> vector<128x128xf32>
      %c0_15 = arith.constant 0 : index
      %c0_16 = arith.constant 0 : index
      %16 = vector.load %arg4[%c0_15, %c0_16] : memref<128x256xbf16, #tpu.memory_space<vmem>>, vector<128x256xbf16>
      %c0_17 = arith.constant 0 : index
      %c0_18 = arith.constant 0 : index
      %17 = vector.load %arg6[%c0_17, %c0_18] : memref<256x128xbf16, #tpu.memory_space<vmem>>, vector<256x128xbf16>
      %cst_19 = arith.constant dense<0.000000e+00> : vector<128x128xf32>
      %18 = tpu.matmul %16, %17, %cst_19 {dimension_numbers = #tpu.dot_dimension_numbers<[1], [0], [0], [1], [0, 0, 1, 1], [], []>} : vector<128x256xbf16>, vector<256x128xbf16>, vector<128x128xf32> -> vector<128x128xf32>
      %19 = arith.addf %15, %18 : vector<128x128xf32>
      %c0_20 = arith.constant 0 : index
      %c0_21 = arith.constant 0 : index
      %20 = vector.load %arg7[%c0_20, %c0_21] : memref<1x128xf32, #tpu.memory_space<vmem>>, vector<1x128xf32>
      %21 = vector.broadcast %20 : vector<1x128xf32> to vector<128x128xf32>
      %22 = arith.addf %19, %21 : vector<128x128xf32>
      %cst_22 = arith.constant 0.000000e+00 : f32
      %23 = vector.broadcast %cst_22 : f32 to vector<128x128xf32>
      %24 = arith.maximumf %22, %23 : vector<128x128xf32>
      %c0_23 = arith.constant 0 : index
      %c0_24 = arith.constant 0 : index
      %25 = vector.load %arg8[%c0_23, %c0_24] : memref<1x128xf32, #tpu.memory_space<vmem>>, vector<1x128xf32>
      %26 = vector.broadcast %25 : vector<1x128xf32> to vector<128x128xf32>
      %27 = arith.mulf %24, %26 : vector<128x128xf32>
      %c0_25 = arith.constant 0 : index
      %c0_26 = arith.constant 0 : index
      %28 = vector.load %arg9[%c0_25, %c0_26] : memref<1x128xf32, #tpu.memory_space<vmem>>, vector<1x128xf32>
      %29 = vector.broadcast %28 : vector<1x128xf32> to vector<128x128xf32>
      %30 = arith.addf %27, %29 : vector<128x128xf32>
      %31 = arith.truncf %30 : vector<128x128xf32> to vector<128x128xbf16>
      %c0_27 = arith.constant 0 : index
      %c0_28 = arith.constant 0 : index
      %32 = vector.load %arg10[%c0_27, %c0_28] : memref<128x128xbf16, #tpu.memory_space<vmem>>, vector<128x128xbf16>
      tpu.vector_store %arg10[%c0_27, %c0_28], %31 {strides = array<i32>} : memref<128x128xbf16, #tpu.memory_space<vmem>>, vector<128x128xbf16>,
    } else {
    }
    return
  }
  func.func @transform_0(%arg0: i32, %arg1: i32) -> (i32, i32) {
    %c0_i32 = arith.constant 0 : i32
    return %arg0, %arg1 : i32, i32
  }
  func.func @transform_1(%arg0: i32, %arg1: i32) -> (i32, i32) {
    %c0_i32 = arith.constant 0 : i32
    %c0_i32_0 = arith.constant 0 : i32
    return %arg1, %c0_i32 : i32, i32
  }
  func.func @transform_2(%arg0: i32, %arg1: i32) -> (i32, i32) {
    %c0_i32 = arith.constant 0 : i32
    %c0_i32_0 = arith.constant 0 : i32
    return %arg0, %c0_i32 : i32, i32
  }
  func.func @transform_3(%arg0: i32, %arg1: i32) -> (i32, i32) {
    %c0_i32 = arith.constant 0 : i32
    %c0_i32_0 = arith.constant 0 : i32
    %c0_i32_1 = arith.constant 0 : i32
    return %c0_i32, %c0_i32_0 : i32, i32
  }
  func.func @transform_4(%arg0: i32, %arg1: i32) -> (i32, i32) {
    %c0_i32 = arith.constant 0 : i32
    %c0_i32_0 = arith.constant 0 : i32
    %c0_i32_1 = arith.constant 0 : i32
    return %c0_i32, %c0_i32_0 : i32, i32
  }
  func.func @transform_5(%arg0: i32, %arg1: i32) -> (i32, i32) {
    %c0_i32 = arith.constant 0 : i32
    %c0_i32_0 = arith.constant 0 : i32
    %c0_i32_1 = arith.constant 0 : i32
    return %c0_i32, %c0_i32_0 : i32, i32
  }
  func.func @transform_6(%arg0: i32, %arg1: i32) -> (i32, i32) {
    %c0_i32 = arith.constant 0 : i32
    %c0_i32_0 = arith.constant 0 : i32
    %c0_i32_1 = arith.constant 0 : i32
    return %c0_i32, %c0_i32_0 : i32, i32
  }
  func.func @transform_7(%arg0: i32, %arg1: i32) -> (i32, i32) {
    %c0_i32 = arith.constant 0 : i32
    %c0_i32_0 = arith.constant 0 : i32
    %c0_i32_1 = arith.constant 0 : i32
    return %c0_i32, %c0_i32_0 : i32, i32
  }
  func.func @transform_8(%arg0: i32, %arg1: i32) -> (i32, i32) {
    %c0_i32 = arith.constant 0 : i32
    %c0_i32_0 = arith.constant 0 : i32
    return %arg0, %c0_i32 : i32, i32
  }
}

module attributes {stable_mosaic.version = 11 : i64} {
  func.func @_sage_proj_first_kernel(%arg0: i32, %arg1: i32, %arg2: memref<128x128xbf16, #tpu.memory_space<vmem>>, %arg3: memref<128x128xbf16, #tpu.memory_space<vmem>>, %arg4: memref<128x32xbf16, #tpu.memory_space<vmem>>, %arg5: memref<32x128xbf16, #tpu.memory_space<vmem>>, %arg6: memref<1x128xf32, #tpu.memory_space<vmem>>, %arg7: memref<1x128xf32, #tpu.memory_space<vmem>>, %arg8: memref<1x128xf32, #tpu.memory_space<vmem>>, %arg9: memref<128x128xbf16, #tpu.memory_space<vmem>>, %arg10: memref<128x128xf32, #tpu.memory_space<vmem>>) attributes {dimension_semantics = [#tpu.dimension_semantics<parallel>, #tpu.dimension_semantics<arbitrary>], iteration_bounds = array<i64: 1, 1>, scalar_prefetch = 0 : i64, scratch_operands = 1 : i64, tpu.core_type = #tpu.core_type<tc>, window_params = [{transform_indices = @transform_0, window_bounds = array<i64: 128, 128>}, {transform_indices = @transform_1, window_bounds = array<i64: 128, 128>}, {transform_indices = @transform_2, window_bounds = array<i64: 128, 32>}, {pipeline_mode = #tpu.pipeline_mode<synchronous>, transform_indices = @transform_3, window_bounds = array<i64: 32, 128>}, {pipeline_mode = #tpu.pipeline_mode<synchronous>, transform_indices = @transform_4, window_bounds = array<i64: 1, 128>}, {pipeline_mode = #tpu.pipeline_mode<synchronous>, transform_indices = @transform_5, window_bounds = array<i64: 1, 128>}, {pipeline_mode = #tpu.pipeline_mode<synchronous>, transform_indices = @transform_6, window_bounds = array<i64: 1, 128>}, {transform_indices = @transform_7, window_bounds = array<i64: 128, 128>}]} {
    %c0_i32 = arith.constant 0 : i32
    %0 = arith.cmpi eq, %arg1, %c0_i32 : i32
    %1 = arith.extui %0 : i1 to i32
    %c0_i32_0 = arith.constant 0 : i32
    %2 = arith.cmpi ne, %1, %c0_i32_0 : i32
    scf.if %2 {
      %c0_10 = arith.constant 0 : index
      %c0_11 = arith.constant 0 : index
      %12 = vector.load %arg4[%c0_10, %c0_11] : memref<128x32xbf16, #tpu.memory_space<vmem>>, vector<128x32xbf16>
      %c0_12 = arith.constant 0 : index
      %c0_13 = arith.constant 0 : index
      %13 = vector.load %arg5[%c0_12, %c0_13] : memref<32x128xbf16, #tpu.memory_space<vmem>>, vector<32x128xbf16>
      %cst_14 = arith.constant dense<0.000000e+00> : vector<128x128xf32>
      %14 = tpu.matmul %12, %13, %cst_14 {dimension_numbers = #tpu.dot_dimension_numbers<[1], [0], [0], [1], [0, 0, 1, 1], [], []>} : vector<128x32xbf16>, vector<32x128xbf16>, vector<128x128xf32> -> vector<128x128xf32>
      %c0_15 = arith.constant 0 : index
      %c0_16 = arith.constant 0 : index
      %15 = vector.load %arg6[%c0_15, %c0_16] : memref<1x128xf32, #tpu.memory_space<vmem>>, vector<1x128xf32>
      %16 = vector.broadcast %15 : vector<1x128xf32> to vector<128x128xf32>
      %17 = arith.addf %14, %16 : vector<128x128xf32>
      %c0_17 = arith.constant 0 : index
      %c0_18 = arith.constant 0 : index
      %18 = vector.load %arg10[%c0_17, %c0_18] : memref<128x128xf32, #tpu.memory_space<vmem>>, vector<128x128xf32>
      tpu.vector_store %arg10[%c0_17, %c0_18], %17 {strides = array<i32>} : memref<128x128xf32, #tpu.memory_space<vmem>>, vector<128x128xf32>,
    } else {
    }
    %c0 = arith.constant 0 : index
    %c0_1 = arith.constant 0 : index
    %3 = vector.load %arg10[%c0, %c0_1] : memref<128x128xf32, #tpu.memory_space<vmem>>, vector<128x128xf32>
    %c0_2 = arith.constant 0 : index
    %c0_3 = arith.constant 0 : index
    %4 = vector.load %arg2[%c0_2, %c0_3] : memref<128x128xbf16, #tpu.memory_space<vmem>>, vector<128x128xbf16>
    %c0_4 = arith.constant 0 : index
    %c0_5 = arith.constant 0 : index
    %5 = vector.load %arg3[%c0_4, %c0_5] : memref<128x128xbf16, #tpu.memory_space<vmem>>, vector<128x128xbf16>
    %cst = arith.constant dense<0.000000e+00> : vector<128x128xf32>
    %6 = tpu.matmul %4, %5, %cst {dimension_numbers = #tpu.dot_dimension_numbers<[1], [0], [0], [1], [0, 0, 1, 1], [], []>} : vector<128x128xbf16>, vector<128x128xbf16>, vector<128x128xf32> -> vector<128x128xf32>
    %7 = arith.addf %3, %6 : vector<128x128xf32>
    %c0_6 = arith.constant 0 : index
    %c0_7 = arith.constant 0 : index
    %8 = vector.load %arg10[%c0_6, %c0_7] : memref<128x128xf32, #tpu.memory_space<vmem>>, vector<128x128xf32>
    tpu.vector_store %arg10[%c0_6, %c0_7], %7 {strides = array<i32>} : memref<128x128xf32, #tpu.memory_space<vmem>>, vector<128x128xf32>,
    %c0_i32_8 = arith.constant 0 : i32
    %9 = arith.cmpi eq, %arg1, %c0_i32_8 : i32
    %10 = arith.extui %9 : i1 to i32
    %c0_i32_9 = arith.constant 0 : i32
    %11 = arith.cmpi ne, %10, %c0_i32_9 : i32
    scf.if %11 {
      %c0_10 = arith.constant 0 : index
      %c0_11 = arith.constant 0 : index
      %12 = vector.load %arg10[%c0_10, %c0_11] : memref<128x128xf32, #tpu.memory_space<vmem>>, vector<128x128xf32>
      %cst_12 = arith.constant 0.000000e+00 : f32
      %13 = vector.broadcast %cst_12 : f32 to vector<128x128xf32>
      %14 = arith.maximumf %12, %13 : vector<128x128xf32>
      %c0_13 = arith.constant 0 : index
      %c0_14 = arith.constant 0 : index
      %15 = vector.load %arg7[%c0_13, %c0_14] : memref<1x128xf32, #tpu.memory_space<vmem>>, vector<1x128xf32>
      %16 = vector.broadcast %15 : vector<1x128xf32> to vector<128x128xf32>
      %17 = arith.mulf %14, %16 : vector<128x128xf32>
      %c0_15 = arith.constant 0 : index
      %c0_16 = arith.constant 0 : index
      %18 = vector.load %arg8[%c0_15, %c0_16] : memref<1x128xf32, #tpu.memory_space<vmem>>, vector<1x128xf32>
      %19 = vector.broadcast %18 : vector<1x128xf32> to vector<128x128xf32>
      %20 = arith.addf %17, %19 : vector<128x128xf32>
      %21 = arith.truncf %20 : vector<128x128xf32> to vector<128x128xbf16>
      %c0_17 = arith.constant 0 : index
      %c0_18 = arith.constant 0 : index
      %22 = vector.load %arg9[%c0_17, %c0_18] : memref<128x128xbf16, #tpu.memory_space<vmem>>, vector<128x128xbf16>
      tpu.vector_store %arg9[%c0_17, %c0_18], %21 {strides = array<i32>} : memref<128x128xbf16, #tpu.memory_space<vmem>>, vector<128x128xbf16>,
    } else {
    }
    return
  }
  func.func @transform_0(%arg0: i32, %arg1: i32) -> (i32, i32) {
    %c0_i32 = arith.constant 0 : i32
    return %arg0, %arg1 : i32, i32
  }
  func.func @transform_1(%arg0: i32, %arg1: i32) -> (i32, i32) {
    %c0_i32 = arith.constant 0 : i32
    %c0_i32_0 = arith.constant 0 : i32
    return %arg1, %c0_i32 : i32, i32
  }
  func.func @transform_2(%arg0: i32, %arg1: i32) -> (i32, i32) {
    %c0_i32 = arith.constant 0 : i32
    %c0_i32_0 = arith.constant 0 : i32
    return %arg0, %c0_i32 : i32, i32
  }
  func.func @transform_3(%arg0: i32, %arg1: i32) -> (i32, i32) {
    %c0_i32 = arith.constant 0 : i32
    %c0_i32_0 = arith.constant 0 : i32
    %c0_i32_1 = arith.constant 0 : i32
    return %c0_i32, %c0_i32_0 : i32, i32
  }
  func.func @transform_4(%arg0: i32, %arg1: i32) -> (i32, i32) {
    %c0_i32 = arith.constant 0 : i32
    %c0_i32_0 = arith.constant 0 : i32
    %c0_i32_1 = arith.constant 0 : i32
    return %c0_i32, %c0_i32_0 : i32, i32
  }
  func.func @transform_5(%arg0: i32, %arg1: i32) -> (i32, i32) {
    %c0_i32 = arith.constant 0 : i32
    %c0_i32_0 = arith.constant 0 : i32
    %c0_i32_1 = arith.constant 0 : i32
    return %c0_i32, %c0_i32_0 : i32, i32
  }
  func.func @transform_6(%arg0: i32, %arg1: i32) -> (i32, i32) {
    %c0_i32 = arith.constant 0 : i32
    %c0_i32_0 = arith.constant 0 : i32
    %c0_i32_1 = arith.constant 0 : i32
    return %c0_i32, %c0_i32_0 : i32, i32
  }
  func.func @transform_7(%arg0: i32, %arg1: i32) -> (i32, i32) {
    %c0_i32 = arith.constant 0 : i32
    %c0_i32_0 = arith.constant 0 : i32
    return %arg0, %c0_i32 : i32, i32
  }
}

module attributes {stable_mosaic.version = 11 : i64} {
  func.func @_sage_agg_first_kernel(%arg0: i32, %arg1: i32, %arg2: memref<128x128xbf16, #tpu.memory_space<vmem>>, %arg3: memref<128x128xbf16, #tpu.memory_space<vmem>>, %arg4: memref<128x128xbf16, #tpu.memory_space<vmem>>, %arg5: memref<128x128xbf16, #tpu.memory_space<vmem>>, %arg6: memref<128x128xbf16, #tpu.memory_space<vmem>>, %arg7: memref<1x128xf32, #tpu.memory_space<vmem>>, %arg8: memref<1x128xf32, #tpu.memory_space<vmem>>, %arg9: memref<1x128xf32, #tpu.memory_space<vmem>>, %arg10: memref<128x128xbf16, #tpu.memory_space<vmem>>, %arg11: memref<128x128xf32, #tpu.memory_space<vmem>>) attributes {dimension_semantics = [#tpu.dimension_semantics<parallel>, #tpu.dimension_semantics<arbitrary>], iteration_bounds = array<i64: 1, 1>, scalar_prefetch = 0 : i64, scratch_operands = 1 : i64, tpu.core_type = #tpu.core_type<tc>, window_params = [{transform_indices = @transform_0, window_bounds = array<i64: 128, 128>}, {transform_indices = @transform_1, window_bounds = array<i64: 128, 128>}, {transform_indices = @transform_2, window_bounds = array<i64: 128, 128>}, {pipeline_mode = #tpu.pipeline_mode<synchronous>, transform_indices = @transform_3, window_bounds = array<i64: 128, 128>}, {pipeline_mode = #tpu.pipeline_mode<synchronous>, transform_indices = @transform_4, window_bounds = array<i64: 128, 128>}, {pipeline_mode = #tpu.pipeline_mode<synchronous>, transform_indices = @transform_5, window_bounds = array<i64: 1, 128>}, {pipeline_mode = #tpu.pipeline_mode<synchronous>, transform_indices = @transform_6, window_bounds = array<i64: 1, 128>}, {pipeline_mode = #tpu.pipeline_mode<synchronous>, transform_indices = @transform_7, window_bounds = array<i64: 1, 128>}, {transform_indices = @transform_8, window_bounds = array<i64: 128, 128>}]} {
    %c0_i32 = arith.constant 0 : i32
    %0 = arith.cmpi eq, %arg1, %c0_i32 : i32
    %1 = arith.extui %0 : i1 to i32
    %c0_i32_0 = arith.constant 0 : i32
    %2 = arith.cmpi ne, %1, %c0_i32_0 : i32
    scf.if %2 {
      %cst_10 = arith.constant 0.000000e+00 : f32
      %12 = vector.broadcast %cst_10 : f32 to vector<128x128xf32>
      %c0_11 = arith.constant 0 : index
      %c0_12 = arith.constant 0 : index
      %13 = vector.load %arg11[%c0_11, %c0_12] : memref<128x128xf32, #tpu.memory_space<vmem>>, vector<128x128xf32>
      tpu.vector_store %arg11[%c0_11, %c0_12], %12 {strides = array<i32>} : memref<128x128xf32, #tpu.memory_space<vmem>>, vector<128x128xf32>,
    } else {
    }
    %c0 = arith.constant 0 : index
    %c0_1 = arith.constant 0 : index
    %3 = vector.load %arg11[%c0, %c0_1] : memref<128x128xf32, #tpu.memory_space<vmem>>, vector<128x128xf32>
    %c0_2 = arith.constant 0 : index
    %c0_3 = arith.constant 0 : index
    %4 = vector.load %arg2[%c0_2, %c0_3] : memref<128x128xbf16, #tpu.memory_space<vmem>>, vector<128x128xbf16>
    %c0_4 = arith.constant 0 : index
    %c0_5 = arith.constant 0 : index
    %5 = vector.load %arg3[%c0_4, %c0_5] : memref<128x128xbf16, #tpu.memory_space<vmem>>, vector<128x128xbf16>
    %cst = arith.constant dense<0.000000e+00> : vector<128x128xf32>
    %6 = tpu.matmul %4, %5, %cst {dimension_numbers = #tpu.dot_dimension_numbers<[1], [0], [0], [1], [0, 0, 1, 1], [], []>} : vector<128x128xbf16>, vector<128x128xbf16>, vector<128x128xf32> -> vector<128x128xf32>
    %7 = arith.addf %3, %6 : vector<128x128xf32>
    %c0_6 = arith.constant 0 : index
    %c0_7 = arith.constant 0 : index
    %8 = vector.load %arg11[%c0_6, %c0_7] : memref<128x128xf32, #tpu.memory_space<vmem>>, vector<128x128xf32>
    tpu.vector_store %arg11[%c0_6, %c0_7], %7 {strides = array<i32>} : memref<128x128xf32, #tpu.memory_space<vmem>>, vector<128x128xf32>,
    %c0_i32_8 = arith.constant 0 : i32
    %9 = arith.cmpi eq, %arg1, %c0_i32_8 : i32
    %10 = arith.extui %9 : i1 to i32
    %c0_i32_9 = arith.constant 0 : i32
    %11 = arith.cmpi ne, %10, %c0_i32_9 : i32
    scf.if %11 {
      %c0_10 = arith.constant 0 : index
      %c0_11 = arith.constant 0 : index
      %12 = vector.load %arg11[%c0_10, %c0_11] : memref<128x128xf32, #tpu.memory_space<vmem>>, vector<128x128xf32>
      %13 = arith.truncf %12 : vector<128x128xf32> to vector<128x128xbf16>
      %c0_12 = arith.constant 0 : index
      %c0_13 = arith.constant 0 : index
      %14 = vector.load %arg5[%c0_12, %c0_13] : memref<128x128xbf16, #tpu.memory_space<vmem>>, vector<128x128xbf16>
      %cst_14 = arith.constant dense<0.000000e+00> : vector<128x128xf32>
      %15 = tpu.matmul %13, %14, %cst_14 {dimension_numbers = #tpu.dot_dimension_numbers<[1], [0], [0], [1], [0, 0, 1, 1], [], []>} : vector<128x128xbf16>, vector<128x128xbf16>, vector<128x128xf32> -> vector<128x128xf32>
      %c0_15 = arith.constant 0 : index
      %c0_16 = arith.constant 0 : index
      %16 = vector.load %arg4[%c0_15, %c0_16] : memref<128x128xbf16, #tpu.memory_space<vmem>>, vector<128x128xbf16>
      %c0_17 = arith.constant 0 : index
      %c0_18 = arith.constant 0 : index
      %17 = vector.load %arg6[%c0_17, %c0_18] : memref<128x128xbf16, #tpu.memory_space<vmem>>, vector<128x128xbf16>
      %cst_19 = arith.constant dense<0.000000e+00> : vector<128x128xf32>
      %18 = tpu.matmul %16, %17, %cst_19 {dimension_numbers = #tpu.dot_dimension_numbers<[1], [0], [0], [1], [0, 0, 1, 1], [], []>} : vector<128x128xbf16>, vector<128x128xbf16>, vector<128x128xf32> -> vector<128x128xf32>
      %19 = arith.addf %15, %18 : vector<128x128xf32>
      %c0_20 = arith.constant 0 : index
      %c0_21 = arith.constant 0 : index
      %20 = vector.load %arg7[%c0_20, %c0_21] : memref<1x128xf32, #tpu.memory_space<vmem>>, vector<1x128xf32>
      %21 = vector.broadcast %20 : vector<1x128xf32> to vector<128x128xf32>
      %22 = arith.addf %19, %21 : vector<128x128xf32>
      %cst_22 = arith.constant 0.000000e+00 : f32
      %23 = vector.broadcast %cst_22 : f32 to vector<128x128xf32>
      %24 = arith.maximumf %22, %23 : vector<128x128xf32>
      %c0_23 = arith.constant 0 : index
      %c0_24 = arith.constant 0 : index
      %25 = vector.load %arg8[%c0_23, %c0_24] : memref<1x128xf32, #tpu.memory_space<vmem>>, vector<1x128xf32>
      %26 = vector.broadcast %25 : vector<1x128xf32> to vector<128x128xf32>
      %27 = arith.mulf %24, %26 : vector<128x128xf32>
      %c0_25 = arith.constant 0 : index
      %c0_26 = arith.constant 0 : index
      %28 = vector.load %arg9[%c0_25, %c0_26] : memref<1x128xf32, #tpu.memory_space<vmem>>, vector<1x128xf32>
      %29 = vector.broadcast %28 : vector<1x128xf32> to vector<128x128xf32>
      %30 = arith.addf %27, %29 : vector<128x128xf32>
      %31 = arith.truncf %30 : vector<128x128xf32> to vector<128x128xbf16>
      %c0_27 = arith.constant 0 : index
      %c0_28 = arith.constant 0 : index
      %32 = vector.load %arg10[%c0_27, %c0_28] : memref<128x128xbf16, #tpu.memory_space<vmem>>, vector<128x128xbf16>
      tpu.vector_store %arg10[%c0_27, %c0_28], %31 {strides = array<i32>} : memref<128x128xbf16, #tpu.memory_space<vmem>>, vector<128x128xbf16>,
    } else {
    }
    return
  }
  func.func @transform_0(%arg0: i32, %arg1: i32) -> (i32, i32) {
    %c0_i32 = arith.constant 0 : i32
    return %arg0, %arg1 : i32, i32
  }
  func.func @transform_1(%arg0: i32, %arg1: i32) -> (i32, i32) {
    %c0_i32 = arith.constant 0 : i32
    %c0_i32_0 = arith.constant 0 : i32
    return %arg1, %c0_i32 : i32, i32
  }
  func.func @transform_2(%arg0: i32, %arg1: i32) -> (i32, i32) {
    %c0_i32 = arith.constant 0 : i32
    %c0_i32_0 = arith.constant 0 : i32
    return %arg0, %c0_i32 : i32, i32
  }
  func.func @transform_3(%arg0: i32, %arg1: i32) -> (i32, i32) {
    %c0_i32 = arith.constant 0 : i32
    %c0_i32_0 = arith.constant 0 : i32
    %c0_i32_1 = arith.constant 0 : i32
    return %c0_i32, %c0_i32_0 : i32, i32
  }
  func.func @transform_4(%arg0: i32, %arg1: i32) -> (i32, i32) {
    %c0_i32 = arith.constant 0 : i32
    %c0_i32_0 = arith.constant 0 : i32
    %c0_i32_1 = arith.constant 0 : i32
    return %c0_i32, %c0_i32_0 : i32, i32
  }
  func.func @transform_5(%arg0: i32, %arg1: i32) -> (i32, i32) {
    %c0_i32 = arith.constant 0 : i32
    %c0_i32_0 = arith.constant 0 : i32
    %c0_i32_1 = arith.constant 0 : i32
    return %c0_i32, %c0_i32_0 : i32, i32
  }
  func.func @transform_6(%arg0: i32, %arg1: i32) -> (i32, i32) {
    %c0_i32 = arith.constant 0 : i32
    %c0_i32_0 = arith.constant 0 : i32
    %c0_i32_1 = arith.constant 0 : i32
    return %c0_i32, %c0_i32_0 : i32, i32
  }
  func.func @transform_7(%arg0: i32, %arg1: i32) -> (i32, i32) {
    %c0_i32 = arith.constant 0 : i32
    %c0_i32_0 = arith.constant 0 : i32
    %c0_i32_1 = arith.constant 0 : i32
    return %c0_i32, %c0_i32_0 : i32, i32
  }
  func.func @transform_8(%arg0: i32, %arg1: i32) -> (i32, i32) {
    %c0_i32 = arith.constant 0 : i32
    %c0_i32_0 = arith.constant 0 : i32
    return %arg0, %c0_i32 : i32, i32
  }
}

module attributes {stable_mosaic.version = 11 : i64} {
  func.func @_edge_mlp_kernel(%arg0: i32, %arg1: memref<24x128xbf16, #tpu.memory_space<vmem>>, %arg2: memref<24x128xbf16, #tpu.memory_space<vmem>>, %arg3: memref<128x128xbf16, #tpu.memory_space<vmem>>, %arg4: memref<128x128xbf16, #tpu.memory_space<vmem>>, %arg5: memref<1x128xf32, #tpu.memory_space<vmem>>, %arg6: memref<1x128xf32, #tpu.memory_space<vmem>>, %arg7: memref<1x1xf32, #tpu.memory_space<vmem>>, %arg8: memref<1x24xf32, #tpu.memory_space<vmem>>) attributes {dimension_semantics = [#tpu.dimension_semantics<parallel>], iteration_bounds = array<i64: 1>, scalar_prefetch = 0 : i64, scratch_operands = 0 : i64, tpu.core_type = #tpu.core_type<tc>, window_params = [{transform_indices = @transform_0, window_bounds = array<i64: 24, 128>}, {transform_indices = @transform_1, window_bounds = array<i64: 24, 128>}, {pipeline_mode = #tpu.pipeline_mode<synchronous>, transform_indices = @transform_2, window_bounds = array<i64: 128, 128>}, {pipeline_mode = #tpu.pipeline_mode<synchronous>, transform_indices = @transform_3, window_bounds = array<i64: 128, 128>}, {pipeline_mode = #tpu.pipeline_mode<synchronous>, transform_indices = @transform_4, window_bounds = array<i64: 1, 128>}, {pipeline_mode = #tpu.pipeline_mode<synchronous>, transform_indices = @transform_5, window_bounds = array<i64: 1, 128>}, {pipeline_mode = #tpu.pipeline_mode<synchronous>, transform_indices = @transform_6, window_bounds = array<i64: 1, 1>}, {transform_indices = @transform_7, window_bounds = array<i64: 1, 24>}]} {
    %c0 = arith.constant 0 : index
    %c0_0 = arith.constant 0 : index
    %0 = vector.load %arg1[%c0, %c0_0] : memref<24x128xbf16, #tpu.memory_space<vmem>>, vector<24x128xbf16>
    %c0_1 = arith.constant 0 : index
    %c0_2 = arith.constant 0 : index
    %1 = vector.load %arg3[%c0_1, %c0_2] : memref<128x128xbf16, #tpu.memory_space<vmem>>, vector<128x128xbf16>
    %cst = arith.constant dense<0.000000e+00> : vector<24x128xf32>
    %2 = tpu.matmul %0, %1, %cst {dimension_numbers = #tpu.dot_dimension_numbers<[1], [0], [0], [1], [0, 0, 1, 1], [], []>} : vector<24x128xbf16>, vector<128x128xbf16>, vector<24x128xf32> -> vector<24x128xf32>
    %c0_3 = arith.constant 0 : index
    %c0_4 = arith.constant 0 : index
    %3 = vector.load %arg2[%c0_3, %c0_4] : memref<24x128xbf16, #tpu.memory_space<vmem>>, vector<24x128xbf16>
    %c0_5 = arith.constant 0 : index
    %c0_6 = arith.constant 0 : index
    %4 = vector.load %arg4[%c0_5, %c0_6] : memref<128x128xbf16, #tpu.memory_space<vmem>>, vector<128x128xbf16>
    %cst_7 = arith.constant dense<0.000000e+00> : vector<24x128xf32>
    %5 = tpu.matmul %3, %4, %cst_7 {dimension_numbers = #tpu.dot_dimension_numbers<[1], [0], [0], [1], [0, 0, 1, 1], [], []>} : vector<24x128xbf16>, vector<128x128xbf16>, vector<24x128xf32> -> vector<24x128xf32>
    %6 = arith.addf %2, %5 : vector<24x128xf32>
    %c0_8 = arith.constant 0 : index
    %c0_9 = arith.constant 0 : index
    %7 = vector.load %arg5[%c0_8, %c0_9] : memref<1x128xf32, #tpu.memory_space<vmem>>, vector<1x128xf32>
    %8 = vector.broadcast %7 : vector<1x128xf32> to vector<24x128xf32>
    %9 = arith.addf %6, %8 : vector<24x128xf32>
    %cst_10 = arith.constant 0.000000e+00 : f32
    %10 = vector.broadcast %cst_10 : f32 to vector<24x128xf32>
    %11 = arith.maximumf %9, %10 : vector<24x128xf32>
    %c0_11 = arith.constant 0 : index
    %c0_12 = arith.constant 0 : index
    %12 = vector.load %arg6[%c0_11, %c0_12] : memref<1x128xf32, #tpu.memory_space<vmem>>, vector<1x128xf32>
    %cst_13 = arith.constant dense<0.000000e+00> : vector<1x24xf32>
    %13 = tpu.matmul %12, %11, %cst_13 {dimension_numbers = #tpu.dot_dimension_numbers<[1], [1], [0], [0], [0, 0, 1, 0], [], []>} : vector<1x128xf32>, vector<24x128xf32>, vector<1x24xf32> -> vector<1x24xf32>
    %c0_14 = arith.constant 0 : index
    %c0_15 = arith.constant 0 : index
    %14 = vector.load %arg7[%c0_14, %c0_15] : memref<1x1xf32, #tpu.memory_space<vmem>>, vector<1x1xf32>
    %15 = vector.broadcast %14 : vector<1x1xf32> to vector<1x24xf32>
    %16 = arith.addf %13, %15 : vector<1x24xf32>
    %c0_16 = arith.constant 0 : index
    %c0_17 = arith.constant 0 : index
    %17 = vector.load %arg8[%c0_16, %c0_17] : memref<1x24xf32, #tpu.memory_space<vmem>>, vector<1x24xf32>
    tpu.vector_store %arg8[%c0_16, %c0_17], %16 {strides = array<i32>} : memref<1x24xf32, #tpu.memory_space<vmem>>, vector<1x24xf32>,
    return
  }
  func.func @transform_0(%arg0: i32) -> (i32, i32) {
    %c0_i32 = arith.constant 0 : i32
    %c0_i32_0 = arith.constant 0 : i32
    return %arg0, %c0_i32 : i32, i32
  }
  func.func @transform_1(%arg0: i32) -> (i32, i32) {
    %c0_i32 = arith.constant 0 : i32
    %c0_i32_0 = arith.constant 0 : i32
    return %arg0, %c0_i32 : i32, i32
  }
  func.func @transform_2(%arg0: i32) -> (i32, i32) {
    %c0_i32 = arith.constant 0 : i32
    %c0_i32_0 = arith.constant 0 : i32
    %c0_i32_1 = arith.constant 0 : i32
    return %c0_i32, %c0_i32_0 : i32, i32
  }
  func.func @transform_3(%arg0: i32) -> (i32, i32) {
    %c0_i32 = arith.constant 0 : i32
    %c0_i32_0 = arith.constant 0 : i32
    %c0_i32_1 = arith.constant 0 : i32
    return %c0_i32, %c0_i32_0 : i32, i32
  }
  func.func @transform_4(%arg0: i32) -> (i32, i32) {
    %c0_i32 = arith.constant 0 : i32
    %c0_i32_0 = arith.constant 0 : i32
    %c0_i32_1 = arith.constant 0 : i32
    return %c0_i32, %c0_i32_0 : i32, i32
  }
  func.func @transform_5(%arg0: i32) -> (i32, i32) {
    %c0_i32 = arith.constant 0 : i32
    %c0_i32_0 = arith.constant 0 : i32
    %c0_i32_1 = arith.constant 0 : i32
    return %c0_i32, %c0_i32_0 : i32, i32
  }
  func.func @transform_6(%arg0: i32) -> (i32, i32) {
    %c0_i32 = arith.constant 0 : i32
    %c0_i32_0 = arith.constant 0 : i32
    %c0_i32_1 = arith.constant 0 : i32
    return %c0_i32, %c0_i32_0 : i32, i32
  }
  func.func @transform_7(%arg0: i32) -> (i32, i32) {
    %c0_i32 = arith.constant 0 : i32
    %c0_i32_0 = arith.constant 0 : i32
    return %c0_i32, %arg0 : i32, i32
  }
}

</mosaic_0001>

<llo_original>
// kernel: hetero_gnn_forward.8
$region0: #{hetero_gnn_forward.8}
  #allocation0 [shape = 'u32[]', space=smem, size = 0x4, offset = 0x4, fixed_abs, tag = 'smem constant byte address 0x4 - core index']
  #allocation1 [shape = 'u32[144,128]{1,0:T(1,128)}', space=vmem, size = 0x12000, scoped, tag = 'internal scratch']
  #allocation2 [shape = 'f32[128,128]{1,0:T(8,128)}', space=vmem, size = 0x10000, scoped, tag = 'scratch operand']
  %s0 = inlined_call_operand.vmem [shape: bf16[128,128], index: 0, kind: input, shape index: {}]
  %s1 = inlined_call_operand.vmem [shape: bf16[128,128], index: 1, kind: input, shape index: {}]
  %s2 = inlined_call_operand.vmem [shape: bf16[128,32], index: 2, kind: input, shape index: {}]
  %s3 = inlined_call_operand.vmem [shape: bf16[32,128], index: 3, kind: input, shape index: {}]
  %s4 = inlined_call_operand.vmem [shape: f32[1,128], index: 4, kind: input, shape index: {}]
  %s5 = inlined_call_operand.vmem [shape: f32[1,128], index: 5, kind: input, shape index: {}]
  %s6 = inlined_call_operand.vmem [shape: f32[1,128], index: 6, kind: input, shape index: {}]
  %s7 = inlined_call_operand.vmem [shape: bf16[128,128], index: 7, kind: output, shape index: {}]
  %s8 = sld [smem:[#allocation0]]
  $region46: #{hetero_gnn_forward.8} parent=0
    _
  %s10 = ssub.s32 1, %s8
  %s11 = scalar_select 0, %s10, %s8
  // Predicated region
  $region2: #{hetero_gnn_forward.8} parent=0 // pred_check
    _
  $region3: #{hetero_gnn_forward.8} parent=0 // pred_check_branch
    %13 = sbr.rel (0) target = $region5
  $region4: #{hetero_gnn_forward.8} parent=0 // pred_region
    _
  $region5: #{hetero_gnn_forward.8} parent=0 // pred_fallthru
    _
  // Predicated region
  $region6: #{hetero_gnn_forward.8} parent=0 // pred_check
    _
  $region7: #{hetero_gnn_forward.8} parent=0 // pred_check_branch
    %15 = sbr.rel (0) target = $region9
  $region8: #{hetero_gnn_forward.8} parent=0 // pred_region
    _
  $region9: #{hetero_gnn_forward.8} parent=0 // pred_fallthru
    _
  // Predicated region
  $region10: #{hetero_gnn_forward.8} parent=0 // pred_check
    _
  $region11: #{hetero_gnn_forward.8} parent=0 // pred_check_branch
    %17 = sbr.rel (0) target = $region13
  $region12: #{hetero_gnn_forward.8} parent=0 // pred_region
    _
  $region13: #{hetero_gnn_forward.8} parent=0 // pred_fallthru
    _
  // Predicated region
  $region14: #{hetero_gnn_forward.8} parent=0 // pred_check
    _
  $region15: #{hetero_gnn_forward.8} parent=0 // pred_check_branch
    %19 = sbr.rel (0) target = $region17
  $region16: #{hetero_gnn_forward.8} parent=0 // pred_region
    _
  $region17: #{hetero_gnn_forward.8} parent=0 // pred_fallthru
    _
  // Predicated region
  $region18: #{hetero_gnn_forward.8} parent=0 // pred_check
    _
  $region19: #{hetero_gnn_forward.8} parent=0 // pred_check_branch
    %21 = sbr.rel (0) target = $region21
  $region20: #{hetero_gnn_forward.8} parent=0 // pred_region
    _
  $region21: #{hetero_gnn_forward.8} parent=0 // pred_fallthru
    _
  // Predicated region
  $region22: #{hetero_gnn_forward.8} parent=0 // pred_check
    _
  $region23: #{hetero_gnn_forward.8} parent=0 // pred_check_branch
    %23 = sbr.rel (0) target = $region25
  $region24: #{hetero_gnn_forward.8} parent=0 // pred_region
    _
  $region25: #{hetero_gnn_forward.8} parent=0 // pred_fallthru
    _
  // Predicated region
  $region26: #{hetero_gnn_forward.8} parent=0 // pred_check
    _
  $region27: #{hetero_gnn_forward.8} parent=0 // pred_check_branch
    %25 = sbr.rel (0) target = $region29
  $region28: #{hetero_gnn_forward.8} parent=0 // pred_region
    _
  $region29: #{hetero_gnn_forward.8} parent=0 // pred_fallthru
    _
  %p27 = scmp.eq.s32.totalorder 0, 0
  // Predicated region
  $region30: #{hetero_gnn_forward.8} parent=0 // pred_check
    %p28 = pneg %p27
  $region31: #{hetero_gnn_forward.8} parent=0 // pred_check_branch
    %30 = sbr.rel (%p28) target = $region33
  $region32: #{hetero_gnn_forward.8} parent=0 // pred_region
    %v31 = vld [vmem:[%s2] sm:$0xf]
    %v32 = vld [vmem:[%s2 + $0x4] sm:$0xf]
    %v33 = vld [vmem:[%s2 + $0x8] sm:$0xf]
    %v34 = vld [vmem:[%s2 + $0xc] sm:$0xf]
    %v35 = vld [vmem:[%s2 + $0x10] sm:$0xf]
    %v36 = vld [vmem:[%s2 + $0x14] sm:$0xf]
    %v37 = vld [vmem:[%s2 + $0x18] sm:$0xf]
    %v38 = vld [vmem:[%s2 + $0x1c] sm:$0xf]
    %v39 = vld [vmem:[%s2 + $0x20] sm:$0xf]
    %v40 = vld [vmem:[%s2 + $0x24] sm:$0xf]
    %v41 = vld [vmem:[%s2 + $0x28] sm:$0xf]
    %v42 = vld [vmem:[%s2 + $0x2c] sm:$0xf]
    %v43 = vld [vmem:[%s2 + $0x30] sm:$0xf]
    %v44 = vld [vmem:[%s2 + $0x34] sm:$0xf]
    %v45 = vld [vmem:[%s2 + $0x38] sm:$0xf]
    %v46 = vld [vmem:[%s2 + $0x3c] sm:$0xf]
    %v47 = vld [vmem:[%s3] sm:$0xf]
    %v48 = vld [vmem:[%s3 + $0x4] sm:$0xf]
    %v49 = vld [vmem:[%s3 + $0x8] sm:$0xf]
    %v50 = vld [vmem:[%s3 + $0xc] sm:$0xf]
    %v51 = vld [vmem:[%s4] sm:$0x1]
    %v53 = vlaneseq
    %v54 = vshrl.u32 %v53, 7
    %v55 = vsub.s32 0, %v54
    %v56 = vrot.slane %v51, %v55
    %v74 = vunpack.c.l.b16 %v31
    %v75 = vunpack.c.l.b16 %v32
    %v76 = vunpack.c.l.b16 %v33
    %v77 = vunpack.c.l.b16 %v34
    %v78 = vunpack.c.l.b16 %v35
    %v79 = vunpack.c.l.b16 %v36
    %v80 = vunpack.c.l.b16 %v37
    %v81 = vunpack.c.l.b16 %v38
    %v82 = vunpack.c.l.b16 %v39
    %v83 = vunpack.c.l.b16 %v40
    %v84 = vunpack.c.l.b16 %v41
    %v85 = vunpack.c.l.b16 %v42
    %v86 = vunpack.c.l.b16 %v43
    %v87 = vunpack.c.l.b16 %v44
    %v88 = vunpack.c.l.b16 %v45
    %v89 = vunpack.c.l.b16 %v46
    %v90 = vpack.c.b16 %v75, %v74
    %v91 = vpack.c.b16 %v77, %v76
    %v92 = vpack.c.b16 %v79, %v78
    %v93 = vpack.c.b16 %v81, %v80
    %v94 = vpack.c.b16 %v83, %v82
    %v95 = vpack.c.b16 %v85, %v84
    %v96 = vpack.c.b16 %v87, %v86
    %v97 = vpack.c.b16 %v89, %v88
    %v102 = vunpack.c.l.b16 %v47
    %v103 = vunpack.c.l.b16 %v48
    %v104 = vunpack.c.l.b16 %v49
    %v105 = vunpack.c.l.b16 %v50
    %v106 = vpack.c.b16 %v103, %v102
    %v107 = vpack.c.b16 %v105, %v104
    %vm110 = vcmask 261120
    %v112 = vsel %vm110, %v90, 0
    %v115 = vsel %vm110, %v91, 0
    %v118 = vsel %vm110, %v92, 0
    %v121 = vsel %vm110, %v93, 0
    %v124 = vsel %vm110, %v94, 0
    %v127 = vsel %vm110, %v95, 0
    %v130 = vsel %vm110, %v96, 0
    %v133 = vsel %vm110, %v97, 0
    %135 = vmatprep.subr.bf16.mxu0 0
    %136 = vmatpush1.bf16.msra.mxu0 %v106
    %137 = vmatprep.subr.bf16.mxu0 0
    %138 = vmatpush1.bf16.msra.mxu0 %v107
    %139 = vmatprep.subr.bf16.mxu0 0
    %140 = vmatpush1.bf16.msra.mxu0 0
    %141 = vmatprep.subr.bf16.mxu0 0
    %142 = vmatpush1.bf16.msra.mxu0 0
    %143 = vmatprep.subr.bf16.mxu0 0
    %144 = vmatpush1.bf16.msra.mxu0 0
    %145 = vmatprep.subr.bf16.mxu0 0
    %146 = vmatpush1.bf16.msra.mxu0 0
    %147 = vmatprep.subr.bf16.mxu0 0
    %148 = vmatpush1.bf16.msra.mxu0 0
    %149 = vmatprep.subr.bf16.mxu0 0
    %150 = vmatpush1.bf16.msra.mxu0 0
    %151 = vmatprep.subr.bf16.mxu0 0
    %152 = vmatpush1.bf16.msra.mxu0 0
    %153 = vmatprep.subr.bf16.mxu0 0
    %154 = vmatpush1.bf16.msra.mxu0 0
    %155 = vmatprep.subr.bf16.mxu0 0
    %156 = vmatpush1.bf16.msra.mxu0 0
    %157 = vmatprep.subr.bf16.mxu0 0
    %158 = vmatpush1.bf16.msra.mxu0 0
    %159 = vmatprep.subr.bf16.mxu0 0
    %160 = vmatpush1.bf16.msra.mxu0 0
    %161 = vmatprep.subr.bf16.mxu0 0
    %162 = vmatpush1.bf16.msra.mxu0 0
    %163 = vmatprep.subr.bf16.mxu0 0
    %164 = vmatpush1.bf16.msra.mxu0 0
    %165 = vmatprep.subr.bf16.mxu0 0
    %166 = vmatpush1.bf16.msra.mxu0 0
    %167 = vmatprep.mubr.bf16.mxu0 0
    %168 = vmatmul.mubr.bf16.gmra.mrb[0].mxu0 %v112
    %v169 = vpop.f32.mrb[0].mxu0
    %v170 = vadd.f32 %v56, %v169
    %v171 = vpop.f32.mrb[0].mxu0
    %v172 = vpop.f32.mrb[0].mxu0
    %v173 = vadd.f32 %v56, %v172
    %v174 = vpop.f32.mrb[0].mxu0
    %175 = vmatprep.mubr.bf16.mxu0 0
    %176 = vmatmul.mubr.bf16.gmra.mrb[0].mxu0 %v115
    %v177 = vpop.f32.mrb[0].mxu0
    %v178 = vadd.f32 %v56, %v177
    %v179 = vpop.f32.mrb[0].mxu0
    %v180 = vpop.f32.mrb[0].mxu0
    %v181 = vadd.f32 %v56, %v180
    %v182 = vpop.f32.mrb[0].mxu0
    %183 = vmatprep.mubr.bf16.mxu0 0
    %184 = vmatmul.mubr.bf16.gmra.mrb[0].mxu0 %v118
    %v185 = vpop.f32.mrb[0].mxu0
    %v186 = vadd.f32 %v56, %v185
    %v187 = vpop.f32.mrb[0].mxu0
    %v188 = vpop.f32.mrb[0].mxu0
    %v189 = vadd.f32 %v56, %v188
    %v190 = vpop.f32.mrb[0].mxu0
    %191 = vmatprep.mubr.bf16.mxu0 0
    %192 = vmatmul.mubr.bf16.gmra.mrb[0].mxu0 %v121
    %v193 = vpop.f32.mrb[0].mxu0
    %v194 = vadd.f32 %v56, %v193
    %v195 = vpop.f32.mrb[0].mxu0
    %v196 = vpop.f32.mrb[0].mxu0
    %v197 = vadd.f32 %v56, %v196
    %v198 = vpop.f32.mrb[0].mxu0
    %199 = vmatprep.mubr.bf16.mxu0 0
    %200 = vmatmul.mubr.bf16.gmra.mrb[0].mxu0 %v124
    %v201 = vpop.f32.mrb[0].mxu0
    %v202 = vadd.f32 %v56, %v201
    %v203 = vpop.f32.mrb[0].mxu0
    %v204 = vpop.f32.mrb[0].mxu0
    %v205 = vadd.f32 %v56, %v204
    %v206 = vpop.f32.mrb[0].mxu0
    %207 = vmatprep.mubr.bf16.mxu0 0
    %208 = vmatmul.mubr.bf16.gmra.mrb[0].mxu0 %v127
    %v209 = vpop.f32.mrb[0].mxu0
    %v210 = vadd.f32 %v56, %v209
    %v211 = vpop.f32.mrb[0].mxu0
    %v212 = vpop.f32.mrb[0].mxu0
    %v213 = vadd.f32 %v56, %v212
    %v214 = vpop.f32.mrb[0].mxu0
    %215 = vmatprep.mubr.bf16.mxu0 0
    %216 = vmatmul.mubr.bf16.gmra.mrb[0].mxu0 %v130
    %v217 = vpop.f32.mrb[0].mxu0
    %v218 = vadd.f32 %v56, %v217
    %v219 = vpop.f32.mrb[0].mxu0
    %v220 = vpop.f32.mrb[0].mxu0
    %v221 = vadd.f32 %v56, %v220
    %v222 = vpop.f32.mrb[0].mxu0
    %223 = vmatprep.mubr.bf16.mxu0 0
    %224 = vmatmul.mubr.bf16.gmra.mrb[0].mxu0 %v133
    %v225 = vpop.f32.mrb[0].mxu0
    %v226 = vadd.f32 %v56, %v225
    %v227 = vpop.f32.mrb[0].mxu0
    %v228 = vpop.f32.mrb[0].mxu0
    %v229 = vadd.f32 %v56, %v228
    %v230 = vpop.f32.mrb[0].mxu0
    %231 = vdwg.mxu0
    %232 = vst [vmem:[#allocation2] sm:$0xff] %v170
    %233 = vst [vmem:[#allocation2 + $0x8] sm:$0xff] %v173
    %234 = vst [vmem:[#allocation2 + $0x10] sm:$0xff] %v178
    %235 = vst [vmem:[#allocation2 + $0x18] sm:$0xff] %v181
    %236 = vst [vmem:[#allocation2 + $0x20] sm:$0xff] %v186
    %237 = vst [vmem:[#allocation2 + $0x28] sm:$0xff] %v189
    %238 = vst [vmem:[#allocation2 + $0x30] sm:$0xff] %v194
    %239 = vst [vmem:[#allocation2 + $0x38] sm:$0xff] %v197
    %240 = vst [vmem:[#allocation2 + $0x40] sm:$0xff] %v202
    %241 = vst [vmem:[#allocation2 + $0x48] sm:$0xff] %v205
    %242 = vst [vmem:[#allocation2 + $0x50] sm:$0xff] %v210
    %243 = vst [vmem:[#allocation2 + $0x58] sm:$0xff] %v213
    %244 = vst [vmem:[#allocation2 + $0x60] sm:$0xff] %v218
    %245 = vst [vmem:[#allocation2 + $0x68] sm:$0xff] %v221
    %246 = vst [vmem:[#allocation2 + $0x70] sm:$0xff] %v226
    %247 = vst [vmem:[#allocation2 + $0x78] sm:$0xff] %v229
  $region33: #{hetero_gnn_forward.8} parent=0 // pred_fallthru
    _
  %v248 = vld [vmem:[#allocation2] sm:$0xff]
  %v249 = vld [vmem:[#allocation2 + $0x8] sm:$0xff]
  %v250 = vld [vmem:[#allocation2 + $0x10] sm:$0xff]
  %v251 = vld [vmem:[#allocation2 + $0x18] sm:$0xff]
  %v252 = vld [vmem:[#allocation2 + $0x20] sm:$0xff]
  %v253 = vld [vmem:[#allocation2 + $0x28] sm:$0xff]
  %v254 = vld [vmem:[#allocation2 + $0x30] sm:$0xff]
  %v255 = vld [vmem:[#allocation2 + $0x38] sm:$0xff]
  %v256 = vld [vmem:[#allocation2 + $0x40] sm:$0xff]
  %v257 = vld [vmem:[#allocation2 + $0x48] sm:$0xff]
  %v258 = vld [vmem:[#allocation2 + $0x50] sm:$0xff]
  %v259 = vld [vmem:[#allocation2 + $0x58] sm:$0xff]
  %v260 = vld [vmem:[#allocation2 + $0x60] sm:$0xff]
  %v261 = vld [vmem:[#allocation2 + $0x68] sm:$0xff]
  %v262 = vld [vmem:[#allocation2 + $0x70] sm:$0xff]
  %v263 = vld [vmem:[#allocation2 + $0x78] sm:$0xff]
  %v264 = vld [vmem:[%s0] sm:$0xf]
  %v265 = vld [vmem:[%s0 + $0x4] sm:$0xf]
  %v266 = vld [vmem:[%s0 + $0x8] sm:$0xf]
  %v267 = vld [vmem:[%s0 + $0xc] sm:$0xf]
  %v268 = vld [vmem:[%s0 + $0x10] sm:$0xf]
  %v269 = vld [vmem:[%s0 + $0x14] sm:$0xf]
  %v270 = vld [vmem:[%s0 + $0x18] sm:$0xf]
  %v271 = vld [vmem:[%s0 + $0x1c] sm:$0xf]
  %v272 = vld [vmem:[%s0 + $0x20] sm:$0xf]
  %v273 = vld [vmem:[%s0 + $0x24] sm:$0xf]
  %v274 = vld [vmem:[%s0 + $0x28] sm:$0xf]
  %v275 = vld [vmem:[%s0 + $0x2c] sm:$0xf]
  %v276 = vld [vmem:[%s0 + $0x30] sm:$0xf]
  %v277 = vld [vmem:[%s0 + $0x34] sm:$0xf]
  %v278 = vld [vmem:[%s0 + $0x38] sm:$0xf]
  %v279 = vld [vmem:[%s0 + $0x3c] sm:$0xf]
  %v280 = vld [vmem:[%s1] sm:$0xf]
  %v281 = vld [vmem:[%s1 + $0x4] sm:$0xf]
  %v282 = vld [vmem:[%s1 + $0x8] sm:$0xf]
  %v283 = vld [vmem:[%s1 + $0xc] sm:$0xf]
  %v284 = vld [vmem:[%s1 + $0x10] sm:$0xf]
  %v285 = vld [vmem:[%s1 + $0x14] sm:$0xf]
  %v286 = vld [vmem:[%s1 + $0x18] sm:$0xf]
  %v287 = vld [vmem:[%s1 + $0x1c] sm:$0xf]
  %v288 = vld [vmem:[%s1 + $0x20] sm:$0xf]
  %v289 = vld [vmem:[%s1 + $0x24] sm:$0xf]
  %v290 = vld [vmem:[%s1 + $0x28] sm:$0xf]
  %v291 = vld [vmem:[%s1 + $0x2c] sm:$0xf]
  %v292 = vld [vmem:[%s1 + $0x30] sm:$0xf]
  %v293 = vld [vmem:[%s1 + $0x34] sm:$0xf]
  %v294 = vld [vmem:[%s1 + $0x38] sm:$0xf]
  %v295 = vld [vmem:[%s1 + $0x3c] sm:$0xf]
  %v312 = vunpack.c.l.b16 %v264
  %v313 = vunpack.c.l.b16 %v265
  %v314 = vunpack.c.l.b16 %v266
  %v315 = vunpack.c.l.b16 %v267
  %v316 = vunpack.c.l.b16 %v268
  %v317 = vunpack.c.l.b16 %v269
  %v318 = vunpack.c.l.b16 %v270
  %v319 = vunpack.c.l.b16 %v271
  %v320 = vunpack.c.l.b16 %v272
  %v321 = vunpack.c.l.b16 %v273
  %v322 = vunpack.c.l.b16 %v274
  %v323 = vunpack.c.l.b16 %v275
  %v324 = vunpack.c.l.b16 %v276
  %v325 = vunpack.c.l.b16 %v277
  %v326 = vunpack.c.l.b16 %v278
  %v327 = vunpack.c.l.b16 %v279
  %v328 = vpack.c.b16 %v313, %v312
  %v329 = vpack.c.b16 %v315, %v314
  %v330 = vpack.c.b16 %v317, %v316
  %v331 = vpack.c.b16 %v319, %v318
  %v332 = vpack.c.b16 %v321, %v320
  %v333 = vpack.c.b16 %v323, %v322
  %v334 = vpack.c.b16 %v325, %v324
  %v335 = vpack.c.b16 %v327, %v326
  %v360 = vunpack.c.l.b16 %v280
  %v361 = vunpack.c.l.b16 %v281
  %v362 = vunpack.c.l.b16 %v282
  %v363 = vunpack.c.l.b16 %v283
  %v364 = vunpack.c.l.b16 %v284
  %v365 = vunpack.c.l.b16 %v285
  %v366 = vunpack.c.l.b16 %v286
  %v367 = vunpack.c.l.b16 %v287
  %v368 = vunpack.c.l.b16 %v288
  %v369 = vunpack.c.l.b16 %v289
  %v370 = vunpack.c.l.b16 %v290
  %v371 = vunpack.c.l.b16 %v291
  %v372 = vunpack.c.l.b16 %v292
  %v373 = vunpack.c.l.b16 %v293
  %v374 = vunpack.c.l.b16 %v294
  %v375 = vunpack.c.l.b16 %v295
  %v376 = vpack.c.b16 %v361, %v360
  %v377 = vpack.c.b16 %v363, %v362
  %v378 = vpack.c.b16 %v365, %v364
  %v379 = vpack.c.b16 %v367, %v366
  %v380 = vpack.c.b16 %v369, %v368
  %v381 = vpack.c.b16 %v371, %v370
  %v382 = vpack.c.b16 %v373, %v372
  %v383 = vpack.c.b16 %v375, %v374
  %392 = vmatprep.subr.bf16.mxu0 0
  %393 = vmatpush1.bf16.msra.mxu0 %v376
  %394 = vmatprep.subr.bf16.mxu0 0
  %395 = vmatpush1.bf16.msra.mxu0 %v377
  %396 = vmatprep.subr.bf16.mxu0 0
  %397 = vmatpush1.bf16.msra.mxu0 %v378
  %398 = vmatprep.subr.bf16.mxu0 0
  %399 = vmatpush1.bf16.msra.mxu0 %v379
  %400 = vmatprep.subr.bf16.mxu0 0
  %401 = vmatpush1.bf16.msra.mxu0 %v380
  %402 = vmatprep.subr.bf16.mxu0 0
  %403 = vmatpush1.bf16.msra.mxu0 %v381
  %404 = vmatprep.subr.bf16.mxu0 0
  %405 = vmatpush1.bf16.msra.mxu0 %v382
  %406 = vmatprep.subr.bf16.mxu0 0
  %407 = vmatpush1.bf16.msra.mxu0 %v383
  %408 = vmatprep.subr.bf16.mxu0 0
  %409 = vmatpush1.bf16.msra.mxu0 0
  %410 = vmatprep.subr.bf16.mxu0 0
  %411 = vmatpush1.bf16.msra.mxu0 0
  %412 = vmatprep.subr.bf16.mxu0 0
  %413 = vmatpush1.bf16.msra.mxu0 0
  %414 = vmatprep.subr.bf16.mxu0 0
  %415 = vmatpush1.bf16.msra.mxu0 0
  %416 = vmatprep.subr.bf16.mxu0 0
  %417 = vmatpush1.bf16.msra.mxu0 0
  %418 = vmatprep.subr.bf16.mxu0 0
  %419 = vmatpush1.bf16.msra.mxu0 0
  %420 = vmatprep.subr.bf16.mxu0 0
  %421 = vmatpush1.bf16.msra.mxu0 0
  %422 = vmatprep.subr.bf16.mxu0 0
  %423 = vmatpush1.bf16.msra.mxu0 0
  %424 = vmatprep.mubr.bf16.mxu0 0
  %425 = vmatmul.mubr.bf16.gmra.mrb[0].mxu0 %v328
  %v426 = vpop.f32.mrb[0].mxu0
  %v427 = vadd.f32 0.0, %v426
  %v428 = vpop.f32.mrb[0].mxu0
  %v429 = vpop.f32.mrb[0].mxu0
  %v430 = vadd.f32 0.0, %v429
  %v431 = vpop.f32.mrb[0].mxu0
  %432 = vmatprep.mubr.bf16.mxu0 0
  %433 = vmatmul.mubr.bf16.gmra.mrb[0].mxu0 %v329
  %v434 = vpop.f32.mrb[0].mxu0
  %v435 = vadd.f32 0.0, %v434
  %v436 = vpop.f32.mrb[0].mxu0
  %v437 = vpop.f32.mrb[0].mxu0
  %v438 = vadd.f32 0.0, %v437
  %v439 = vpop.f32.mrb[0].mxu0
  %440 = vmatprep.mubr.bf16.mxu0 0
  %441 = vmatmul.mubr.bf16.gmra.mrb[0].mxu0 %v330
  %v442 = vpop.f32.mrb[0].mxu0
  %v443 = vadd.f32 0.0, %v442
  %v444 = vpop.f32.mrb[0].mxu0
  %v445 = vpop.f32.mrb[0].mxu0
  %v446 = vadd.f32 0.0, %v445
  %v447 = vpop.f32.mrb[0].mxu0
  %448 = vmatprep.mubr.bf16.mxu0 0
  %449 = vmatmul.mubr.bf16.gmra.mrb[0].mxu0 %v331
  %v450 = vpop.f32.mrb[0].mxu0
  %v451 = vadd.f32 0.0, %v450
  %v452 = vpop.f32.mrb[0].mxu0
  %v453 = vpop.f32.mrb[0].mxu0
  %v454 = vadd.f32 0.0, %v453
  %v455 = vpop.f32.mrb[0].mxu0
  %456 = vmatprep.mubr.bf16.mxu0 0
  %457 = vmatmul.mubr.bf16.gmra.mrb[0].mxu0 %v332
  %v458 = vpop.f32.mrb[0].mxu0
  %v459 = vadd.f32 0.0, %v458
  %v460 = vpop.f32.mrb[0].mxu0
  %v461 = vpop.f32.mrb[0].mxu0
  %v462 = vadd.f32 0.0, %v461
  %v463 = vpop.f32.mrb[0].mxu0
  %464 = vmatprep.mubr.bf16.mxu0 0
  %465 = vmatmul.mubr.bf16.gmra.mrb[0].mxu0 %v333
  %v466 = vpop.f32.mrb[0].mxu0
  %v467 = vadd.f32 0.0, %v466
  %v468 = vpop.f32.mrb[0].mxu0
  %v469 = vpop.f32.mrb[0].mxu0
  %v470 = vadd.f32 0.0, %v469
  %v471 = vpop.f32.mrb[0].mxu0
  %472 = vmatprep.mubr.bf16.mxu0 0
  %473 = vmatmul.mubr.bf16.gmra.mrb[0].mxu0 %v334
  %v474 = vpop.f32.mrb[0].mxu0
  %v475 = vadd.f32 0.0, %v474
  %v476 = vpop.f32.mrb[0].mxu0
  %v477 = vpop.f32.mrb[0].mxu0
  %v478 = vadd.f32 0.0, %v477
  %v479 = vpop.f32.mrb[0].mxu0
  %480 = vmatprep.mubr.bf16.mxu0 0
  %481 = vmatmul.mubr.bf16.gmra.mrb[0].mxu0 %v335
  %v482 = vpop.f32.mrb[0].mxu0
  %v483 = vadd.f32 0.0, %v482
  %v484 = vpop.f32.mrb[0].mxu0
  %v485 = vpop.f32.mrb[0].mxu0
  %v486 = vadd.f32 0.0, %v485
  %v487 = vpop.f32.mrb[0].mxu0
  %488 = vdwg.mxu0
  %v489 = vadd.f32 %v248, %v427
  %v490 = vadd.f32 %v249, %v430
  %v491 = vadd.f32 %v250, %v435
  %v492 = vadd.f32 %v251, %v438
  %v493 = vadd.f32 %v252, %v443
  %v494 = vadd.f32 %v253, %v446
  %v495 = vadd.f32 %v254, %v451
  %v496 = vadd.f32 %v255, %v454
  %v497 = vadd.f32 %v256, %v459
  %v498 = vadd.f32 %v257, %v462
  %v499 = vadd.f32 %v258, %v467
  %v500 = vadd.f32 %v259, %v470
  %v501 = vadd.f32 %v260, %v475
  %v502 = vadd.f32 %v261, %v478
  %v503 = vadd.f32 %v262, %v483
  %v504 = vadd.f32 %v263, %v486
  %505 = vst [vmem:[#allocation2] sm:$0xff] %v489
  %506 = vst [vmem:[#allocation2 + $0x8] sm:$0xff] %v490
  %507 = vst [vmem:[#allocation2 + $0x10] sm:$0xff] %v491
  %508 = vst [vmem:[#allocation2 + $0x18] sm:$0xff] %v492
  %509 = vst [vmem:[#allocation2 + $0x20] sm:$0xff] %v493
  %510 = vst [vmem:[#allocation2 + $0x28] sm:$0xff] %v494
  %511 = vst [vmem:[#allocation2 + $0x30] sm:$0xff] %v495
  %512 = vst [vmem:[#allocation2 + $0x38] sm:$0xff] %v496
  %513 = vst [vmem:[#allocation2 + $0x40] sm:$0xff] %v497
  %514 = vst [vmem:[#allocation2 + $0x48] sm:$0xff] %v498
  %515 = vst [vmem:[#allocation2 + $0x50] sm:$0xff] %v499
  %516 = vst [vmem:[#allocation2 + $0x58] sm:$0xff] %v500
  %517 = vst [vmem:[#allocation2 + $0x60] sm:$0xff] %v501
  %518 = vst [vmem:[#allocation2 + $0x68] sm:$0xff] %v502
  %519 = vst [vmem:[#allocation2 + $0x70] sm:$0xff] %v503
  %520 = vst [vmem:[#allocation2 + $0x78] sm:$0xff] %v504
  // Predicated region
  $region34: #{hetero_gnn_forward.8} parent=0 // pred_check
    %p521 = pneg %p27
  $region35: #{hetero_gnn_forward.8} parent=0 // pred_check_branch
    %523 = sbr.rel (%p521) target = $region37
  $region36: #{hetero_gnn_forward.8} parent=0 // pred_region
    %v524 = vld [vmem:[#allocation2] sm:$0xff]
    %v525 = vld [vmem:[#allocation2 + $0x8] sm:$0xff]
    %v526 = vld [vmem:[#allocation2 + $0x10] sm:$0xff]
    %v527 = vld [vmem:[#allocation2 + $0x18] sm:$0xff]
    %v528 = vld [vmem:[#allocation2 + $0x20] sm:$0xff]
    %v529 = vld [vmem:[#allocation2 + $0x28] sm:$0xff]
    %v530 = vld [vmem:[#allocation2 + $0x30] sm:$0xff]
    %v531 = vld [vmem:[#allocation2 + $0x38] sm:$0xff]
    %v532 = vld [vmem:[#allocation2 + $0x40] sm:$0xff]
    %v533 = vld [vmem:[#allocation2 + $0x48] sm:$0xff]
    %v534 = vld [vmem:[#allocation2 + $0x50] sm:$0xff]
    %v535 = vld [vmem:[#allocation2 + $0x58] sm:$0xff]
    %v536 = vld [vmem:[#allocation2 + $0x60] sm:$0xff]
    %v537 = vld [vmem:[#allocation2 + $0x68] sm:$0xff]
    %v538 = vld [vmem:[#allocation2 + $0x70] sm:$0xff]
    %v539 = vld [vmem:[#allocation2 + $0x78] sm:$0xff]
    %v540 = vmax.f32 %v524, 0.0
    %v541 = vmax.f32 %v525, 0.0
    %v542 = vmax.f32 %v526, 0.0
    %v543 = vmax.f32 %v527, 0.0
    %v544 = vmax.f32 %v528, 0.0
    %v545 = vmax.f32 %v529, 0.0
    %v546 = vmax.f32 %v530, 0.0
    %v547 = vmax.f32 %v531, 0.0
    %v548 = vmax.f32 %v532, 0.0
    %v549 = vmax.f32 %v533, 0.0
    %v550 = vmax.f32 %v534, 0.0
    %v551 = vmax.f32 %v535, 0.0
    %v552 = vmax.f32 %v536, 0.0
    %v553 = vmax.f32 %v537, 0.0
    %v554 = vmax.f32 %v538, 0.0
    %v555 = vmax.f32 %v539, 0.0
    %v556 = vld [vmem:[%s5] sm:$0x1]
    %v558 = vlaneseq
    %v559 = vshrl.u32 %v558, 7
    %v560 = vsub.s32 0, %v559
    %v561 = vrot.slane %v556, %v560
    %v563 = vmul.f32 %v540, %v561
    %v564 = vmul.f32 %v541, %v561
    %v565 = vmul.f32 %v542, %v561
    %v566 = vmul.f32 %v543, %v561
    %v567 = vmul.f32 %v544, %v561
    %v568 = vmul.f32 %v545, %v561
    %v569 = vmul.f32 %v546, %v561
    %v570 = vmul.f32 %v547, %v561
    %v571 = vmul.f32 %v548, %v561
    %v572 = vmul.f32 %v549, %v561
    %v573 = vmul.f32 %v550, %v561
    %v574 = vmul.f32 %v551, %v561
    %v575 = vmul.f32 %v552, %v561
    %v576 = vmul.f32 %v553, %v561
    %v577 = vmul.f32 %v554, %v561
    %v578 = vmul.f32 %v555, %v561
    %v579 = vld [vmem:[%s6] sm:$0x1]
    %v581 = vlaneseq
    %v582 = vshrl.u32 %v581, 7
    %v583 = vsub.s32 0, %v582
    %v584 = vrot.slane %v579, %v583
    %v586 = vadd.f32 %v563, %v584
    %v587 = vadd.f32 %v564, %v584
    %v588 = vadd.f32 %v565, %v584
    %v589 = vadd.f32 %v566, %v584
    %v590 = vadd.f32 %v567, %v584
    %v591 = vadd.f32 %v568, %v584
    %v592 = vadd.f32 %v569, %v584
    %v593 = vadd.f32 %v570, %v584
    %v594 = vadd.f32 %v571, %v584
    %v595 = vadd.f32 %v572, %v584
    %v596 = vadd.f32 %v573, %v584
    %v597 = vadd.f32 %v574, %v584
    %v598 = vadd.f32 %v575, %v584
    %v599 = vadd.f32 %v576, %v584
    %v600 = vadd.f32 %v577, %v584
    %v601 = vadd.f32 %v578, %v584
    %v602 = vpack.c.bf16 %v587, %v586
    %v603 = vpack.c.bf16 %v589, %v588
    %v604 = vpack.c.bf16 %v591, %v590
    %v605 = vpack.c.bf16 %v593, %v592
    %v606 = vpack.c.bf16 %v595, %v594
    %v607 = vpack.c.bf16 %v597, %v596
    %v608 = vpack.c.bf16 %v599, %v598
    %v609 = vpack.c.bf16 %v601, %v600
    %v618 = vunpack.c.l.b16 %v602
    %v619 = vunpack.c.h.b16 %v602
    %v620 = vunpack.c.l.b16 %v603
    %v621 = vunpack.c.h.b16 %v603
    %v622 = vunpack.c.l.b16 %v604
    %v623 = vunpack.c.h.b16 %v604
    %v624 = vunpack.c.l.b16 %v605
    %v625 = vunpack.c.h.b16 %v605
    %v626 = vunpack.c.l.b16 %v606
    %v627 = vunpack.c.h.b16 %v606
    %v628 = vunpack.c.l.b16 %v607
    %v629 = vunpack.c.h.b16 %v607
    %v630 = vunpack.c.l.b16 %v608
    %v631 = vunpack.c.h.b16 %v608
    %v632 = vunpack.c.l.b16 %v609
    %v633 = vunpack.c.h.b16 %v609
    %v634 = vpack.c.b16 %v618, %v618
    %v635 = vpack.c.b16 %v619, %v619
    %v636 = vpack.c.b16 %v620, %v620
    %v637 = vpack.c.b16 %v621, %v621
    %v638 = vpack.c.b16 %v622, %v622
    %v639 = vpack.c.b16 %v623, %v623
    %v640 = vpack.c.b16 %v624, %v624
    %v641 = vpack.c.b16 %v625, %v625
    %v642 = vpack.c.b16 %v626, %v626
    %v643 = vpack.c.b16 %v627, %v627
    %v644 = vpack.c.b16 %v628, %v628
    %v645 = vpack.c.b16 %v629, %v629
    %v646 = vpack.c.b16 %v630, %v630
    %v647 = vpack.c.b16 %v631, %v631
    %v648 = vpack.c.b16 %v632, %v632
    %v649 = vpack.c.b16 %v633, %v633
    %666 = vst [vmem:[%s7] sm:$0xf] %v634
    %667 = vst [vmem:[%s7 + $0x4] sm:$0xf] %v635
    %668 = vst [vmem:[%s7 + $0x8] sm:$0xf] %v636
    %669 = vst [vmem:[%s7 + $0xc] sm:$0xf] %v637
    %670 = vst [vmem:[%s7 + $0x10] sm:$0xf] %v638
    %671 = vst [vmem:[%s7 + $0x14] sm:$0xf] %v639
    %672 = vst [vmem:[%s7 + $0x18] sm:$0xf] %v640
    %673 = vst [vmem:[%s7 + $0x1c] sm:$0xf] %v641
    %674 = vst [vmem:[%s7 + $0x20] sm:$0xf] %v642
    %675 = vst [vmem:[%s7 + $0x24] sm:$0xf] %v643
    %676 = vst [vmem:[%s7 + $0x28] sm:$0xf] %v644
    %677 = vst [vmem:[%s7 + $0x2c] sm:$0xf] %v645
    %678 = vst [vmem:[%s7 + $0x30] sm:$0xf] %v646
    %679 = vst [vmem:[%s7 + $0x34] sm:$0xf] %v647
    %680 = vst [vmem:[%s7 + $0x38] sm:$0xf] %v648
    %681 = vst [vmem:[%s7 + $0x3c] sm:$0xf] %v649
  $region37: #{hetero_gnn_forward.8} parent=0 // pred_fallthru
    _
  // Predicated region
  $region38: #{hetero_gnn_forward.8} parent=0 // pred_check
    _
  $region39: #{hetero_gnn_forward.8} parent=0 // pred_check_branch
    %683 = sbr.rel (0) target = $region41
  $region40: #{hetero_gnn_forward.8} parent=0 // pred_region
    _
  $region41: #{hetero_gnn_forward.8} parent=0 // pred_fallthru
    _
  // Predicated region
  $region42: #{hetero_gnn_forward.8} parent=0 // pred_check
    _
  $region43: #{hetero_gnn_forward.8} parent=0 // pred_check_branch
    %685 = sbr.rel (0) target = $region45
  $region44: #{hetero_gnn_forward.8} parent=0 // pred_region
    _
  $region45: #{hetero_gnn_forward.8} parent=0 // pred_fallthru
    _

// kernel: hetero_gnn_forward.7
$region0: #{hetero_gnn_forward.7}
  #allocation0 [shape = 'u32[]', space=smem, size = 0x4, offset = 0x4, fixed_abs, tag = 'smem constant byte address 0x4 - core index']
  #allocation1 [shape = 'u32[144,128]{1,0:T(1,128)}', space=vmem, size = 0x12000, scoped, tag = 'internal scratch']
  %s0 = inlined_call_operand.vmem [shape: bf16[128,256], index: 0, kind: input, shape index: {}]
  %s1 = inlined_call_operand.vmem [shape: bf16[256,128], index: 1, kind: input, shape index: {}]
  %s2 = inlined_call_operand.vmem [shape: bf16[128,128], index: 2, kind: output, shape index: {}]
  %s3 = sld [smem:[#allocation0]]
  $region18: #{hetero_gnn_forward.7} parent=0
    _
  %s5 = ssub.s32 1, %s3
  %s6 = scalar_select 0, %s5, %s3
  // Predicated region
  $region2: #{hetero_gnn_forward.7} parent=0 // pred_check
    _
  $region3: #{hetero_gnn_forward.7} parent=0 // pred_check_branch
    %8 = sbr.rel (0) target = $region5
  $region4: #{hetero_gnn_forward.7} parent=0 // pred_region
    _
  $region5: #{hetero_gnn_forward.7} parent=0 // pred_fallthru
    _
  // Predicated region
  $region6: #{hetero_gnn_forward.7} parent=0 // pred_check
    _
  $region7: #{hetero_gnn_forward.7} parent=0 // pred_check_branch
    %10 = sbr.rel (0) target = $region9
  $region8: #{hetero_gnn_forward.7} parent=0 // pred_region
    _
  $region9: #{hetero_gnn_forward.7} parent=0 // pred_fallthru
    _
  %v12 = vld [vmem:[%s0] sm:$0xff]
  %v13 = vld [vmem:[%s0 + $0x8] sm:$0xff]
  %v14 = vld [vmem:[%s0 + $0x10] sm:$0xff]
  %v15 = vld [vmem:[%s0 + $0x18] sm:$0xff]
  %v16 = vld [vmem:[%s0 + $0x20] sm:$0xff]
  %v17 = vld [vmem:[%s0 + $0x28] sm:$0xff]
  %v18 = vld [vmem:[%s0 + $0x30] sm:$0xff]
  %v19 = vld [vmem:[%s0 + $0x38] sm:$0xff]
  %v20 = vld [vmem:[%s0 + $0x40] sm:$0xff]
  %v21 = vld [vmem:[%s0 + $0x48] sm:$0xff]
  %v22 = vld [vmem:[%s0 + $0x50] sm:$0xff]
  %v23 = vld [vmem:[%s0 + $0x58] sm:$0xff]
  %v24 = vld [vmem:[%s0 + $0x60] sm:$0xff]
  %v25 = vld [vmem:[%s0 + $0x68] sm:$0xff]
  %v26 = vld [vmem:[%s0 + $0x70] sm:$0xff]
  %v27 = vld [vmem:[%s0 + $0x78] sm:$0xff]
  %v28 = vld [vmem:[%s1] sm:$0xf]
  %v29 = vld [vmem:[%s1 + $0x4] sm:$0xf]
  %v30 = vld [vmem:[%s1 + $0x8] sm:$0xf]
  %v31 = vld [vmem:[%s1 + $0xc] sm:$0xf]
  %v32 = vld [vmem:[%s1 + $0x10] sm:$0xf]
  %v33 = vld [vmem:[%s1 + $0x14] sm:$0xf]
  %v34 = vld [vmem:[%s1 + $0x18] sm:$0xf]
  %v35 = vld [vmem:[%s1 + $0x1c] sm:$0xf]
  %v36 = vld [vmem:[%s1 + $0x20] sm:$0xf]
  %v37 = vld [vmem:[%s1 + $0x24] sm:$0xf]
  %v38 = vld [vmem:[%s1 + $0x28] sm:$0xf]
  %v39 = vld [vmem:[%s1 + $0x2c] sm:$0xf]
  %v40 = vld [vmem:[%s1 + $0x30] sm:$0xf]
  %v41 = vld [vmem:[%s1 + $0x34] sm:$0xf]
  %v42 = vld [vmem:[%s1 + $0x38] sm:$0xf]
  %v43 = vld [vmem:[%s1 + $0x3c] sm:$0xf]
  %v44 = vld [vmem:[%s1 + $0x40] sm:$0xf]
  %v45 = vld [vmem:[%s1 + $0x44] sm:$0xf]
  %v46 = vld [vmem:[%s1 + $0x48] sm:$0xf]
  %v47 = vld [vmem:[%s1 + $0x4c] sm:$0xf]
  %v48 = vld [vmem:[%s1 + $0x50] sm:$0xf]
  %v49 = vld [vmem:[%s1 + $0x54] sm:$0xf]
  %v50 = vld [vmem:[%s1 + $0x58] sm:$0xf]
  %v51 = vld [vmem:[%s1 + $0x5c] sm:$0xf]
  %v52 = vld [vmem:[%s1 + $0x60] sm:$0xf]
  %v53 = vld [vmem:[%s1 + $0x64] sm:$0xf]
  %v54 = vld [vmem:[%s1 + $0x68] sm:$0xf]
  %v55 = vld [vmem:[%s1 + $0x6c] sm:$0xf]
  %v56 = vld [vmem:[%s1 + $0x70] sm:$0xf]
  %v57 = vld [vmem:[%s1 + $0x74] sm:$0xf]
  %v58 = vld [vmem:[%s1 + $0x78] sm:$0xf]
  %v59 = vld [vmem:[%s1 + $0x7c] sm:$0xf]
  %v76 = vunpack.c.l.b16 %v12
  %v77 = vunpack.c.h.b16 %v12
  %v78 = vunpack.c.l.b16 %v13
  %v79 = vunpack.c.h.b16 %v13
  %v80 = vunpack.c.l.b16 %v14
  %v81 = vunpack.c.h.b16 %v14
  %v82 = vunpack.c.l.b16 %v15
  %v83 = vunpack.c.h.b16 %v15
  %v84 = vunpack.c.l.b16 %v16
  %v85 = vunpack.c.h.b16 %v16
  %v86 = vunpack.c.l.b16 %v17
  %v87 = vunpack.c.h.b16 %v17
  %v88 = vunpack.c.l.b16 %v18
  %v89 = vunpack.c.h.b16 %v18
  %v90 = vunpack.c.l.b16 %v19
  %v91 = vunpack.c.h.b16 %v19
  %v92 = vunpack.c.l.b16 %v20
  %v93 = vunpack.c.h.b16 %v20
  %v94 = vunpack.c.l.b16 %v21
  %v95 = vunpack.c.h.b16 %v21
  %v96 = vunpack.c.l.b16 %v22
  %v97 = vunpack.c.h.b16 %v22
  %v98 = vunpack.c.l.b16 %v23
  %v99 = vunpack.c.h.b16 %v23
  %v100 = vunpack.c.l.b16 %v24
  %v101 = vunpack.c.h.b16 %v24
  %v102 = vunpack.c.l.b16 %v25
  %v103 = vunpack.c.h.b16 %v25
  %v104 = vunpack.c.l.b16 %v26
  %v105 = vunpack.c.h.b16 %v26
  %v106 = vunpack.c.l.b16 %v27
  %v107 = vunpack.c.h.b16 %v27
  %v108 = vpack.c.b16 %v78, %v76
  %v109 = vpack.c.b16 %v79, %v77
  %v110 = vpack.c.b16 %v82, %v80
  %v111 = vpack.c.b16 %v83, %v81
  %v112 = vpack.c.b16 %v86, %v84
  %v113 = vpack.c.b16 %v87, %v85
  %v114 = vpack.c.b16 %v90, %v88
  %v115 = vpack.c.b16 %v91, %v89
  %v116 = vpack.c.b16 %v94, %v92
  %v117 = vpack.c.b16 %v95, %v93
  %v118 = vpack.c.b16 %v98, %v96
  %v119 = vpack.c.b16 %v99, %v97
  %v120 = vpack.c.b16 %v102, %v100
  %v121 = vpack.c.b16 %v103, %v101
  %v122 = vpack.c.b16 %v106, %v104
  %v123 = vpack.c.b16 %v107, %v105
  %v172 = vunpack.c.l.b16 %v28
  %v173 = vunpack.c.l.b16 %v29
  %v174 = vunpack.c.l.b16 %v30
  %v175 = vunpack.c.l.b16 %v31
  %v176 = vunpack.c.l.b16 %v32
  %v177 = vunpack.c.l.b16 %v33
  %v178 = vunpack.c.l.b16 %v34
  %v179 = vunpack.c.l.b16 %v35
  %v180 = vunpack.c.l.b16 %v36
  %v181 = vunpack.c.l.b16 %v37
  %v182 = vunpack.c.l.b16 %v38
  %v183 = vunpack.c.l.b16 %v39
  %v184 = vunpack.c.l.b16 %v40
  %v185 = vunpack.c.l.b16 %v41
  %v186 = vunpack.c.l.b16 %v42
  %v187 = vunpack.c.l.b16 %v43
  %v188 = vunpack.c.l.b16 %v44
  %v189 = vunpack.c.l.b16 %v45
  %v190 = vunpack.c.l.b16 %v46
  %v191 = vunpack.c.l.b16 %v47
  %v192 = vunpack.c.l.b16 %v48
  %v193 = vunpack.c.l.b16 %v49
  %v194 = vunpack.c.l.b16 %v50
  %v195 = vunpack.c.l.b16 %v51
  %v196 = vunpack.c.l.b16 %v52
  %v197 = vunpack.c.l.b16 %v53
  %v198 = vunpack.c.l.b16 %v54
  %v199 = vunpack.c.l.b16 %v55
  %v200 = vunpack.c.l.b16 %v56
  %v201 = vunpack.c.l.b16 %v57
  %v202 = vunpack.c.l.b16 %v58
  %v203 = vunpack.c.l.b16 %v59
  %v204 = vpack.c.b16 %v173, %v172
  %v205 = vpack.c.b16 %v175, %v174
  %v206 = vpack.c.b16 %v177, %v176
  %v207 = vpack.c.b16 %v179, %v178
  %v208 = vpack.c.b16 %v181, %v180
  %v209 = vpack.c.b16 %v183, %v182
  %v210 = vpack.c.b16 %v185, %v184
  %v211 = vpack.c.b16 %v187, %v186
  %v212 = vpack.c.b16 %v189, %v188
  %v213 = vpack.c.b16 %v191, %v190
  %v214 = vpack.c.b16 %v193, %v192
  %v215 = vpack.c.b16 %v195, %v194
  %v216 = vpack.c.b16 %v197, %v196
  %v217 = vpack.c.b16 %v199, %v198
  %v218 = vpack.c.b16 %v201, %v200
  %v219 = vpack.c.b16 %v203, %v202
  %236 = vmatprep.subr.bf16.mxu0 0
  %237 = vmatpush1.bf16.msra.mxu0 %v204
  %238 = vmatprep.subr.bf16.mxu0 0
  %239 = vmatpush1.bf16.msra.mxu0 %v205
  %240 = vmatprep.subr.bf16.mxu0 0
  %241 = vmatpush1.bf16.msra.mxu0 %v206
  %242 = vmatprep.subr.bf16.mxu0 0
  %243 = vmatpush1.bf16.msra.mxu0 %v207
  %244 = vmatprep.subr.bf16.mxu0 0
  %245 = vmatpush1.bf16.msra.mxu0 %v208
  %246 = vmatprep.subr.bf16.mxu0 0
  %247 = vmatpush1.bf16.msra.mxu0 %v209
  %248 = vmatprep.subr.bf16.mxu0 0
  %249 = vmatpush1.bf16.msra.mxu0 %v210
  %250 = vmatprep.subr.bf16.mxu0 0
  %251 = vmatpush1.bf16.msra.mxu0 %v211
  %252 = vmatprep.subr.bf16.mxu0 0
  %253 = vmatpush1.bf16.msra.mxu0 %v212
  %254 = vmatprep.subr.bf16.mxu0 0
  %255 = vmatpush1.bf16.msra.mxu0 %v213
  %256 = vmatprep.subr.bf16.mxu0 0
  %257 = vmatpush1.bf16.msra.mxu0 %v214
  %258 = vmatprep.subr.bf16.mxu0 0
  %259 = vmatpush1.bf16.msra.mxu0 %v215
  %260 = vmatprep.subr.bf16.mxu0 0
  %261 = vmatpush1.bf16.msra.mxu0 %v216
  %262 = vmatprep.subr.bf16.mxu0 0
  %263 = vmatpush1.bf16.msra.mxu0 %v217
  %264 = vmatprep.subr.bf16.mxu0 0
  %265 = vmatpush1.bf16.msra.mxu0 %v218
  %266 = vmatprep.subr.bf16.mxu0 0
  %267 = vmatpush1.bf16.msra.mxu0 %v219
  %268 = vmatprep.mubr.bf16.mxu0 %v109
  %269 = vmatmul.mubr.bf16.gmra.mrb[0].mxu0 %v108
  %v270 = vpop.f32.mrb[0].mxu0
  %v271 = vadd.f32 0.0, %v270
  %v272 = vpop.f32.mrb[0].mxu0
  %v273 = vpop.f32.mrb[0].mxu0
  %v274 = vadd.f32 0.0, %v273
  %v275 = vpop.f32.mrb[0].mxu0
  %276 = vmatprep.mubr.bf16.mxu0 %v111
  %277 = vmatmul.mubr.bf16.gmra.mrb[0].mxu0 %v110
  %v278 = vpop.f32.mrb[0].mxu0
  %v279 = vadd.f32 0.0, %v278
  %v280 = vpop.f32.mrb[0].mxu0
  %v281 = vpop.f32.mrb[0].mxu0
  %v282 = vadd.f32 0.0, %v281
  %v283 = vpop.f32.mrb[0].mxu0
  %284 = vmatprep.mubr.bf16.mxu0 %v113
  %285 = vmatmul.mubr.bf16.gmra.mrb[0].mxu0 %v112
  %v286 = vpop.f32.mrb[0].mxu0
  %v287 = vadd.f32 0.0, %v286
  %v288 = vpop.f32.mrb[0].mxu0
  %v289 = vpop.f32.mrb[0].mxu0
  %v290 = vadd.f32 0.0, %v289
  %v291 = vpop.f32.mrb[0].mxu0
  %292 = vmatprep.mubr.bf16.mxu0 %v115
  %293 = vmatmul.mubr.bf16.gmra.mrb[0].mxu0 %v114
  %v294 = vpop.f32.mrb[0].mxu0
  %v295 = vadd.f32 0.0, %v294
  %v296 = vpop.f32.mrb[0].mxu0
  %v297 = vpop.f32.mrb[0].mxu0
  %v298 = vadd.f32 0.0, %v297
  %v299 = vpop.f32.mrb[0].mxu0
  %300 = vmatprep.mubr.bf16.mxu0 %v117
  %301 = vmatmul.mubr.bf16.gmra.mrb[0].mxu0 %v116
  %v302 = vpop.f32.mrb[0].mxu0
  %v303 = vadd.f32 0.0, %v302
  %v304 = vpop.f32.mrb[0].mxu0
  %v305 = vpop.f32.mrb[0].mxu0
  %v306 = vadd.f32 0.0, %v305
  %v307 = vpop.f32.mrb[0].mxu0
  %308 = vmatprep.mubr.bf16.mxu0 %v119
  %309 = vmatmul.mubr.bf16.gmra.mrb[0].mxu0 %v118
  %v310 = vpop.f32.mrb[0].mxu0
  %v311 = vadd.f32 0.0, %v310
  %v312 = vpop.f32.mrb[0].mxu0
  %v313 = vpop.f32.mrb[0].mxu0
  %v314 = vadd.f32 0.0, %v313
  %v315 = vpop.f32.mrb[0].mxu0
  %316 = vmatprep.mubr.bf16.mxu0 %v121
  %317 = vmatmul.mubr.bf16.gmra.mrb[0].mxu0 %v120
  %v318 = vpop.f32.mrb[0].mxu0
  %v319 = vadd.f32 0.0, %v318
  %v320 = vpop.f32.mrb[0].mxu0
  %v321 = vpop.f32.mrb[0].mxu0
  %v322 = vadd.f32 0.0, %v321
  %v323 = vpop.f32.mrb[0].mxu0
  %324 = vmatprep.mubr.bf16.mxu0 %v123
  %325 = vmatmul.mubr.bf16.gmra.mrb[0].mxu0 %v122
  %v326 = vpop.f32.mrb[0].mxu0
  %v327 = vadd.f32 0.0, %v326
  %v328 = vpop.f32.mrb[0].mxu0
  %v329 = vpop.f32.mrb[0].mxu0
  %v330 = vadd.f32 0.0, %v329
  %v331 = vpop.f32.mrb[0].mxu0
  %332 = vdwg.mxu0
  %v333 = vpack.c.bf16 %v274, %v271
  %v334 = vpack.c.bf16 %v282, %v279
  %v335 = vpack.c.bf16 %v290, %v287
  %v336 = vpack.c.bf16 %v298, %v295
  %v337 = vpack.c.bf16 %v306, %v303
  %v338 = vpack.c.bf16 %v314, %v311
  %v339 = vpack.c.bf16 %v322, %v319
  %v340 = vpack.c.bf16 %v330, %v327
  %v349 = vunpack.c.l.b16 %v333
  %v350 = vunpack.c.h.b16 %v333
  %v351 = vunpack.c.l.b16 %v334
  %v352 = vunpack.c.h.b16 %v334
  %v353 = vunpack.c.l.b16 %v335
  %v354 = vunpack.c.h.b16 %v335
  %v355 = vunpack.c.l.b16 %v336
  %v356 = vunpack.c.h.b16 %v336
  %v357 = vunpack.c.l.b16 %v337
  %v358 = vunpack.c.h.b16 %v337
  %v359 = vunpack.c.l.b16 %v338
  %v360 = vunpack.c.h.b16 %v338
  %v361 = vunpack.c.l.b16 %v339
  %v362 = vunpack.c.h.b16 %v339
  %v363 = vunpack.c.l.b16 %v340
  %v364 = vunpack.c.h.b16 %v340
  %v365 = vpack.c.b16 %v349, %v349
  %v366 = vpack.c.b16 %v350, %v350
  %v367 = vpack.c.b16 %v351, %v351
  %v368 = vpack.c.b16 %v352, %v352
  %v369 = vpack.c.b16 %v353, %v353
  %v370 = vpack.c.b16 %v354, %v354
  %v371 = vpack.c.b16 %v355, %v355
  %v372 = vpack.c.b16 %v356, %v356
  %v373 = vpack.c.b16 %v357, %v357
  %v374 = vpack.c.b16 %v358, %v358
  %v375 = vpack.c.b16 %v359, %v359
  %v376 = vpack.c.b16 %v360, %v360
  %v377 = vpack.c.b16 %v361, %v361
  %v378 = vpack.c.b16 %v362, %v362
  %v379 = vpack.c.b16 %v363, %v363
  %v380 = vpack.c.b16 %v364, %v364
  %397 = vst [vmem:[%s2] sm:$0xf] %v365
  %398 = vst [vmem:[%s2 + $0x4] sm:$0xf] %v366
  %399 = vst [vmem:[%s2 + $0x8] sm:$0xf] %v367
  %400 = vst [vmem:[%s2 + $0xc] sm:$0xf] %v368
  %401 = vst [vmem:[%s2 + $0x10] sm:$0xf] %v369
  %402 = vst [vmem:[%s2 + $0x14] sm:$0xf] %v370
  %403 = vst [vmem:[%s2 + $0x18] sm:$0xf] %v371
  %404 = vst [vmem:[%s2 + $0x1c] sm:$0xf] %v372
  %405 = vst [vmem:[%s2 + $0x20] sm:$0xf] %v373
  %406 = vst [vmem:[%s2 + $0x24] sm:$0xf] %v374
  %407 = vst [vmem:[%s2 + $0x28] sm:$0xf] %v375
  %408 = vst [vmem:[%s2 + $0x2c] sm:$0xf] %v376
  %409 = vst [vmem:[%s2 + $0x30] sm:$0xf] %v377
  %410 = vst [vmem:[%s2 + $0x34] sm:$0xf] %v378
  %411 = vst [vmem:[%s2 + $0x38] sm:$0xf] %v379
  %412 = vst [vmem:[%s2 + $0x3c] sm:$0xf] %v380
  // Predicated region
  $region10: #{hetero_gnn_forward.7} parent=0 // pred_check
    _
  $region11: #{hetero_gnn_forward.7} parent=0 // pred_check_branch
    %414 = sbr.rel (0) target = $region13
  $region12: #{hetero_gnn_forward.7} parent=0 // pred_region
    _
  $region13: #{hetero_gnn_forward.7} parent=0 // pred_fallthru
    _
  // Predicated region
  $region14: #{hetero_gnn_forward.7} parent=0 // pred_check
    _
  $region15: #{hetero_gnn_forward.7} parent=0 // pred_check_branch
    %416 = sbr.rel (0) target = $region17
  $region16: #{hetero_gnn_forward.7} parent=0 // pred_region
    _
  $region17: #{hetero_gnn_forward.7} parent=0 // pred_fallthru
    _

// kernel: hetero_gnn_forward.6
$region0: #{hetero_gnn_forward.6}
  #allocation0 [shape = 'u32[]', space=smem, size = 0x4, offset = 0x4, fixed_abs, tag = 'smem constant byte address 0x4 - core index']
  #allocation1 [shape = 'u32[144,128]{1,0:T(1,128)}', space=vmem, size = 0x12000, scoped, tag = 'internal scratch']
  #allocation2 [shape = 'f32[128,32]{1,0:T(8,128)}', space=vmem, size = 0x10000, scoped, tag = 'scratch operand']
  %s0 = inlined_call_operand.vmem [shape: bf16[128,128], index: 0, kind: input, shape index: {}]
  %s1 = inlined_call_operand.vmem [shape: bf16[128,32], index: 1, kind: input, shape index: {}]
  %s2 = inlined_call_operand.vmem [shape: bf16[128,256], index: 2, kind: input, shape index: {}]
  %s3 = inlined_call_operand.vmem [shape: bf16[32,128], index: 3, kind: input, shape index: {}]
  %s4 = inlined_call_operand.vmem [shape: bf16[256,128], index: 4, kind: input, shape index: {}]
  %s5 = inlined_call_operand.vmem [shape: f32[1,128], index: 5, kind: input, shape index: {}]
  %s6 = inlined_call_operand.vmem [shape: f32[1,128], index: 6, kind: input, shape index: {}]
  %s7 = inlined_call_operand.vmem [shape: f32[1,128], index: 7, kind: input, shape index: {}]
  %s8 = inlined_call_operand.vmem [shape: bf16[128,128], index: 8, kind: output, shape index: {}]
  %s9 = sld [smem:[#allocation0]]
  $region50: #{hetero_gnn_forward.6} parent=0
    _
  %s11 = ssub.s32 1, %s9
  %s12 = scalar_select 0, %s11, %s9
  // Predicated region
  $region2: #{hetero_gnn_forward.6} parent=0 // pred_check
    _
  $region3: #{hetero_gnn_forward.6} parent=0 // pred_check_branch
    %14 = sbr.rel (0) target = $region5
  $region4: #{hetero_gnn_forward.6} parent=0 // pred_region
    _
  $region5: #{hetero_gnn_forward.6} parent=0 // pred_fallthru
    _
  // Predicated region
  $region6: #{hetero_gnn_forward.6} parent=0 // pred_check
    _
  $region7: #{hetero_gnn_forward.6} parent=0 // pred_check_branch
    %16 = sbr.rel (0) target = $region9
  $region8: #{hetero_gnn_forward.6} parent=0 // pred_region
    _
  $region9: #{hetero_gnn_forward.6} parent=0 // pred_fallthru
    _
  // Predicated region
  $region10: #{hetero_gnn_forward.6} parent=0 // pred_check
    _
  $region11: #{hetero_gnn_forward.6} parent=0 // pred_check_branch
    %18 = sbr.rel (0) target = $region13
  $region12: #{hetero_gnn_forward.6} parent=0 // pred_region
    _
  $region13: #{hetero_gnn_forward.6} parent=0 // pred_fallthru
    _
  // Predicated region
  $region14: #{hetero_gnn_forward.6} parent=0 // pred_check
    _
  $region15: #{hetero_gnn_forward.6} parent=0 // pred_check_branch
    %20 = sbr.rel (0) target = $region17
  $region16: #{hetero_gnn_forward.6} parent=0 // pred_region
    _
  $region17: #{hetero_gnn_forward.6} parent=0 // pred_fallthru
    _
  // Predicated region
  $region18: #{hetero_gnn_forward.6} parent=0 // pred_check
    _
  $region19: #{hetero_gnn_forward.6} parent=0 // pred_check_branch
    %22 = sbr.rel (0) target = $region21
  $region20: #{hetero_gnn_forward.6} parent=0 // pred_region
    _
  $region21: #{hetero_gnn_forward.6} parent=0 // pred_fallthru
    _
  // Predicated region
  $region22: #{hetero_gnn_forward.6} parent=0 // pred_check
    _
  $region23: #{hetero_gnn_forward.6} parent=0 // pred_check_branch
    %24 = sbr.rel (0) target = $region25
  $region24: #{hetero_gnn_forward.6} parent=0 // pred_region
    _
  $region25: #{hetero_gnn_forward.6} parent=0 // pred_fallthru
    _
  // Predicated region
  $region26: #{hetero_gnn_forward.6} parent=0 // pred_check
    _
  $region27: #{hetero_gnn_forward.6} parent=0 // pred_check_branch
    %26 = sbr.rel (0) target = $region29
  $region28: #{hetero_gnn_forward.6} parent=0 // pred_region
    _
  $region29: #{hetero_gnn_forward.6} parent=0 // pred_fallthru
    _
  // Predicated region
  $region30: #{hetero_gnn_forward.6} parent=0 // pred_check
    _
  $region31: #{hetero_gnn_forward.6} parent=0 // pred_check_branch
    %28 = sbr.rel (0) target = $region33
  $region32: #{hetero_gnn_forward.6} parent=0 // pred_region
    _
  $region33: #{hetero_gnn_forward.6} parent=0 // pred_fallthru
    _
  %p30 = scmp.eq.s32.totalorder 0, 0
  // Predicated region
  $region34: #{hetero_gnn_forward.6} parent=0 // pred_check
    %p31 = pneg %p30
  $region35: #{hetero_gnn_forward.6} parent=0 // pred_check_branch
    %33 = sbr.rel (%p31) target = $region37
  $region36: #{hetero_gnn_forward.6} parent=0 // pred_region
    %vm34 = vcmask 261120
    %35 = vst.msk [vmem:[#allocation2] sm:$0xff] %vm34, 0.0
    %36 = vst.msk [vmem:[#allocation2 + $0x8] sm:$0xff] %vm34, 0.0
    %37 = vst.msk [vmem:[#allocation2 + $0x10] sm:$0xff] %vm34, 0.0
    %38 = vst.msk [vmem:[#allocation2 + $0x18] sm:$0xff] %vm34, 0.0
    %39 = vst.msk [vmem:[#allocation2 + $0x20] sm:$0xff] %vm34, 0.0
    %40 = vst.msk [vmem:[#allocation2 + $0x28] sm:$0xff] %vm34, 0.0
    %41 = vst.msk [vmem:[#allocation2 + $0x30] sm:$0xff] %vm34, 0.0
    %42 = vst.msk [vmem:[#allocation2 + $0x38] sm:$0xff] %vm34, 0.0
    %43 = vst.msk [vmem:[#allocation2 + $0x40] sm:$0xff] %vm34, 0.0
    %44 = vst.msk [vmem:[#allocation2 + $0x48] sm:$0xff] %vm34, 0.0
    %45 = vst.msk [vmem:[#allocation2 + $0x50] sm:$0xff] %vm34, 0.0
    %46 = vst.msk [vmem:[#allocation2 + $0x58] sm:$0xff] %vm34, 0.0
    %47 = vst.msk [vmem:[#allocation2 + $0x60] sm:$0xff] %vm34, 0.0
    %48 = vst.msk [vmem:[#allocation2 + $0x68] sm:$0xff] %vm34, 0.0
    %49 = vst.msk [vmem:[#allocation2 + $0x70] sm:$0xff] %vm34, 0.0
    %50 = vst.msk [vmem:[#allocation2 + $0x78] sm:$0xff] %vm34, 0.0
  $region37: #{hetero_gnn_forward.6} parent=0 // pred_fallthru
    _
  %v51 = vld [vmem:[#allocation2] sm:$0xff]
  %v52 = vld [vmem:[#allocation2 + $0x8] sm:$0xff]
  %v53 = vld [vmem:[#allocation2 + $0x10] sm:$0xff]
  %v54 = vld [vmem:[#allocation2 + $0x18] sm:$0xff]
  %v55 = vld [vmem:[#allocation2 + $0x20] sm:$0xff]
  %v56 = vld [vmem:[#allocation2 + $0x28] sm:$0xff]
  %v57 = vld [vmem:[#allocation2 + $0x30] sm:$0xff]
  %v58 = vld [vmem:[#allocation2 + $0x38] sm:$0xff]
  %v59 = vld [vmem:[#allocation2 + $0x40] sm:$0xff]
  %v60 = vld [vmem:[#allocation2 + $0x48] sm:$0xff]
  %v61 = vld [vmem:[#allocation2 + $0x50] sm:$0xff]
  %v62 = vld [vmem:[#allocation2 + $0x58] sm:$0xff]
  %v63 = vld [vmem:[#allocation2 + $0x60] sm:$0xff]
  %v64 = vld [vmem:[#allocation2 + $0x68] sm:$0xff]
  %v65 = vld [vmem:[#allocation2 + $0x70] sm:$0xff]
  %v66 = vld [vmem:[#allocation2 + $0x78] sm:$0xff]
  %v67 = vld [vmem:[%s0] sm:$0xf]
  %v68 = vld [vmem:[%s0 + $0x4] sm:$0xf]
  %v69 = vld [vmem:[%s0 + $0x8] sm:$0xf]
  %v70 = vld [vmem:[%s0 + $0xc] sm:$0xf]
  %v71 = vld [vmem:[%s0 + $0x10] sm:$0xf]
  %v72 = vld [vmem:[%s0 + $0x14] sm:$0xf]
  %v73 = vld [vmem:[%s0 + $0x18] sm:$0xf]
  %v74 = vld [vmem:[%s0 + $0x1c] sm:$0xf]
  %v75 = vld [vmem:[%s0 + $0x20] sm:$0xf]
  %v76 = vld [vmem:[%s0 + $0x24] sm:$0xf]
  %v77 = vld [vmem:[%s0 + $0x28] sm:$0xf]
  %v78 = vld [vmem:[%s0 + $0x2c] sm:$0xf]
  %v79 = vld [vmem:[%s0 + $0x30] sm:$0xf]
  %v80 = vld [vmem:[%s0 + $0x34] sm:$0xf]
  %v81 = vld [vmem:[%s0 + $0x38] sm:$0xf]
  %v82 = vld [vmem:[%s0 + $0x3c] sm:$0xf]
  %v83 = vld [vmem:[%s1] sm:$0xf]
  %v84 = vld [vmem:[%s1 + $0x4] sm:$0xf]
  %v85 = vld [vmem:[%s1 + $0x8] sm:$0xf]
  %v86 = vld [vmem:[%s1 + $0xc] sm:$0xf]
  %v87 = vld [vmem:[%s1 + $0x10] sm:$0xf]
  %v88 = vld [vmem:[%s1 + $0x14] sm:$0xf]
  %v89 = vld [vmem:[%s1 + $0x18] sm:$0xf]
  %v90 = vld [vmem:[%s1 + $0x1c] sm:$0xf]
  %v91 = vld [vmem:[%s1 + $0x20] sm:$0xf]
  %v92 = vld [vmem:[%s1 + $0x24] sm:$0xf]
  %v93 = vld [vmem:[%s1 + $0x28] sm:$0xf]
  %v94 = vld [vmem:[%s1 + $0x2c] sm:$0xf]
  %v95 = vld [vmem:[%s1 + $0x30] sm:$0xf]
  %v96 = vld [vmem:[%s1 + $0x34] sm:$0xf]
  %v97 = vld [vmem:[%s1 + $0x38] sm:$0xf]
  %v98 = vld [vmem:[%s1 + $0x3c] sm:$0xf]
  %v115 = vunpack.c.l.b16 %v67
  %v116 = vunpack.c.l.b16 %v68
  %v117 = vunpack.c.l.b16 %v69
  %v118 = vunpack.c.l.b16 %v70
  %v119 = vunpack.c.l.b16 %v71
  %v120 = vunpack.c.l.b16 %v72
  %v121 = vunpack.c.l.b16 %v73
  %v122 = vunpack.c.l.b16 %v74
  %v123 = vunpack.c.l.b16 %v75
  %v124 = vunpack.c.l.b16 %v76
  %v125 = vunpack.c.l.b16 %v77
  %v126 = vunpack.c.l.b16 %v78
  %v127 = vunpack.c.l.b16 %v79
  %v128 = vunpack.c.l.b16 %v80
  %v129 = vunpack.c.l.b16 %v81
  %v130 = vunpack.c.l.b16 %v82
  %v131 = vpack.c.b16 %v116, %v115
  %v132 = vpack.c.b16 %v118, %v117
  %v133 = vpack.c.b16 %v120, %v119
  %v134 = vpack.c.b16 %v122, %v121
  %v135 = vpack.c.b16 %v124, %v123
  %v136 = vpack.c.b16 %v126, %v125
  %v137 = vpack.c.b16 %v128, %v127
  %v138 = vpack.c.b16 %v130, %v129
  %v163 = vunpack.c.l.b16 %v83
  %v164 = vunpack.c.l.b16 %v84
  %v165 = vunpack.c.l.b16 %v85
  %v166 = vunpack.c.l.b16 %v86
  %v167 = vunpack.c.l.b16 %v87
  %v168 = vunpack.c.l.b16 %v88
  %v169 = vunpack.c.l.b16 %v89
  %v170 = vunpack.c.l.b16 %v90
  %v171 = vunpack.c.l.b16 %v91
  %v172 = vunpack.c.l.b16 %v92
  %v173 = vunpack.c.l.b16 %v93
  %v174 = vunpack.c.l.b16 %v94
  %v175 = vunpack.c.l.b16 %v95
  %v176 = vunpack.c.l.b16 %v96
  %v177 = vunpack.c.l.b16 %v97
  %v178 = vunpack.c.l.b16 %v98
  %v179 = vpack.c.b16 %v164, %v163
  %v180 = vpack.c.b16 %v166, %v165
  %v181 = vpack.c.b16 %v168, %v167
  %v182 = vpack.c.b16 %v170, %v169
  %v183 = vpack.c.b16 %v172, %v171
  %v184 = vpack.c.b16 %v174, %v173
  %v185 = vpack.c.b16 %v176, %v175
  %v186 = vpack.c.b16 %v178, %v177
  %195 = vmatprep.subr.bf16.mxu0 0
  %196 = vmatpush1.bf16.msra.mxu0 %v179
  %197 = vmatprep.subr.bf16.mxu0 0
  %198 = vmatpush1.bf16.msra.mxu0 %v180
  %199 = vmatprep.subr.bf16.mxu0 0
  %200 = vmatpush1.bf16.msra.mxu0 %v181
  %201 = vmatprep.subr.bf16.mxu0 0
  %202 = vmatpush1.bf16.msra.mxu0 %v182
  %203 = vmatprep.subr.bf16.mxu0 0
  %204 = vmatpush1.bf16.msra.mxu0 %v183
  %205 = vmatprep.subr.bf16.mxu0 0
  %206 = vmatpush1.bf16.msra.mxu0 %v184
  %207 = vmatprep.subr.bf16.mxu0 0
  %208 = vmatpush1.bf16.msra.mxu0 %v185
  %209 = vmatprep.subr.bf16.mxu0 0
  %210 = vmatpush1.bf16.msra.mxu0 %v186
  %211 = vmatprep.subr.bf16.mxu0 0
  %212 = vmatpush1.bf16.msra.mxu0 0
  %213 = vmatprep.subr.bf16.mxu0 0
  %214 = vmatpush1.bf16.msra.mxu0 0
  %215 = vmatprep.subr.bf16.mxu0 0
  %216 = vmatpush1.bf16.msra.mxu0 0
  %217 = vmatprep.subr.bf16.mxu0 0
  %218 = vmatpush1.bf16.msra.mxu0 0
  %219 = vmatprep.subr.bf16.mxu0 0
  %220 = vmatpush1.bf16.msra.mxu0 0
  %221 = vmatprep.subr.bf16.mxu0 0
  %222 = vmatpush1.bf16.msra.mxu0 0
  %223 = vmatprep.subr.bf16.mxu0 0
  %224 = vmatpush1.bf16.msra.mxu0 0
  %225 = vmatprep.subr.bf16.mxu0 0
  %226 = vmatpush1.bf16.msra.mxu0 0
  %227 = vmatprep.mubr.bf16.mxu0 0
  %228 = vmatmul.mubr.bf16.gmra.mrb[0].mxu0 %v131
  %v229 = vpop.f32.mrb[0].mxu0
  %v230 = vadd.f32 0.0, %v229
  %v231 = vpop.f32.mrb[0].mxu0
  %v232 = vpop.f32.mrb[0].mxu0
  %v233 = vadd.f32 0.0, %v232
  %v234 = vpop.f32.mrb[0].mxu0
  %235 = vmatprep.mubr.bf16.mxu0 0
  %236 = vmatmul.mubr.bf16.gmra.mrb[0].mxu0 %v132
  %v237 = vpop.f32.mrb[0].mxu0
  %v238 = vadd.f32 0.0, %v237
  %v239 = vpop.f32.mrb[0].mxu0
  %v240 = vpop.f32.mrb[0].mxu0
  %v241 = vadd.f32 0.0, %v240
  %v242 = vpop.f32.mrb[0].mxu0
  %243 = vmatprep.mubr.bf16.mxu0 0
  %244 = vmatmul.mubr.bf16.gmra.mrb[0].mxu0 %v133
  %v245 = vpop.f32.mrb[0].mxu0
  %v246 = vadd.f32 0.0, %v245
  %v247 = vpop.f32.mrb[0].mxu0
  %v248 = vpop.f32.mrb[0].mxu0
  %v249 = vadd.f32 0.0, %v248
  %v250 = vpop.f32.mrb[0].mxu0
  %251 = vmatprep.mubr.bf16.mxu0 0
  %252 = vmatmul.mubr.bf16.gmra.mrb[0].mxu0 %v134
  %v253 = vpop.f32.mrb[0].mxu0
  %v254 = vadd.f32 0.0, %v253
  %v255 = vpop.f32.mrb[0].mxu0
  %v256 = vpop.f32.mrb[0].mxu0
  %v257 = vadd.f32 0.0, %v256
  %v258 = vpop.f32.mrb[0].mxu0
  %259 = vmatprep.mubr.bf16.mxu0 0
  %260 = vmatmul.mubr.bf16.gmra.mrb[0].mxu0 %v135
  %v261 = vpop.f32.mrb[0].mxu0
  %v262 = vadd.f32 0.0, %v261
  %v263 = vpop.f32.mrb[0].mxu0
  %v264 = vpop.f32.mrb[0].mxu0
  %v265 = vadd.f32 0.0, %v264
  %v266 = vpop.f32.mrb[0].mxu0
  %267 = vmatprep.mubr.bf16.mxu0 0
  %268 = vmatmul.mubr.bf16.gmra.mrb[0].mxu0 %v136
  %v269 = vpop.f32.mrb[0].mxu0
  %v270 = vadd.f32 0.0, %v269
  %v271 = vpop.f32.mrb[0].mxu0
  %v272 = vpop.f32.mrb[0].mxu0
  %v273 = vadd.f32 0.0, %v272
  %v274 = vpop.f32.mrb[0].mxu0
  %275 = vmatprep.mubr.bf16.mxu0 0
  %276 = vmatmul.mubr.bf16.gmra.mrb[0].mxu0 %v137
  %v277 = vpop.f32.mrb[0].mxu0
  %v278 = vadd.f32 0.0, %v277
  %v279 = vpop.f32.mrb[0].mxu0
  %v280 = vpop.f32.mrb[0].mxu0
  %v281 = vadd.f32 0.0, %v280
  %v282 = vpop.f32.mrb[0].mxu0
  %283 = vmatprep.mubr.bf16.mxu0 0
  %284 = vmatmul.mubr.bf16.gmra.mrb[0].mxu0 %v138
  %v285 = vpop.f32.mrb[0].mxu0
  %v286 = vadd.f32 0.0, %v285
  %v287 = vpop.f32.mrb[0].mxu0
  %v288 = vpop.f32.mrb[0].mxu0
  %v289 = vadd.f32 0.0, %v288
  %v290 = vpop.f32.mrb[0].mxu0
  %291 = vdwg.mxu0
  %v292 = vadd.f32 %v51, %v230
  %v293 = vadd.f32 %v52, %v233
  %v294 = vadd.f32 %v53, %v238
  %v295 = vadd.f32 %v54, %v241
  %v296 = vadd.f32 %v55, %v246
  %v297 = vadd.f32 %v56, %v249
  %v298 = vadd.f32 %v57, %v254
  %v299 = vadd.f32 %v58, %v257
  %v300 = vadd.f32 %v59, %v262
  %v301 = vadd.f32 %v60, %v265
  %v302 = vadd.f32 %v61, %v270
  %v303 = vadd.f32 %v62, %v273
  %v304 = vadd.f32 %v63, %v278
  %v305 = vadd.f32 %v64, %v281
  %v306 = vadd.f32 %v65, %v286
  %v307 = vadd.f32 %v66, %v289
  %vm308 = vcmask 261120
  %309 = vst.msk [vmem:[#allocation2] sm:$0xff] %vm308, %v292
  %310 = vst.msk [vmem:[#allocation2 + $0x8] sm:$0xff] %vm308, %v293
  %311 = vst.msk [vmem:[#allocation2 + $0x10] sm:$0xff] %vm308, %v294
  %312 = vst.msk [vmem:[#allocation2 + $0x18] sm:$0xff] %vm308, %v295
  %313 = vst.msk [vmem:[#allocation2 + $0x20] sm:$0xff] %vm308, %v296
  %314 = vst.msk [vmem:[#allocation2 + $0x28] sm:$0xff] %vm308, %v297
  %315 = vst.msk [vmem:[#allocation2 + $0x30] sm:$0xff] %vm308, %v298
  %316 = vst.msk [vmem:[#allocation2 + $0x38] sm:$0xff] %vm308, %v299
  %317 = vst.msk [vmem:[#allocation2 + $0x40] sm:$0xff] %vm308, %v300
  %318 = vst.msk [vmem:[#allocation2 + $0x48] sm:$0xff] %vm308, %v301
  %319 = vst.msk [vmem:[#allocation2 + $0x50] sm:$0xff] %vm308, %v302
  %320 = vst.msk [vmem:[#allocation2 + $0x58] sm:$0xff] %vm308, %v303
  %321 = vst.msk [vmem:[#allocation2 + $0x60] sm:$0xff] %vm308, %v304
  %322 = vst.msk [vmem:[#allocation2 + $0x68] sm:$0xff] %vm308, %v305
  %323 = vst.msk [vmem:[#allocation2 + $0x70] sm:$0xff] %vm308, %v306
  %324 = vst.msk [vmem:[#allocation2 + $0x78] sm:$0xff] %vm308, %v307
  // Predicated region
  $region38: #{hetero_gnn_forward.6} parent=0 // pred_check
    %p325 = pneg %p30
  $region39: #{hetero_gnn_forward.6} parent=0 // pred_check_branch
    %327 = sbr.rel (%p325) target = $region41
  $region40: #{hetero_gnn_forward.6} parent=0 // pred_region
    %v328 = vld [vmem:[#allocation2] sm:$0xff]
    %v329 = vld [vmem:[#allocation2 + $0x8] sm:$0xff]
    %v330 = vld [vmem:[#allocation2 + $0x10] sm:$0xff]
    %v331 = vld [vmem:[#allocation2 + $0x18] sm:$0xff]
    %v332 = vld [vmem:[#allocation2 + $0x20] sm:$0xff]
    %v333 = vld [vmem:[#allocation2 + $0x28] sm:$0xff]
    %v334 = vld [vmem:[#allocation2 + $0x30] sm:$0xff]
    %v335 = vld [vmem:[#allocation2 + $0x38] sm:$0xff]
    %v336 = vld [vmem:[#allocation2 + $0x40] sm:$0xff]
    %v337 = vld [vmem:[#allocation2 + $0x48] sm:$0xff]
    %v338 = vld [vmem:[#allocation2 + $0x50] sm:$0xff]
    %v339 = vld [vmem:[#allocation2 + $0x58] sm:$0xff]
    %v340 = vld [vmem:[#allocation2 + $0x60] sm:$0xff]
    %v341 = vld [vmem:[#allocation2 + $0x68] sm:$0xff]
    %v342 = vld [vmem:[#allocation2 + $0x70] sm:$0xff]
    %v343 = vld [vmem:[#allocation2 + $0x78] sm:$0xff]
    %v344 = vpack.c.bf16 %v329, %v328
    %v345 = vpack.c.bf16 %v331, %v330
    %v346 = vpack.c.bf16 %v333, %v332
    %v347 = vpack.c.bf16 %v335, %v334
    %v348 = vpack.c.bf16 %v337, %v336
    %v349 = vpack.c.bf16 %v339, %v338
    %v350 = vpack.c.bf16 %v341, %v340
    %v351 = vpack.c.bf16 %v343, %v342
    %v352 = vld [vmem:[%s3] sm:$0xf]
    %v353 = vld [vmem:[%s3 + $0x4] sm:$0xf]
    %v354 = vld [vmem:[%s3 + $0x8] sm:$0xf]
    %v355 = vld [vmem:[%s3 + $0xc] sm:$0xf]
    %v356 = vld [vmem:[%s2] sm:$0xff]
    %v357 = vld [vmem:[%s2 + $0x8] sm:$0xff]
    %v358 = vld [vmem:[%s2 + $0x10] sm:$0xff]
    %v359 = vld [vmem:[%s2 + $0x18] sm:$0xff]
    %v360 = vld [vmem:[%s2 + $0x20] sm:$0xff]
    %v361 = vld [vmem:[%s2 + $0x28] sm:$0xff]
    %v362 = vld [vmem:[%s2 + $0x30] sm:$0xff]
    %v363 = vld [vmem:[%s2 + $0x38] sm:$0xff]
    %v364 = vld [vmem:[%s2 + $0x40] sm:$0xff]
    %v365 = vld [vmem:[%s2 + $0x48] sm:$0xff]
    %v366 = vld [vmem:[%s2 + $0x50] sm:$0xff]
    %v367 = vld [vmem:[%s2 + $0x58] sm:$0xff]
    %v368 = vld [vmem:[%s2 + $0x60] sm:$0xff]
    %v369 = vld [vmem:[%s2 + $0x68] sm:$0xff]
    %v370 = vld [vmem:[%s2 + $0x70] sm:$0xff]
    %v371 = vld [vmem:[%s2 + $0x78] sm:$0xff]
    %v372 = vld [vmem:[%s4] sm:$0xf]
    %v373 = vld [vmem:[%s4 + $0x4] sm:$0xf]
    %v374 = vld [vmem:[%s4 + $0x8] sm:$0xf]
    %v375 = vld [vmem:[%s4 + $0xc] sm:$0xf]
    %v376 = vld [vmem:[%s4 + $0x10] sm:$0xf]
    %v377 = vld [vmem:[%s4 + $0x14] sm:$0xf]
    %v378 = vld [vmem:[%s4 + $0x18] sm:$0xf]
    %v379 = vld [vmem:[%s4 + $0x1c] sm:$0xf]
    %v380 = vld [vmem:[%s4 + $0x20] sm:$0xf]
    %v381 = vld [vmem:[%s4 + $0x24] sm:$0xf]
    %v382 = vld [vmem:[%s4 + $0x28] sm:$0xf]
    %v383 = vld [vmem:[%s4 + $0x2c] sm:$0xf]
    %v384 = vld [vmem:[%s4 + $0x30] sm:$0xf]
    %v385 = vld [vmem:[%s4 + $0x34] sm:$0xf]
    %v386 = vld [vmem:[%s4 + $0x38] sm:$0xf]
    %v387 = vld [vmem:[%s4 + $0x3c] sm:$0xf]
    %v388 = vld [vmem:[%s4 + $0x40] sm:$0xf]
    %v389 = vld [vmem:[%s4 + $0x44] sm:$0xf]
    %v390 = vld [vmem:[%s4 + $0x48] sm:$0xf]
    %v391 = vld [vmem:[%s4 + $0x4c] sm:$0xf]
    %v392 = vld [vmem:[%s4 + $0x50] sm:$0xf]
    %v393 = vld [vmem:[%s4 + $0x54] sm:$0xf]
    %v394 = vld [vmem:[%s4 + $0x58] sm:$0xf]
    %v395 = vld [vmem:[%s4 + $0x5c] sm:$0xf]
    %v396 = vld [vmem:[%s4 + $0x60] sm:$0xf]
    %v397 = vld [vmem:[%s4 + $0x64] sm:$0xf]
    %v398 = vld [vmem:[%s4 + $0x68] sm:$0xf]
    %v399 = vld [vmem:[%s4 + $0x6c] sm:$0xf]
    %v400 = vld [vmem:[%s4 + $0x70] sm:$0xf]
    %v401 = vld [vmem:[%s4 + $0x74] sm:$0xf]
    %v402 = vld [vmem:[%s4 + $0x78] sm:$0xf]
    %v403 = vld [vmem:[%s4 + $0x7c] sm:$0xf]
    %v420 = vunpack.c.l.b16 %v356
    %v421 = vunpack.c.h.b16 %v356
    %v422 = vunpack.c.l.b16 %v357
    %v423 = vunpack.c.h.b16 %v357
    %v424 = vunpack.c.l.b16 %v358
    %v425 = vunpack.c.h.b16 %v358
    %v426 = vunpack.c.l.b16 %v359
    %v427 = vunpack.c.h.b16 %v359
    %v428 = vunpack.c.l.b16 %v360
    %v429 = vunpack.c.h.b16 %v360
    %v430 = vunpack.c.l.b16 %v361
    %v431 = vunpack.c.h.b16 %v361
    %v432 = vunpack.c.l.b16 %v362
    %v433 = vunpack.c.h.b16 %v362
    %v434 = vunpack.c.l.b16 %v363
    %v435 = vunpack.c.h.b16 %v363
    %v436 = vunpack.c.l.b16 %v364
    %v437 = vunpack.c.h.b16 %v364
    %v438 = vunpack.c.l.b16 %v365
    %v439 = vunpack.c.h.b16 %v365
    %v440 = vunpack.c.l.b16 %v366
    %v441 = vunpack.c.h.b16 %v366
    %v442 = vunpack.c.l.b16 %v367
    %v443 = vunpack.c.h.b16 %v367
    %v444 = vunpack.c.l.b16 %v368
    %v445 = vunpack.c.h.b16 %v368
    %v446 = vunpack.c.l.b16 %v369
    %v447 = vunpack.c.h.b16 %v369
    %v448 = vunpack.c.l.b16 %v370
    %v449 = vunpack.c.h.b16 %v370
    %v450 = vunpack.c.l.b16 %v371
    %v451 = vunpack.c.h.b16 %v371
    %v452 = vpack.c.b16 %v422, %v420
    %v453 = vpack.c.b16 %v423, %v421
    %v454 = vpack.c.b16 %v426, %v424
    %v455 = vpack.c.b16 %v427, %v425
    %v456 = vpack.c.b16 %v430, %v428
    %v457 = vpack.c.b16 %v431, %v429
    %v458 = vpack.c.b16 %v434, %v432
    %v459 = vpack.c.b16 %v435, %v433
    %v460 = vpack.c.b16 %v438, %v436
    %v461 = vpack.c.b16 %v439, %v437
    %v462 = vpack.c.b16 %v442, %v440
    %v463 = vpack.c.b16 %v443, %v441
    %v464 = vpack.c.b16 %v446, %v444
    %v465 = vpack.c.b16 %v447, %v445
    %v466 = vpack.c.b16 %v450, %v448
    %v467 = vpack.c.b16 %v451, %v449
    %v516 = vunpack.c.l.b16 %v372
    %v517 = vunpack.c.l.b16 %v373
    %v518 = vunpack.c.l.b16 %v374
    %v519 = vunpack.c.l.b16 %v375
    %v520 = vunpack.c.l.b16 %v376
    %v521 = vunpack.c.l.b16 %v377
    %v522 = vunpack.c.l.b16 %v378
    %v523 = vunpack.c.l.b16 %v379
    %v524 = vunpack.c.l.b16 %v380
    %v525 = vunpack.c.l.b16 %v381
    %v526 = vunpack.c.l.b16 %v382
    %v527 = vunpack.c.l.b16 %v383
    %v528 = vunpack.c.l.b16 %v384
    %v529 = vunpack.c.l.b16 %v385
    %v530 = vunpack.c.l.b16 %v386
    %v531 = vunpack.c.l.b16 %v387
    %v532 = vunpack.c.l.b16 %v388
    %v533 = vunpack.c.l.b16 %v389
    %v534 = vunpack.c.l.b16 %v390
    %v535 = vunpack.c.l.b16 %v391
    %v536 = vunpack.c.l.b16 %v392
    %v537 = vunpack.c.l.b16 %v393
    %v538 = vunpack.c.l.b16 %v394
    %v539 = vunpack.c.l.b16 %v395
    %v540 = vunpack.c.l.b16 %v396
    %v541 = vunpack.c.l.b16 %v397
    %v542 = vunpack.c.l.b16 %v398
    %v543 = vunpack.c.l.b16 %v399
    %v544 = vunpack.c.l.b16 %v400
    %v545 = vunpack.c.l.b16 %v401
    %v546 = vunpack.c.l.b16 %v402
    %v547 = vunpack.c.l.b16 %v403
    %v548 = vpack.c.b16 %v517, %v516
    %v549 = vpack.c.b16 %v519, %v518
    %v550 = vpack.c.b16 %v521, %v520
    %v551 = vpack.c.b16 %v523, %v522
    %v552 = vpack.c.b16 %v525, %v524
    %v553 = vpack.c.b16 %v527, %v526
    %v554 = vpack.c.b16 %v529, %v528
    %v555 = vpack.c.b16 %v531, %v530
    %v556 = vpack.c.b16 %v533, %v532
    %v557 = vpack.c.b16 %v535, %v534
    %v558 = vpack.c.b16 %v537, %v536
    %v559 = vpack.c.b16 %v539, %v538
    %v560 = vpack.c.b16 %v541, %v540
    %v561 = vpack.c.b16 %v543, %v542
    %v562 = vpack.c.b16 %v545, %v544
    %v563 = vpack.c.b16 %v547, %v546
    %580 = vmatprep.subr.bf16.mxu0 0
    %581 = vmatpush1.bf16.msra.mxu0 %v548
    %582 = vmatprep.subr.bf16.mxu0 0
    %583 = vmatpush1.bf16.msra.mxu0 %v549
    %584 = vmatprep.subr.bf16.mxu0 0
    %585 = vmatpush1.bf16.msra.mxu0 %v550
    %586 = vmatprep.subr.bf16.mxu0 0
    %587 = vmatpush1.bf16.msra.mxu0 %v551
    %588 = vmatprep.subr.bf16.mxu0 0
    %589 = vmatpush1.bf16.msra.mxu0 %v552
    %590 = vmatprep.subr.bf16.mxu0 0
    %591 = vmatpush1.bf16.msra.mxu0 %v553
    %592 = vmatprep.subr.bf16.mxu0 0
    %593 = vmatpush1.bf16.msra.mxu0 %v554
    %594 = vmatprep.subr.bf16.mxu0 0
    %595 = vmatpush1.bf16.msra.mxu0 %v555
    %596 = vmatprep.subr.bf16.mxu0 0
    %597 = vmatpush1.bf16.msra.mxu0 %v556
    %598 = vmatprep.subr.bf16.mxu0 0
    %599 = vmatpush1.bf16.msra.mxu0 %v557
    %600 = vmatprep.subr.bf16.mxu0 0
    %601 = vmatpush1.bf16.msra.mxu0 %v558
    %602 = vmatprep.subr.bf16.mxu0 0
    %603 = vmatpush1.bf16.msra.mxu0 %v559
    %604 = vmatprep.subr.bf16.mxu0 0
    %605 = vmatpush1.bf16.msra.mxu0 %v560
    %606 = vmatprep.subr.bf16.mxu0 0
    %607 = vmatpush1.bf16.msra.mxu0 %v561
    %608 = vmatprep.subr.bf16.mxu0 0
    %609 = vmatpush1.bf16.msra.mxu0 %v562
    %610 = vmatprep.subr.bf16.mxu0 0
    %611 = vmatpush1.bf16.msra.mxu0 %v563
    %612 = vmatprep.mubr.bf16.mxu0 %v453
    %613 = vmatmul.mubr.bf16.gmra.mrb[0].mxu0 %v452
    %v614 = vpop.f32.mrb[0].mxu0
    %v615 = vadd.f32 0.0, %v614
    %v616 = vpop.f32.mrb[0].mxu0
    %v617 = vpop.f32.mrb[0].mxu0
    %v618 = vadd.f32 0.0, %v617
    %v619 = vpop.f32.mrb[0].mxu0
    %620 = vmatprep.mubr.bf16.mxu0 %v455
    %621 = vmatmul.mubr.bf16.gmra.mrb[0].mxu0 %v454
    %v622 = vpop.f32.mrb[0].mxu0
    %v623 = vadd.f32 0.0, %v622
    %v624 = vpop.f32.mrb[0].mxu0
    %v625 = vpop.f32.mrb[0].mxu0
    %v626 = vadd.f32 0.0, %v625
    %v627 = vpop.f32.mrb[0].mxu0
    %628 = vmatprep.mubr.bf16.mxu0 %v457
    %629 = vmatmul.mubr.bf16.gmra.mrb[0].mxu0 %v456
    %v630 = vpop.f32.mrb[0].mxu0
    %v631 = vadd.f32 0.0, %v630
    %v632 = vpop.f32.mrb[0].mxu0
    %v633 = vpop.f32.mrb[0].mxu0
    %v634 = vadd.f32 0.0, %v633
    %v635 = vpop.f32.mrb[0].mxu0
    %636 = vmatprep.mubr.bf16.mxu0 %v459
    %637 = vmatmul.mubr.bf16.gmra.mrb[0].mxu0 %v458
    %v638 = vpop.f32.mrb[0].mxu0
    %v639 = vadd.f32 0.0, %v638
    %v640 = vpop.f32.mrb[0].mxu0
    %v641 = vpop.f32.mrb[0].mxu0
    %v642 = vadd.f32 0.0, %v641
    %v643 = vpop.f32.mrb[0].mxu0
    %644 = vmatprep.mubr.bf16.mxu0 %v461
    %645 = vmatmul.mubr.bf16.gmra.mrb[0].mxu0 %v460
    %v646 = vpop.f32.mrb[0].mxu0
    %v647 = vadd.f32 0.0, %v646
    %v648 = vpop.f32.mrb[0].mxu0
    %v649 = vpop.f32.mrb[0].mxu0
    %v650 = vadd.f32 0.0, %v649
    %v651 = vpop.f32.mrb[0].mxu0
    %652 = vmatprep.mubr.bf16.mxu0 %v463
    %653 = vmatmul.mubr.bf16.gmra.mrb[0].mxu0 %v462
    %v654 = vpop.f32.mrb[0].mxu0
    %v655 = vadd.f32 0.0, %v654
    %v656 = vpop.f32.mrb[0].mxu0
    %v657 = vpop.f32.mrb[0].mxu0
    %v658 = vadd.f32 0.0, %v657
    %v659 = vpop.f32.mrb[0].mxu0
    %660 = vmatprep.mubr.bf16.mxu0 %v465
    %661 = vmatmul.mubr.bf16.gmra.mrb[0].mxu0 %v464
    %v662 = vpop.f32.mrb[0].mxu0
    %v663 = vadd.f32 0.0, %v662
    %v664 = vpop.f32.mrb[0].mxu0
    %v665 = vpop.f32.mrb[0].mxu0
    %v666 = vadd.f32 0.0, %v665
    %v667 = vpop.f32.mrb[0].mxu0
    %668 = vmatprep.mubr.bf16.mxu0 %v467
    %669 = vmatmul.mubr.bf16.gmra.mrb[0].mxu0 %v466
    %v670 = vpop.f32.mrb[0].mxu0
    %v671 = vadd.f32 0.0, %v670
    %v672 = vpop.f32.mrb[0].mxu0
    %v673 = vpop.f32.mrb[0].mxu0
    %v674 = vadd.f32 0.0, %v673
    %v675 = vpop.f32.mrb[0].mxu0
    %676 = vdwg.mxu0
    %v681 = vunpack.c.l.b16 %v352
    %v682 = vunpack.c.l.b16 %v353
    %v683 = vunpack.c.l.b16 %v354
    %v684 = vunpack.c.l.b16 %v355
    %v685 = vpack.c.b16 %v682, %v681
    %v686 = vpack.c.b16 %v684, %v683
    %v690 = vsel %vm308, %v344, 0
    %v693 = vsel %vm308, %v345, 0
    %v696 = vsel %vm308, %v346, 0
    %v699 = vsel %vm308, %v347, 0
    %v702 = vsel %vm308, %v348, 0
    %v705 = vsel %vm308, %v349, 0
    %v708 = vsel %vm308, %v350, 0
    %v711 = vsel %vm308, %v351, 0
    %713 = vmatprep.subr.bf16.mxu0 0
    %714 = vmatpush1.bf16.msra.mxu0 %v685
    %715 = vmatprep.subr.bf16.mxu0 0
    %716 = vmatpush1.bf16.msra.mxu0 %v686
    %717 = vmatprep.subr.bf16.mxu0 0
    %718 = vmatpush1.bf16.msra.mxu0 0
    %719 = vmatprep.subr.bf16.mxu0 0
    %720 = vmatpush1.bf16.msra.mxu0 0
    %721 = vmatprep.subr.bf16.mxu0 0
    %722 = vmatpush1.bf16.msra.mxu0 0
    %723 = vmatprep.subr.bf16.mxu0 0
    %724 = vmatpush1.bf16.msra.mxu0 0
    %725 = vmatprep.subr.bf16.mxu0 0
    %726 = vmatpush1.bf16.msra.mxu0 0
    %727 = vmatprep.subr.bf16.mxu0 0
    %728 = vmatpush1.bf16.msra.mxu0 0
    %729 = vmatprep.subr.bf16.mxu0 0
    %730 = vmatpush1.bf16.msra.mxu0 0
    %731 = vmatprep.subr.bf16.mxu0 0
    %732 = vmatpush1.bf16.msra.mxu0 0
    %733 = vmatprep.subr.bf16.mxu0 0
    %734 = vmatpush1.bf16.msra.mxu0 0
    %735 = vmatprep.subr.bf16.mxu0 0
    %736 = vmatpush1.bf16.msra.mxu0 0
    %737 = vmatprep.subr.bf16.mxu0 0
    %738 = vmatpush1.bf16.msra.mxu0 0
    %739 = vmatprep.subr.bf16.mxu0 0
    %740 = vmatpush1.bf16.msra.mxu0 0
    %741 = vmatprep.subr.bf16.mxu0 0
    %742 = vmatpush1.bf16.msra.mxu0 0
    %743 = vmatprep.subr.bf16.mxu0 0
    %744 = vmatpush1.bf16.msra.mxu0 0
    %745 = vmatprep.mubr.bf16.mxu0 0
    %746 = vmatmul.mubr.bf16.gmra.mrb[0].mxu0 %v690
    %v747 = vpop.f32.mrb[0].mxu0
    %v748 = vadd.f32 %v615, %v747
    %v749 = vpop.f32.mrb[0].mxu0
    %v750 = vpop.f32.mrb[0].mxu0
    %v751 = vadd.f32 %v618, %v750
    %v752 = vpop.f32.mrb[0].mxu0
    %753 = vmatprep.mubr.bf16.mxu0 0
    %754 = vmatmul.mubr.bf16.gmra.mrb[0].mxu0 %v693
    %v755 = vpop.f32.mrb[0].mxu0
    %v756 = vadd.f32 %v623, %v755
    %v757 = vpop.f32.mrb[0].mxu0
    %v758 = vpop.f32.mrb[0].mxu0
    %v759 = vadd.f32 %v626, %v758
    %v760 = vpop.f32.mrb[0].mxu0
    %761 = vmatprep.mubr.bf16.mxu0 0
    %762 = vmatmul.mubr.bf16.gmra.mrb[0].mxu0 %v696
    %v763 = vpop.f32.mrb[0].mxu0
    %v764 = vadd.f32 %v631, %v763
    %v765 = vpop.f32.mrb[0].mxu0
    %v766 = vpop.f32.mrb[0].mxu0
    %v767 = vadd.f32 %v634, %v766
    %v768 = vpop.f32.mrb[0].mxu0
    %769 = vmatprep.mubr.bf16.mxu0 0
    %770 = vmatmul.mubr.bf16.gmra.mrb[0].mxu0 %v699
    %v771 = vpop.f32.mrb[0].mxu0
    %v772 = vadd.f32 %v639, %v771
    %v773 = vpop.f32.mrb[0].mxu0
    %v774 = vpop.f32.mrb[0].mxu0
    %v775 = vadd.f32 %v642, %v774
    %v776 = vpop.f32.mrb[0].mxu0
    %777 = vmatprep.mubr.bf16.mxu0 0
    %778 = vmatmul.mubr.bf16.gmra.mrb[0].mxu0 %v702
    %v779 = vpop.f32.mrb[0].mxu0
    %v780 = vadd.f32 %v647, %v779
    %v781 = vpop.f32.mrb[0].mxu0
    %v782 = vpop.f32.mrb[0].mxu0
    %v783 = vadd.f32 %v650, %v782
    %v784 = vpop.f32.mrb[0].mxu0
    %785 = vmatprep.mubr.bf16.mxu0 0
    %786 = vmatmul.mubr.bf16.gmra.mrb[0].mxu0 %v705
    %v787 = vpop.f32.mrb[0].mxu0
    %v788 = vadd.f32 %v655, %v787
    %v789 = vpop.f32.mrb[0].mxu0
    %v790 = vpop.f32.mrb[0].mxu0
    %v791 = vadd.f32 %v658, %v790
    %v792 = vpop.f32.mrb[0].mxu0
    %793 = vmatprep.mubr.bf16.mxu0 0
    %794 = vmatmul.mubr.bf16.gmra.mrb[0].mxu0 %v708
    %v795 = vpop.f32.mrb[0].mxu0
    %v796 = vadd.f32 %v663, %v795
    %v797 = vpop.f32.mrb[0].mxu0
    %v798 = vpop.f32.mrb[0].mxu0
    %v799 = vadd.f32 %v666, %v798
    %v800 = vpop.f32.mrb[0].mxu0
    %801 = vmatprep.mubr.bf16.mxu0 0
    %802 = vmatmul.mubr.bf16.gmra.mrb[0].mxu0 %v711
    %v803 = vpop.f32.mrb[0].mxu0
    %v804 = vadd.f32 %v671, %v803
    %v805 = vpop.f32.mrb[0].mxu0
    %v806 = vpop.f32.mrb[0].mxu0
    %v807 = vadd.f32 %v674, %v806
    %v808 = vpop.f32.mrb[0].mxu0
    %809 = vdwg.mxu0
    %v810 = vld [vmem:[%s5] sm:$0x1]
    %v812 = vlaneseq
    %v813 = vshrl.u32 %v812, 7
    %v814 = vsub.s32 0, %v813
    %v815 = vrot.slane %v810, %v814
    %v817 = vadd.f32 %v748, %v815
    %v818 = vadd.f32 %v751, %v815
    %v819 = vadd.f32 %v756, %v815
    %v820 = vadd.f32 %v759, %v815
    %v821 = vadd.f32 %v764, %v815
    %v822 = vadd.f32 %v767, %v815
    %v823 = vadd.f32 %v772, %v815
    %v824 = vadd.f32 %v775, %v815
    %v825 = vadd.f32 %v780, %v815
    %v826 = vadd.f32 %v783, %v815
    %v827 = vadd.f32 %v788, %v815
    %v828 = vadd.f32 %v791, %v815
    %v829 = vadd.f32 %v796, %v815
    %v830 = vadd.f32 %v799, %v815
    %v831 = vadd.f32 %v804, %v815
    %v832 = vadd.f32 %v807, %v815
    %v833 = vmax.f32 %v817, 0.0
    %v834 = vmax.f32 %v818, 0.0
    %v835 = vmax.f32 %v819, 0.0
    %v836 = vmax.f32 %v820, 0.0
    %v837 = vmax.f32 %v821, 0.0
    %v838 = vmax.f32 %v822, 0.0
    %v839 = vmax.f32 %v823, 0.0
    %v840 = vmax.f32 %v824, 0.0
    %v841 = vmax.f32 %v825, 0.0
    %v842 = vmax.f32 %v826, 0.0
    %v843 = vmax.f32 %v827, 0.0
    %v844 = vmax.f32 %v828, 0.0
    %v845 = vmax.f32 %v829, 0.0
    %v846 = vmax.f32 %v830, 0.0
    %v847 = vmax.f32 %v831, 0.0
    %v848 = vmax.f32 %v832, 0.0
    %v849 = vld [vmem:[%s6] sm:$0x1]
    %v851 = vlaneseq
    %v852 = vshrl.u32 %v851, 7
    %v853 = vsub.s32 0, %v852
    %v854 = vrot.slane %v849, %v853
    %v856 = vmul.f32 %v833, %v854
    %v857 = vmul.f32 %v834, %v854
    %v858 = vmul.f32 %v835, %v854
    %v859 = vmul.f32 %v836, %v854
    %v860 = vmul.f32 %v837, %v854
    %v861 = vmul.f32 %v838, %v854
    %v862 = vmul.f32 %v839, %v854
    %v863 = vmul.f32 %v840, %v854
    %v864 = vmul.f32 %v841, %v854
    %v865 = vmul.f32 %v842, %v854
    %v866 = vmul.f32 %v843, %v854
    %v867 = vmul.f32 %v844, %v854
    %v868 = vmul.f32 %v845, %v854
    %v869 = vmul.f32 %v846, %v854
    %v870 = vmul.f32 %v847, %v854
    %v871 = vmul.f32 %v848, %v854
    %v872 = vld [vmem:[%s7] sm:$0x1]
    %v874 = vlaneseq
    %v875 = vshrl.u32 %v874, 7
    %v876 = vsub.s32 0, %v875
    %v877 = vrot.slane %v872, %v876
    %v879 = vadd.f32 %v856, %v877
    %v880 = vadd.f32 %v857, %v877
    %v881 = vadd.f32 %v858, %v877
    %v882 = vadd.f32 %v859, %v877
    %v883 = vadd.f32 %v860, %v877
    %v884 = vadd.f32 %v861, %v877
    %v885 = vadd.f32 %v862, %v877
    %v886 = vadd.f32 %v863, %v877
    %v887 = vadd.f32 %v864, %v877
    %v888 = vadd.f32 %v865, %v877
    %v889 = vadd.f32 %v866, %v877
    %v890 = vadd.f32 %v867, %v877
    %v891 = vadd.f32 %v868, %v877
    %v892 = vadd.f32 %v869, %v877
    %v893 = vadd.f32 %v870, %v877
    %v894 = vadd.f32 %v871, %v877
    %v895 = vpack.c.bf16 %v880, %v879
    %v896 = vpack.c.bf16 %v882, %v881
    %v897 = vpack.c.bf16 %v884, %v883
    %v898 = vpack.c.bf16 %v886, %v885
    %v899 = vpack.c.bf16 %v888, %v887
    %v900 = vpack.c.bf16 %v890, %v889
    %v901 = vpack.c.bf16 %v892, %v891
    %v902 = vpack.c.bf16 %v894, %v893
    %v911 = vunpack.c.l.b16 %v895
    %v912 = vunpack.c.h.b16 %v895
    %v913 = vunpack.c.l.b16 %v896
    %v914 = vunpack.c.h.b16 %v896
    %v915 = vunpack.c.l.b16 %v897
    %v916 = vunpack.c.h.b16 %v897
    %v917 = vunpack.c.l.b16 %v898
    %v918 = vunpack.c.h.b16 %v898
    %v919 = vunpack.c.l.b16 %v899
    %v920 = vunpack.c.h.b16 %v899
    %v921 = vunpack.c.l.b16 %v900
    %v922 = vunpack.c.h.b16 %v900
    %v923 = vunpack.c.l.b16 %v901
    %v924 = vunpack.c.h.b16 %v901
    %v925 = vunpack.c.l.b16 %v902
    %v926 = vunpack.c.h.b16 %v902
    %v927 = vpack.c.b16 %v911, %v911
    %v928 = vpack.c.b16 %v912, %v912
    %v929 = vpack.c.b16 %v913, %v913
    %v930 = vpack.c.b16 %v914, %v914
    %v931 = vpack.c.b16 %v915, %v915
    %v932 = vpack.c.b16 %v916, %v916
    %v933 = vpack.c.b16 %v917, %v917
    %v934 = vpack.c.b16 %v918, %v918
    %v935 = vpack.c.b16 %v919, %v919
    %v936 = vpack.c.b16 %v920, %v920
    %v937 = vpack.c.b16 %v921, %v921
    %v938 = vpack.c.b16 %v922, %v922
    %v939 = vpack.c.b16 %v923, %v923
    %v940 = vpack.c.b16 %v924, %v924
    %v941 = vpack.c.b16 %v925, %v925
    %v942 = vpack.c.b16 %v926, %v926
    %959 = vst [vmem:[%s8] sm:$0xf] %v927
    %960 = vst [vmem:[%s8 + $0x4] sm:$0xf] %v928
    %961 = vst [vmem:[%s8 + $0x8] sm:$0xf] %v929
    %962 = vst [vmem:[%s8 + $0xc] sm:$0xf] %v930
    %963 = vst [vmem:[%s8 + $0x10] sm:$0xf] %v931
    %964 = vst [vmem:[%s8 + $0x14] sm:$0xf] %v932
    %965 = vst [vmem:[%s8 + $0x18] sm:$0xf] %v933
    %966 = vst [vmem:[%s8 + $0x1c] sm:$0xf] %v934
    %967 = vst [vmem:[%s8 + $0x20] sm:$0xf] %v935
    %968 = vst [vmem:[%s8 + $0x24] sm:$0xf] %v936
    %969 = vst [vmem:[%s8 + $0x28] sm:$0xf] %v937
    %970 = vst [vmem:[%s8 + $0x2c] sm:$0xf] %v938
    %971 = vst [vmem:[%s8 + $0x30] sm:$0xf] %v939
    %972 = vst [vmem:[%s8 + $0x34] sm:$0xf] %v940
    %973 = vst [vmem:[%s8 + $0x38] sm:$0xf] %v941
    %974 = vst [vmem:[%s8 + $0x3c] sm:$0xf] %v942
  $region41: #{hetero_gnn_forward.6} parent=0 // pred_fallthru
    _
  // Predicated region
  $region42: #{hetero_gnn_forward.6} parent=0 // pred_check
    _
  $region43: #{hetero_gnn_forward.6} parent=0 // pred_check_branch
    %976 = sbr.rel (0) target = $region45
  $region44: #{hetero_gnn_forward.6} parent=0 // pred_region
    _
  $region45: #{hetero_gnn_forward.6} parent=0 // pred_fallthru
    _
  // Predicated region
  $region46: #{hetero_gnn_forward.6} parent=0 // pred_check
    _
  $region47: #{hetero_gnn_forward.6} parent=0 // pred_check_branch
    %978 = sbr.rel (0) target = $region49
  $region48: #{hetero_gnn_forward.6} parent=0 // pred_region
    _
  $region49: #{hetero_gnn_forward.6} parent=0 // pred_fallthru
    _

// kernel: hetero_gnn_forward.10
$region0: #{hetero_gnn_forward.10}
  #allocation0 [shape = 'u32[]', space=smem, size = 0x4, offset = 0x4, fixed_abs, tag = 'smem constant byte address 0x4 - core index']
  #allocation1 [shape = 'u32[144,128]{1,0:T(1,128)}', space=vmem, size = 0x12000, scoped, tag = 'internal scratch']
  #allocation2 [shape = 'f32[128,128]{1,0:T(8,128)}', space=vmem, size = 0x10000, scoped, tag = 'scratch operand']
  %s0 = inlined_call_operand.vmem [shape: bf16[128,128], index: 0, kind: input, shape index: {}]
  %s1 = inlined_call_operand.vmem [shape: bf16[128,128], index: 1, kind: input, shape index: {}]
  %s2 = inlined_call_operand.vmem [shape: bf16[128,128], index: 2, kind: input, shape index: {}]
  %s3 = inlined_call_operand.vmem [shape: bf16[128,128], index: 3, kind: input, shape index: {}]
  %s4 = inlined_call_operand.vmem [shape: bf16[128,128], index: 4, kind: input, shape index: {}]
  %s5 = inlined_call_operand.vmem [shape: f32[1,128], index: 5, kind: input, shape index: {}]
  %s6 = inlined_call_operand.vmem [shape: f32[1,128], index: 6, kind: input, shape index: {}]
  %s7 = inlined_call_operand.vmem [shape: f32[1,128], index: 7, kind: input, shape index: {}]
  %s8 = inlined_call_operand.vmem [shape: bf16[128,128], index: 8, kind: output, shape index: {}]
  %s9 = sld [smem:[#allocation0]]
  $region50: #{hetero_gnn_forward.10} parent=0
    _
  %s11 = ssub.s32 1, %s9
  %s12 = scalar_select 0, %s11, %s9
  // Predicated region
  $region2: #{hetero_gnn_forward.10} parent=0 // pred_check
    _
  $region3: #{hetero_gnn_forward.10} parent=0 // pred_check_branch
    %14 = sbr.rel (0) target = $region5
  $region4: #{hetero_gnn_forward.10} parent=0 // pred_region
    _
  $region5: #{hetero_gnn_forward.10} parent=0 // pred_fallthru
    _
  // Predicated region
  $region6: #{hetero_gnn_forward.10} parent=0 // pred_check
    _
  $region7: #{hetero_gnn_forward.10} parent=0 // pred_check_branch
    %16 = sbr.rel (0) target = $region9
  $region8: #{hetero_gnn_forward.10} parent=0 // pred_region
    _
  $region9: #{hetero_gnn_forward.10} parent=0 // pred_fallthru
    _
  // Predicated region
  $region10: #{hetero_gnn_forward.10} parent=0 // pred_check
    _
  $region11: #{hetero_gnn_forward.10} parent=0 // pred_check_branch
    %18 = sbr.rel (0) target = $region13
  $region12: #{hetero_gnn_forward.10} parent=0 // pred_region
    _
  $region13: #{hetero_gnn_forward.10} parent=0 // pred_fallthru
    _
  // Predicated region
  $region14: #{hetero_gnn_forward.10} parent=0 // pred_check
    _
  $region15: #{hetero_gnn_forward.10} parent=0 // pred_check_branch
    %20 = sbr.rel (0) target = $region17
  $region16: #{hetero_gnn_forward.10} parent=0 // pred_region
    _
  $region17: #{hetero_gnn_forward.10} parent=0 // pred_fallthru
    _
  // Predicated region
  $region18: #{hetero_gnn_forward.10} parent=0 // pred_check
    _
  $region19: #{hetero_gnn_forward.10} parent=0 // pred_check_branch
    %22 = sbr.rel (0) target = $region21
  $region20: #{hetero_gnn_forward.10} parent=0 // pred_region
    _
  $region21: #{hetero_gnn_forward.10} parent=0 // pred_fallthru
    _
  // Predicated region
  $region22: #{hetero_gnn_forward.10} parent=0 // pred_check
    _
  $region23: #{hetero_gnn_forward.10} parent=0 // pred_check_branch
    %24 = sbr.rel (0) target = $region25
  $region24: #{hetero_gnn_forward.10} parent=0 // pred_region
    _
  $region25: #{hetero_gnn_forward.10} parent=0 // pred_fallthru
    _
  // Predicated region
  $region26: #{hetero_gnn_forward.10} parent=0 // pred_check
    _
  $region27: #{hetero_gnn_forward.10} parent=0 // pred_check_branch
    %26 = sbr.rel (0) target = $region29
  $region28: #{hetero_gnn_forward.10} parent=0 // pred_region
    _
  $region29: #{hetero_gnn_forward.10} parent=0 // pred_fallthru
    _
  // Predicated region
  $region30: #{hetero_gnn_forward.10} parent=0 // pred_check
    _
  $region31: #{hetero_gnn_forward.10} parent=0 // pred_check_branch
    %28 = sbr.rel (0) target = $region33
  $region32: #{hetero_gnn_forward.10} parent=0 // pred_region
    _
  $region33: #{hetero_gnn_forward.10} parent=0 // pred_fallthru
    _
  %p30 = scmp.eq.s32.totalorder 0, 0
  // Predicated region
  $region34: #{hetero_gnn_forward.10} parent=0 // pred_check
    %p31 = pneg %p30
  $region35: #{hetero_gnn_forward.10} parent=0 // pred_check_branch
    %33 = sbr.rel (%p31) target = $region37
  $region36: #{hetero_gnn_forward.10} parent=0 // pred_region
    %34 = vst [vmem:[#allocation2] sm:$0xff] 0.0
    %35 = vst [vmem:[#allocation2 + $0x8] sm:$0xff] 0.0
    %36 = vst [vmem:[#allocation2 + $0x10] sm:$0xff] 0.0
    %37 = vst [vmem:[#allocation2 + $0x18] sm:$0xff] 0.0
    %38 = vst [vmem:[#allocation2 + $0x20] sm:$0xff] 0.0
    %39 = vst [vmem:[#allocation2 + $0x28] sm:$0xff] 0.0
    %40 = vst [vmem:[#allocation2 + $0x30] sm:$0xff] 0.0
    %41 = vst [vmem:[#allocation2 + $0x38] sm:$0xff] 0.0
    %42 = vst [vmem:[#allocation2 + $0x40] sm:$0xff] 0.0
    %43 = vst [vmem:[#allocation2 + $0x48] sm:$0xff] 0.0
    %44 = vst [vmem:[#allocation2 + $0x50] sm:$0xff] 0.0
    %45 = vst [vmem:[#allocation2 + $0x58] sm:$0xff] 0.0
    %46 = vst [vmem:[#allocation2 + $0x60] sm:$0xff] 0.0
    %47 = vst [vmem:[#allocation2 + $0x68] sm:$0xff] 0.0
    %48 = vst [vmem:[#allocation2 + $0x70] sm:$0xff] 0.0
    %49 = vst [vmem:[#allocation2 + $0x78] sm:$0xff] 0.0
  $region37: #{hetero_gnn_forward.10} parent=0 // pred_fallthru
    _
  %v50 = vld [vmem:[#allocation2] sm:$0xff]
  %v51 = vld [vmem:[#allocation2 + $0x8] sm:$0xff]
  %v52 = vld [vmem:[#allocation2 + $0x10] sm:$0xff]
  %v53 = vld [vmem:[#allocation2 + $0x18] sm:$0xff]
  %v54 = vld [vmem:[#allocation2 + $0x20] sm:$0xff]
  %v55 = vld [vmem:[#allocation2 + $0x28] sm:$0xff]
  %v56 = vld [vmem:[#allocation2 + $0x30] sm:$0xff]
  %v57 = vld [vmem:[#allocation2 + $0x38] sm:$0xff]
  %v58 = vld [vmem:[#allocation2 + $0x40] sm:$0xff]
  %v59 = vld [vmem:[#allocation2 + $0x48] sm:$0xff]
  %v60 = vld [vmem:[#allocation2 + $0x50] sm:$0xff]
  %v61 = vld [vmem:[#allocation2 + $0x58] sm:$0xff]
  %v62 = vld [vmem:[#allocation2 + $0x60] sm:$0xff]
  %v63 = vld [vmem:[#allocation2 + $0x68] sm:$0xff]
  %v64 = vld [vmem:[#allocation2 + $0x70] sm:$0xff]
  %v65 = vld [vmem:[#allocation2 + $0x78] sm:$0xff]
  %v66 = vld [vmem:[%s0] sm:$0xf]
  %v67 = vld [vmem:[%s0 + $0x4] sm:$0xf]
  %v68 = vld [vmem:[%s0 + $0x8] sm:$0xf]
  %v69 = vld [vmem:[%s0 + $0xc] sm:$0xf]
  %v70 = vld [vmem:[%s0 + $0x10] sm:$0xf]
  %v71 = vld [vmem:[%s0 + $0x14] sm:$0xf]
  %v72 = vld [vmem:[%s0 + $0x18] sm:$0xf]
  %v73 = vld [vmem:[%s0 + $0x1c] sm:$0xf]
  %v74 = vld [vmem:[%s0 + $0x20] sm:$0xf]
  %v75 = vld [vmem:[%s0 + $0x24] sm:$0xf]
  %v76 = vld [vmem:[%s0 + $0x28] sm:$0xf]
  %v77 = vld [vmem:[%s0 + $0x2c] sm:$0xf]
  %v78 = vld [vmem:[%s0 + $0x30] sm:$0xf]
  %v79 = vld [vmem:[%s0 + $0x34] sm:$0xf]
  %v80 = vld [vmem:[%s0 + $0x38] sm:$0xf]
  %v81 = vld [vmem:[%s0 + $0x3c] sm:$0xf]
  %v82 = vld [vmem:[%s1] sm:$0xf]
  %v83 = vld [vmem:[%s1 + $0x4] sm:$0xf]
  %v84 = vld [vmem:[%s1 + $0x8] sm:$0xf]
  %v85 = vld [vmem:[%s1 + $0xc] sm:$0xf]
  %v86 = vld [vmem:[%s1 + $0x10] sm:$0xf]
  %v87 = vld [vmem:[%s1 + $0x14] sm:$0xf]
  %v88 = vld [vmem:[%s1 + $0x18] sm:$0xf]
  %v89 = vld [vmem:[%s1 + $0x1c] sm:$0xf]
  %v90 = vld [vmem:[%s1 + $0x20] sm:$0xf]
  %v91 = vld [vmem:[%s1 + $0x24] sm:$0xf]
  %v92 = vld [vmem:[%s1 + $0x28] sm:$0xf]
  %v93 = vld [vmem:[%s1 + $0x2c] sm:$0xf]
  %v94 = vld [vmem:[%s1 + $0x30] sm:$0xf]
  %v95 = vld [vmem:[%s1 + $0x34] sm:$0xf]
  %v96 = vld [vmem:[%s1 + $0x38] sm:$0xf]
  %v97 = vld [vmem:[%s1 + $0x3c] sm:$0xf]
  %v114 = vunpack.c.l.b16 %v66
  %v115 = vunpack.c.l.b16 %v67
  %v116 = vunpack.c.l.b16 %v68
  %v117 = vunpack.c.l.b16 %v69
  %v118 = vunpack.c.l.b16 %v70
  %v119 = vunpack.c.l.b16 %v71
  %v120 = vunpack.c.l.b16 %v72
  %v121 = vunpack.c.l.b16 %v73
  %v122 = vunpack.c.l.b16 %v74
  %v123 = vunpack.c.l.b16 %v75
  %v124 = vunpack.c.l.b16 %v76
  %v125 = vunpack.c.l.b16 %v77
  %v126 = vunpack.c.l.b16 %v78
  %v127 = vunpack.c.l.b16 %v79
  %v128 = vunpack.c.l.b16 %v80
  %v129 = vunpack.c.l.b16 %v81
  %v130 = vpack.c.b16 %v115, %v114
  %v131 = vpack.c.b16 %v117, %v116
  %v132 = vpack.c.b16 %v119, %v118
  %v133 = vpack.c.b16 %v121, %v120
  %v134 = vpack.c.b16 %v123, %v122
  %v135 = vpack.c.b16 %v125, %v124
  %v136 = vpack.c.b16 %v127, %v126
  %v137 = vpack.c.b16 %v129, %v128
  %v162 = vunpack.c.l.b16 %v82
  %v163 = vunpack.c.l.b16 %v83
  %v164 = vunpack.c.l.b16 %v84
  %v165 = vunpack.c.l.b16 %v85
  %v166 = vunpack.c.l.b16 %v86
  %v167 = vunpack.c.l.b16 %v87
  %v168 = vunpack.c.l.b16 %v88
  %v169 = vunpack.c.l.b16 %v89
  %v170 = vunpack.c.l.b16 %v90
  %v171 = vunpack.c.l.b16 %v91
  %v172 = vunpack.c.l.b16 %v92
  %v173 = vunpack.c.l.b16 %v93
  %v174 = vunpack.c.l.b16 %v94
  %v175 = vunpack.c.l.b16 %v95
  %v176 = vunpack.c.l.b16 %v96
  %v177 = vunpack.c.l.b16 %v97
  %v178 = vpack.c.b16 %v163, %v162
  %v179 = vpack.c.b16 %v165, %v164
  %v180 = vpack.c.b16 %v167, %v166
  %v181 = vpack.c.b16 %v169, %v168
  %v182 = vpack.c.b16 %v171, %v170
  %v183 = vpack.c.b16 %v173, %v172
  %v184 = vpack.c.b16 %v175, %v174
  %v185 = vpack.c.b16 %v177, %v176
  %194 = vmatprep.subr.bf16.mxu0 0
  %195 = vmatpush1.bf16.msra.mxu0 %v178
  %196 = vmatprep.subr.bf16.mxu0 0
  %197 = vmatpush1.bf16.msra.mxu0 %v179
  %198 = vmatprep.subr.bf16.mxu0 0
  %199 = vmatpush1.bf16.msra.mxu0 %v180
  %200 = vmatprep.subr.bf16.mxu0 0
  %201 = vmatpush1.bf16.msra.mxu0 %v181
  %202 = vmatprep.subr.bf16.mxu0 0
  %203 = vmatpush1.bf16.msra.mxu0 %v182
  %204 = vmatprep.subr.bf16.mxu0 0
  %205 = vmatpush1.bf16.msra.mxu0 %v183
  %206 = vmatprep.subr.bf16.mxu0 0
  %207 = vmatpush1.bf16.msra.mxu0 %v184
  %208 = vmatprep.subr.bf16.mxu0 0
  %209 = vmatpush1.bf16.msra.mxu0 %v185
  %210 = vmatprep.subr.bf16.mxu0 0
  %211 = vmatpush1.bf16.msra.mxu0 0
  %212 = vmatprep.subr.bf16.mxu0 0
  %213 = vmatpush1.bf16.msra.mxu0 0
  %214 = vmatprep.subr.bf16.mxu0 0
  %215 = vmatpush1.bf16.msra.mxu0 0
  %216 = vmatprep.subr.bf16.mxu0 0
  %217 = vmatpush1.bf16.msra.mxu0 0
  %218 = vmatprep.subr.bf16.mxu0 0
  %219 = vmatpush1.bf16.msra.mxu0 0
  %220 = vmatprep.subr.bf16.mxu0 0
  %221 = vmatpush1.bf16.msra.mxu0 0
  %222 = vmatprep.subr.bf16.mxu0 0
  %223 = vmatpush1.bf16.msra.mxu0 0
  %224 = vmatprep.subr.bf16.mxu0 0
  %225 = vmatpush1.bf16.msra.mxu0 0
  %226 = vmatprep.mubr.bf16.mxu0 0
  %227 = vmatmul.mubr.bf16.gmra.mrb[0].mxu0 %v130
  %v228 = vpop.f32.mrb[0].mxu0
  %v229 = vadd.f32 0.0, %v228
  %v230 = vpop.f32.mrb[0].mxu0
  %v231 = vpop.f32.mrb[0].mxu0
  %v232 = vadd.f32 0.0, %v231
  %v233 = vpop.f32.mrb[0].mxu0
  %234 = vmatprep.mubr.bf16.mxu0 0
  %235 = vmatmul.mubr.bf16.gmra.mrb[0].mxu0 %v131
  %v236 = vpop.f32.mrb[0].mxu0
  %v237 = vadd.f32 0.0, %v236
  %v238 = vpop.f32.mrb[0].mxu0
  %v239 = vpop.f32.mrb[0].mxu0
  %v240 = vadd.f32 0.0, %v239
  %v241 = vpop.f32.mrb[0].mxu0
  %242 = vmatprep.mubr.bf16.mxu0 0
  %243 = vmatmul.mubr.bf16.gmra.mrb[0].mxu0 %v132
  %v244 = vpop.f32.mrb[0].mxu0
  %v245 = vadd.f32 0.0, %v244
  %v246 = vpop.f32.mrb[0].mxu0
  %v247 = vpop.f32.mrb[0].mxu0
  %v248 = vadd.f32 0.0, %v247
  %v249 = vpop.f32.mrb[0].mxu0
  %250 = vmatprep.mubr.bf16.mxu0 0
  %251 = vmatmul.mubr.bf16.gmra.mrb[0].mxu0 %v133
  %v252 = vpop.f32.mrb[0].mxu0
  %v253 = vadd.f32 0.0, %v252
  %v254 = vpop.f32.mrb[0].mxu0
  %v255 = vpop.f32.mrb[0].mxu0
  %v256 = vadd.f32 0.0, %v255
  %v257 = vpop.f32.mrb[0].mxu0
  %258 = vmatprep.mubr.bf16.mxu0 0
  %259 = vmatmul.mubr.bf16.gmra.mrb[0].mxu0 %v134
  %v260 = vpop.f32.mrb[0].mxu0
  %v261 = vadd.f32 0.0, %v260
  %v262 = vpop.f32.mrb[0].mxu0
  %v263 = vpop.f32.mrb[0].mxu0
  %v264 = vadd.f32 0.0, %v263
  %v265 = vpop.f32.mrb[0].mxu0
  %266 = vmatprep.mubr.bf16.mxu0 0
  %267 = vmatmul.mubr.bf16.gmra.mrb[0].mxu0 %v135
  %v268 = vpop.f32.mrb[0].mxu0
  %v269 = vadd.f32 0.0, %v268
  %v270 = vpop.f32.mrb[0].mxu0
  %v271 = vpop.f32.mrb[0].mxu0
  %v272 = vadd.f32 0.0, %v271
  %v273 = vpop.f32.mrb[0].mxu0
  %274 = vmatprep.mubr.bf16.mxu0 0
  %275 = vmatmul.mubr.bf16.gmra.mrb[0].mxu0 %v136
  %v276 = vpop.f32.mrb[0].mxu0
  %v277 = vadd.f32 0.0, %v276
  %v278 = vpop.f32.mrb[0].mxu0
  %v279 = vpop.f32.mrb[0].mxu0
  %v280 = vadd.f32 0.0, %v279
  %v281 = vpop.f32.mrb[0].mxu0
  %282 = vmatprep.mubr.bf16.mxu0 0
  %283 = vmatmul.mubr.bf16.gmra.mrb[0].mxu0 %v137
  %v284 = vpop.f32.mrb[0].mxu0
  %v285 = vadd.f32 0.0, %v284
  %v286 = vpop.f32.mrb[0].mxu0
  %v287 = vpop.f32.mrb[0].mxu0
  %v288 = vadd.f32 0.0, %v287
  %v289 = vpop.f32.mrb[0].mxu0
  %290 = vdwg.mxu0
  %v291 = vadd.f32 %v50, %v229
  %v292 = vadd.f32 %v51, %v232
  %v293 = vadd.f32 %v52, %v237
  %v294 = vadd.f32 %v53, %v240
  %v295 = vadd.f32 %v54, %v245
  %v296 = vadd.f32 %v55, %v248
  %v297 = vadd.f32 %v56, %v253
  %v298 = vadd.f32 %v57, %v256
  %v299 = vadd.f32 %v58, %v261
  %v300 = vadd.f32 %v59, %v264
  %v301 = vadd.f32 %v60, %v269
  %v302 = vadd.f32 %v61, %v272
  %v303 = vadd.f32 %v62, %v277
  %v304 = vadd.f32 %v63, %v280
  %v305 = vadd.f32 %v64, %v285
  %v306 = vadd.f32 %v65, %v288
  %307 = vst [vmem:[#allocation2] sm:$0xff] %v291
  %308 = vst [vmem:[#allocation2 + $0x8] sm:$0xff] %v292
  %309 = vst [vmem:[#allocation2 + $0x10] sm:$0xff] %v293
  %310 = vst [vmem:[#allocation2 + $0x18] sm:$0xff] %v294
  %311 = vst [vmem:[#allocation2 + $0x20] sm:$0xff] %v295
  %312 = vst [vmem:[#allocation2 + $0x28] sm:$0xff] %v296
  %313 = vst [vmem:[#allocation2 + $0x30] sm:$0xff] %v297
  %314 = vst [vmem:[#allocation2 + $0x38] sm:$0xff] %v298
  %315 = vst [vmem:[#allocation2 + $0x40] sm:$0xff] %v299
  %316 = vst [vmem:[#allocation2 + $0x48] sm:$0xff] %v300
  %317 = vst [vmem:[#allocation2 + $0x50] sm:$0xff] %v301
  %318 = vst [vmem:[#allocation2 + $0x58] sm:$0xff] %v302
  %319 = vst [vmem:[#allocation2 + $0x60] sm:$0xff] %v303
  %320 = vst [vmem:[#allocation2 + $0x68] sm:$0xff] %v304
  %321 = vst [vmem:[#allocation2 + $0x70] sm:$0xff] %v305
  %322 = vst [vmem:[#allocation2 + $0x78] sm:$0xff] %v306
  // Predicated region
  $region38: #{hetero_gnn_forward.10} parent=0 // pred_check
    %p323 = pneg %p30
  $region39: #{hetero_gnn_forward.10} parent=0 // pred_check_branch
    %325 = sbr.rel (%p323) target = $region41
  $region40: #{hetero_gnn_forward.10} parent=0 // pred_region
    %v326 = vld [vmem:[#allocation2] sm:$0xff]
    %v327 = vld [vmem:[#allocation2 + $0x8] sm:$0xff]
    %v328 = vld [vmem:[#allocation2 + $0x10] sm:$0xff]
    %v329 = vld [vmem:[#allocation2 + $0x18] sm:$0xff]
    %v330 = vld [vmem:[#allocation2 + $0x20] sm:$0xff]
    %v331 = vld [vmem:[#allocation2 + $0x28] sm:$0xff]
    %v332 = vld [vmem:[#allocation2 + $0x30] sm:$0xff]
    %v333 = vld [vmem:[#allocation2 + $0x38] sm:$0xff]
    %v334 = vld [vmem:[#allocation2 + $0x40] sm:$0xff]
    %v335 = vld [vmem:[#allocation2 + $0x48] sm:$0xff]
    %v336 = vld [vmem:[#allocation2 + $0x50] sm:$0xff]
    %v337 = vld [vmem:[#allocation2 + $0x58] sm:$0xff]
    %v338 = vld [vmem:[#allocation2 + $0x60] sm:$0xff]
    %v339 = vld [vmem:[#allocation2 + $0x68] sm:$0xff]
    %v340 = vld [vmem:[#allocation2 + $0x70] sm:$0xff]
    %v341 = vld [vmem:[#allocation2 + $0x78] sm:$0xff]
    %v342 = vpack.c.bf16 %v327, %v326
    %v343 = vpack.c.bf16 %v329, %v328
    %v344 = vpack.c.bf16 %v331, %v330
    %v345 = vpack.c.bf16 %v333, %v332
    %v346 = vpack.c.bf16 %v335, %v334
    %v347 = vpack.c.bf16 %v337, %v336
    %v348 = vpack.c.bf16 %v339, %v338
    %v349 = vpack.c.bf16 %v341, %v340
    %v350 = vld [vmem:[%s3] sm:$0xf]
    %v351 = vld [vmem:[%s3 + $0x4] sm:$0xf]
    %v352 = vld [vmem:[%s3 + $0x8] sm:$0xf]
    %v353 = vld [vmem:[%s3 + $0xc] sm:$0xf]
    %v354 = vld [vmem:[%s3 + $0x10] sm:$0xf]
    %v355 = vld [vmem:[%s3 + $0x14] sm:$0xf]
    %v356 = vld [vmem:[%s3 + $0x18] sm:$0xf]
    %v357 = vld [vmem:[%s3 + $0x1c] sm:$0xf]
    %v358 = vld [vmem:[%s3 + $0x20] sm:$0xf]
    %v359 = vld [vmem:[%s3 + $0x24] sm:$0xf]
    %v360 = vld [vmem:[%s3 + $0x28] sm:$0xf]
    %v361 = vld [vmem:[%s3 + $0x2c] sm:$0xf]
    %v362 = vld [vmem:[%s3 + $0x30] sm:$0xf]
    %v363 = vld [vmem:[%s3 + $0x34] sm:$0xf]
    %v364 = vld [vmem:[%s3 + $0x38] sm:$0xf]
    %v365 = vld [vmem:[%s3 + $0x3c] sm:$0xf]
    %v366 = vld [vmem:[%s2] sm:$0xf]
    %v367 = vld [vmem:[%s2 + $0x4] sm:$0xf]
    %v368 = vld [vmem:[%s2 + $0x8] sm:$0xf]
    %v369 = vld [vmem:[%s2 + $0xc] sm:$0xf]
    %v370 = vld [vmem:[%s2 + $0x10] sm:$0xf]
    %v371 = vld [vmem:[%s2 + $0x14] sm:$0xf]
    %v372 = vld [vmem:[%s2 + $0x18] sm:$0xf]
    %v373 = vld [vmem:[%s2 + $0x1c] sm:$0xf]
    %v374 = vld [vmem:[%s2 + $0x20] sm:$0xf]
    %v375 = vld [vmem:[%s2 + $0x24] sm:$0xf]
    %v376 = vld [vmem:[%s2 + $0x28] sm:$0xf]
    %v377 = vld [vmem:[%s2 + $0x2c] sm:$0xf]
    %v378 = vld [vmem:[%s2 + $0x30] sm:$0xf]
    %v379 = vld [vmem:[%s2 + $0x34] sm:$0xf]
    %v380 = vld [vmem:[%s2 + $0x38] sm:$0xf]
    %v381 = vld [vmem:[%s2 + $0x3c] sm:$0xf]
    %v382 = vld [vmem:[%s4] sm:$0xf]
    %v383 = vld [vmem:[%s4 + $0x4] sm:$0xf]
    %v384 = vld [vmem:[%s4 + $0x8] sm:$0xf]
    %v385 = vld [vmem:[%s4 + $0xc] sm:$0xf]
    %v386 = vld [vmem:[%s4 + $0x10] sm:$0xf]
    %v387 = vld [vmem:[%s4 + $0x14] sm:$0xf]
    %v388 = vld [vmem:[%s4 + $0x18] sm:$0xf]
    %v389 = vld [vmem:[%s4 + $0x1c] sm:$0xf]
    %v390 = vld [vmem:[%s4 + $0x20] sm:$0xf]
    %v391 = vld [vmem:[%s4 + $0x24] sm:$0xf]
    %v392 = vld [vmem:[%s4 + $0x28] sm:$0xf]
    %v393 = vld [vmem:[%s4 + $0x2c] sm:$0xf]
    %v394 = vld [vmem:[%s4 + $0x30] sm:$0xf]
    %v395 = vld [vmem:[%s4 + $0x34] sm:$0xf]
    %v396 = vld [vmem:[%s4 + $0x38] sm:$0xf]
    %v397 = vld [vmem:[%s4 + $0x3c] sm:$0xf]
    %v414 = vunpack.c.l.b16 %v366
    %v415 = vunpack.c.l.b16 %v367
    %v416 = vunpack.c.l.b16 %v368
    %v417 = vunpack.c.l.b16 %v369
    %v418 = vunpack.c.l.b16 %v370
    %v419 = vunpack.c.l.b16 %v371
    %v420 = vunpack.c.l.b16 %v372
    %v421 = vunpack.c.l.b16 %v373
    %v422 = vunpack.c.l.b16 %v374
    %v423 = vunpack.c.l.b16 %v375
    %v424 = vunpack.c.l.b16 %v376
    %v425 = vunpack.c.l.b16 %v377
    %v426 = vunpack.c.l.b16 %v378
    %v427 = vunpack.c.l.b16 %v379
    %v428 = vunpack.c.l.b16 %v380
    %v429 = vunpack.c.l.b16 %v381
    %v430 = vpack.c.b16 %v415, %v414
    %v431 = vpack.c.b16 %v417, %v416
    %v432 = vpack.c.b16 %v419, %v418
    %v433 = vpack.c.b16 %v421, %v420
    %v434 = vpack.c.b16 %v423, %v422
    %v435 = vpack.c.b16 %v425, %v424
    %v436 = vpack.c.b16 %v427, %v426
    %v437 = vpack.c.b16 %v429, %v428
    %v462 = vunpack.c.l.b16 %v382
    %v463 = vunpack.c.l.b16 %v383
    %v464 = vunpack.c.l.b16 %v384
    %v465 = vunpack.c.l.b16 %v385
    %v466 = vunpack.c.l.b16 %v386
    %v467 = vunpack.c.l.b16 %v387
    %v468 = vunpack.c.l.b16 %v388
    %v469 = vunpack.c.l.b16 %v389
    %v470 = vunpack.c.l.b16 %v390
    %v471 = vunpack.c.l.b16 %v391
    %v472 = vunpack.c.l.b16 %v392
    %v473 = vunpack.c.l.b16 %v393
    %v474 = vunpack.c.l.b16 %v394
    %v475 = vunpack.c.l.b16 %v395
    %v476 = vunpack.c.l.b16 %v396
    %v477 = vunpack.c.l.b16 %v397
    %v478 = vpack.c.b16 %v463, %v462
    %v479 = vpack.c.b16 %v465, %v464
    %v480 = vpack.c.b16 %v467, %v466
    %v481 = vpack.c.b16 %v469, %v468
    %v482 = vpack.c.b16 %v471, %v470
    %v483 = vpack.c.b16 %v473, %v472
    %v484 = vpack.c.b16 %v475, %v474
    %v485 = vpack.c.b16 %v477, %v476
    %494 = vmatprep.subr.bf16.mxu0 0
    %495 = vmatpush1.bf16.msra.mxu0 %v478
    %496 = vmatprep.subr.bf16.mxu0 0
    %497 = vmatpush1.bf16.msra.mxu0 %v479
    %498 = vmatprep.subr.bf16.mxu0 0
    %499 = vmatpush1.bf16.msra.mxu0 %v480
    %500 = vmatprep.subr.bf16.mxu0 0
    %501 = vmatpush1.bf16.msra.mxu0 %v481
    %502 = vmatprep.subr.bf16.mxu0 0
    %503 = vmatpush1.bf16.msra.mxu0 %v482
    %504 = vmatprep.subr.bf16.mxu0 0
    %505 = vmatpush1.bf16.msra.mxu0 %v483
    %506 = vmatprep.subr.bf16.mxu0 0
    %507 = vmatpush1.bf16.msra.mxu0 %v484
    %508 = vmatprep.subr.bf16.mxu0 0
    %509 = vmatpush1.bf16.msra.mxu0 %v485
    %510 = vmatprep.subr.bf16.mxu0 0
    %511 = vmatpush1.bf16.msra.mxu0 0
    %512 = vmatprep.subr.bf16.mxu0 0
    %513 = vmatpush1.bf16.msra.mxu0 0
    %514 = vmatprep.subr.bf16.mxu0 0
    %515 = vmatpush1.bf16.msra.mxu0 0
    %516 = vmatprep.subr.bf16.mxu0 0
    %517 = vmatpush1.bf16.msra.mxu0 0
    %518 = vmatprep.subr.bf16.mxu0 0
    %519 = vmatpush1.bf16.msra.mxu0 0
    %520 = vmatprep.subr.bf16.mxu0 0
    %521 = vmatpush1.bf16.msra.mxu0 0
    %522 = vmatprep.subr.bf16.mxu0 0
    %523 = vmatpush1.bf16.msra.mxu0 0
    %524 = vmatprep.subr.bf16.mxu0 0
    %525 = vmatpush1.bf16.msra.mxu0 0
    %526 = vmatprep.mubr.bf16.mxu0 0
    %527 = vmatmul.mubr.bf16.gmra.mrb[0].mxu0 %v430
    %v528 = vpop.f32.mrb[0].mxu0
    %v529 = vadd.f32 0.0, %v528
    %v530 = vpop.f32.mrb[0].mxu0
    %v531 = vpop.f32.mrb[0].mxu0
    %v532 = vadd.f32 0.0, %v531
    %v533 = vpop.f32.mrb[0].mxu0
    %534 = vmatprep.mubr.bf16.mxu0 0
    %535 = vmatmul.mubr.bf16.gmra.mrb[0].mxu0 %v431
    %v536 = vpop.f32.mrb[0].mxu0
    %v537 = vadd.f32 0.0, %v536
    %v538 = vpop.f32.mrb[0].mxu0
    %v539 = vpop.f32.mrb[0].mxu0
    %v540 = vadd.f32 0.0, %v539
    %v541 = vpop.f32.mrb[0].mxu0
    %542 = vmatprep.mubr.bf16.mxu0 0
    %543 = vmatmul.mubr.bf16.gmra.mrb[0].mxu0 %v432
    %v544 = vpop.f32.mrb[0].mxu0
    %v545 = vadd.f32 0.0, %v544
    %v546 = vpop.f32.mrb[0].mxu0
    %v547 = vpop.f32.mrb[0].mxu0
    %v548 = vadd.f32 0.0, %v547
    %v549 = vpop.f32.mrb[0].mxu0
    %550 = vmatprep.mubr.bf16.mxu0 0
    %551 = vmatmul.mubr.bf16.gmra.mrb[0].mxu0 %v433
    %v552 = vpop.f32.mrb[0].mxu0
    %v553 = vadd.f32 0.0, %v552
    %v554 = vpop.f32.mrb[0].mxu0
    %v555 = vpop.f32.mrb[0].mxu0
    %v556 = vadd.f32 0.0, %v555
    %v557 = vpop.f32.mrb[0].mxu0
    %558 = vmatprep.mubr.bf16.mxu0 0
    %559 = vmatmul.mubr.bf16.gmra.mrb[0].mxu0 %v434
    %v560 = vpop.f32.mrb[0].mxu0
    %v561 = vadd.f32 0.0, %v560
    %v562 = vpop.f32.mrb[0].mxu0
    %v563 = vpop.f32.mrb[0].mxu0
    %v564 = vadd.f32 0.0, %v563
    %v565 = vpop.f32.mrb[0].mxu0
    %566 = vmatprep.mubr.bf16.mxu0 0
    %567 = vmatmul.mubr.bf16.gmra.mrb[0].mxu0 %v435
    %v568 = vpop.f32.mrb[0].mxu0
    %v569 = vadd.f32 0.0, %v568
    %v570 = vpop.f32.mrb[0].mxu0
    %v571 = vpop.f32.mrb[0].mxu0
    %v572 = vadd.f32 0.0, %v571
    %v573 = vpop.f32.mrb[0].mxu0
    %574 = vmatprep.mubr.bf16.mxu0 0
    %575 = vmatmul.mubr.bf16.gmra.mrb[0].mxu0 %v436
    %v576 = vpop.f32.mrb[0].mxu0
    %v577 = vadd.f32 0.0, %v576
    %v578 = vpop.f32.mrb[0].mxu0
    %v579 = vpop.f32.mrb[0].mxu0
    %v580 = vadd.f32 0.0, %v579
    %v581 = vpop.f32.mrb[0].mxu0
    %582 = vmatprep.mubr.bf16.mxu0 0
    %583 = vmatmul.mubr.bf16.gmra.mrb[0].mxu0 %v437
    %v584 = vpop.f32.mrb[0].mxu0
    %v585 = vadd.f32 0.0, %v584
    %v586 = vpop.f32.mrb[0].mxu0
    %v587 = vpop.f32.mrb[0].mxu0
    %v588 = vadd.f32 0.0, %v587
    %v589 = vpop.f32.mrb[0].mxu0
    %590 = vdwg.mxu0
    %v607 = vunpack.c.l.b16 %v350
    %v608 = vunpack.c.l.b16 %v351
    %v609 = vunpack.c.l.b16 %v352
    %v610 = vunpack.c.l.b16 %v353
    %v611 = vunpack.c.l.b16 %v354
    %v612 = vunpack.c.l.b16 %v355
    %v613 = vunpack.c.l.b16 %v356
    %v614 = vunpack.c.l.b16 %v357
    %v615 = vunpack.c.l.b16 %v358
    %v616 = vunpack.c.l.b16 %v359
    %v617 = vunpack.c.l.b16 %v360
    %v618 = vunpack.c.l.b16 %v361
    %v619 = vunpack.c.l.b16 %v362
    %v620 = vunpack.c.l.b16 %v363
    %v621 = vunpack.c.l.b16 %v364
    %v622 = vunpack.c.l.b16 %v365
    %v623 = vpack.c.b16 %v608, %v607
    %v624 = vpack.c.b16 %v610, %v609
    %v625 = vpack.c.b16 %v612, %v611
    %v626 = vpack.c.b16 %v614, %v613
    %v627 = vpack.c.b16 %v616, %v615
    %v628 = vpack.c.b16 %v618, %v617
    %v629 = vpack.c.b16 %v620, %v619
    %v630 = vpack.c.b16 %v622, %v621
    %639 = vmatprep.subr.bf16.mxu0 0
    %640 = vmatpush1.bf16.msra.mxu0 %v623
    %641 = vmatprep.subr.bf16.mxu0 0
    %642 = vmatpush1.bf16.msra.mxu0 %v624
    %643 = vmatprep.subr.bf16.mxu0 0
    %644 = vmatpush1.bf16.msra.mxu0 %v625
    %645 = vmatprep.subr.bf16.mxu0 0
    %646 = vmatpush1.bf16.msra.mxu0 %v626
    %647 = vmatprep.subr.bf16.mxu0 0
    %648 = vmatpush1.bf16.msra.mxu0 %v627
    %649 = vmatprep.subr.bf16.mxu0 0
    %650 = vmatpush1.bf16.msra.mxu0 %v628
    %651 = vmatprep.subr.bf16.mxu0 0
    %652 = vmatpush1.bf16.msra.mxu0 %v629
    %653 = vmatprep.subr.bf16.mxu0 0
    %654 = vmatpush1.bf16.msra.mxu0 %v630
    %655 = vmatprep.subr.bf16.mxu0 0
    %656 = vmatpush1.bf16.msra.mxu0 0
    %657 = vmatprep.subr.bf16.mxu0 0
    %658 = vmatpush1.bf16.msra.mxu0 0
    %659 = vmatprep.subr.bf16.mxu0 0
    %660 = vmatpush1.bf16.msra.mxu0 0
    %661 = vmatprep.subr.bf16.mxu0 0
    %662 = vmatpush1.bf16.msra.mxu0 0
    %663 = vmatprep.subr.bf16.mxu0 0
    %664 = vmatpush1.bf16.msra.mxu0 0
    %665 = vmatprep.subr.bf16.mxu0 0
    %666 = vmatpush1.bf16.msra.mxu0 0
    %667 = vmatprep.subr.bf16.mxu0 0
    %668 = vmatpush1.bf16.msra.mxu0 0
    %669 = vmatprep.subr.bf16.mxu0 0
    %670 = vmatpush1.bf16.msra.mxu0 0
    %671 = vmatprep.mubr.bf16.mxu0 0
    %672 = vmatmul.mubr.bf16.gmra.mrb[0].mxu0 %v342
    %v673 = vpop.f32.mrb[0].mxu0
    %v674 = vadd.f32 %v529, %v673
    %v675 = vpop.f32.mrb[0].mxu0
    %v676 = vpop.f32.mrb[0].mxu0
    %v677 = vadd.f32 %v532, %v676
    %v678 = vpop.f32.mrb[0].mxu0
    %679 = vmatprep.mubr.bf16.mxu0 0
    %680 = vmatmul.mubr.bf16.gmra.mrb[0].mxu0 %v343
    %v681 = vpop.f32.mrb[0].mxu0
    %v682 = vadd.f32 %v537, %v681
    %v683 = vpop.f32.mrb[0].mxu0
    %v684 = vpop.f32.mrb[0].mxu0
    %v685 = vadd.f32 %v540, %v684
    %v686 = vpop.f32.mrb[0].mxu0
    %687 = vmatprep.mubr.bf16.mxu0 0
    %688 = vmatmul.mubr.bf16.gmra.mrb[0].mxu0 %v344
    %v689 = vpop.f32.mrb[0].mxu0
    %v690 = vadd.f32 %v545, %v689
    %v691 = vpop.f32.mrb[0].mxu0
    %v692 = vpop.f32.mrb[0].mxu0
    %v693 = vadd.f32 %v548, %v692
    %v694 = vpop.f32.mrb[0].mxu0
    %695 = vmatprep.mubr.bf16.mxu0 0
    %696 = vmatmul.mubr.bf16.gmra.mrb[0].mxu0 %v345
    %v697 = vpop.f32.mrb[0].mxu0
    %v698 = vadd.f32 %v553, %v697
    %v699 = vpop.f32.mrb[0].mxu0
    %v700 = vpop.f32.mrb[0].mxu0
    %v701 = vadd.f32 %v556, %v700
    %v702 = vpop.f32.mrb[0].mxu0
    %703 = vmatprep.mubr.bf16.mxu0 0
    %704 = vmatmul.mubr.bf16.gmra.mrb[0].mxu0 %v346
    %v705 = vpop.f32.mrb[0].mxu0
    %v706 = vadd.f32 %v561, %v705
    %v707 = vpop.f32.mrb[0].mxu0
    %v708 = vpop.f32.mrb[0].mxu0
    %v709 = vadd.f32 %v564, %v708
    %v710 = vpop.f32.mrb[0].mxu0
    %711 = vmatprep.mubr.bf16.mxu0 0
    %712 = vmatmul.mubr.bf16.gmra.mrb[0].mxu0 %v347
    %v713 = vpop.f32.mrb[0].mxu0
    %v714 = vadd.f32 %v569, %v713
    %v715 = vpop.f32.mrb[0].mxu0
    %v716 = vpop.f32.mrb[0].mxu0
    %v717 = vadd.f32 %v572, %v716
    %v718 = vpop.f32.mrb[0].mxu0
    %719 = vmatprep.mubr.bf16.mxu0 0
    %720 = vmatmul.mubr.bf16.gmra.mrb[0].mxu0 %v348
    %v721 = vpop.f32.mrb[0].mxu0
    %v722 = vadd.f32 %v577, %v721
    %v723 = vpop.f32.mrb[0].mxu0
    %v724 = vpop.f32.mrb[0].mxu0
    %v725 = vadd.f32 %v580, %v724
    %v726 = vpop.f32.mrb[0].mxu0
    %727 = vmatprep.mubr.bf16.mxu0 0
    %728 = vmatmul.mubr.bf16.gmra.mrb[0].mxu0 %v349
    %v729 = vpop.f32.mrb[0].mxu0
    %v730 = vadd.f32 %v585, %v729
    %v731 = vpop.f32.mrb[0].mxu0
    %v732 = vpop.f32.mrb[0].mxu0
    %v733 = vadd.f32 %v588, %v732
    %v734 = vpop.f32.mrb[0].mxu0
    %735 = vdwg.mxu0
    %v736 = vld [vmem:[%s5] sm:$0x1]
    %v738 = vlaneseq
    %v739 = vshrl.u32 %v738, 7
    %v740 = vsub.s32 0, %v739
    %v741 = vrot.slane %v736, %v740
    %v743 = vadd.f32 %v674, %v741
    %v744 = vadd.f32 %v677, %v741
    %v745 = vadd.f32 %v682, %v741
    %v746 = vadd.f32 %v685, %v741
    %v747 = vadd.f32 %v690, %v741
    %v748 = vadd.f32 %v693, %v741
    %v749 = vadd.f32 %v698, %v741
    %v750 = vadd.f32 %v701, %v741
    %v751 = vadd.f32 %v706, %v741
    %v752 = vadd.f32 %v709, %v741
    %v753 = vadd.f32 %v714, %v741
    %v754 = vadd.f32 %v717, %v741
    %v755 = vadd.f32 %v722, %v741
    %v756 = vadd.f32 %v725, %v741
    %v757 = vadd.f32 %v730, %v741
    %v758 = vadd.f32 %v733, %v741
    %v759 = vmax.f32 %v743, 0.0
    %v760 = vmax.f32 %v744, 0.0
    %v761 = vmax.f32 %v745, 0.0
    %v762 = vmax.f32 %v746, 0.0
    %v763 = vmax.f32 %v747, 0.0
    %v764 = vmax.f32 %v748, 0.0
    %v765 = vmax.f32 %v749, 0.0
    %v766 = vmax.f32 %v750, 0.0
    %v767 = vmax.f32 %v751, 0.0
    %v768 = vmax.f32 %v752, 0.0
    %v769 = vmax.f32 %v753, 0.0
    %v770 = vmax.f32 %v754, 0.0
    %v771 = vmax.f32 %v755, 0.0
    %v772 = vmax.f32 %v756, 0.0
    %v773 = vmax.f32 %v757, 0.0
    %v774 = vmax.f32 %v758, 0.0
    %v775 = vld [vmem:[%s6] sm:$0x1]
    %v777 = vlaneseq
    %v778 = vshrl.u32 %v777, 7
    %v779 = vsub.s32 0, %v778
    %v780 = vrot.slane %v775, %v779
    %v782 = vmul.f32 %v759, %v780
    %v783 = vmul.f32 %v760, %v780
    %v784 = vmul.f32 %v761, %v780
    %v785 = vmul.f32 %v762, %v780
    %v786 = vmul.f32 %v763, %v780
    %v787 = vmul.f32 %v764, %v780
    %v788 = vmul.f32 %v765, %v780
    %v789 = vmul.f32 %v766, %v780
    %v790 = vmul.f32 %v767, %v780
    %v791 = vmul.f32 %v768, %v780
    %v792 = vmul.f32 %v769, %v780
    %v793 = vmul.f32 %v770, %v780
    %v794 = vmul.f32 %v771, %v780
    %v795 = vmul.f32 %v772, %v780
    %v796 = vmul.f32 %v773, %v780
    %v797 = vmul.f32 %v774, %v780
    %v798 = vld [vmem:[%s7] sm:$0x1]
    %v800 = vlaneseq
    %v801 = vshrl.u32 %v800, 7
    %v802 = vsub.s32 0, %v801
    %v803 = vrot.slane %v798, %v802
    %v805 = vadd.f32 %v782, %v803
    %v806 = vadd.f32 %v783, %v803
    %v807 = vadd.f32 %v784, %v803
    %v808 = vadd.f32 %v785, %v803
    %v809 = vadd.f32 %v786, %v803
    %v810 = vadd.f32 %v787, %v803
    %v811 = vadd.f32 %v788, %v803
    %v812 = vadd.f32 %v789, %v803
    %v813 = vadd.f32 %v790, %v803
    %v814 = vadd.f32 %v791, %v803
    %v815 = vadd.f32 %v792, %v803
    %v816 = vadd.f32 %v793, %v803
    %v817 = vadd.f32 %v794, %v803
    %v818 = vadd.f32 %v795, %v803
    %v819 = vadd.f32 %v796, %v803
    %v820 = vadd.f32 %v797, %v803
    %v821 = vpack.c.bf16 %v806, %v805
    %v822 = vpack.c.bf16 %v808, %v807
    %v823 = vpack.c.bf16 %v810, %v809
    %v824 = vpack.c.bf16 %v812, %v811
    %v825 = vpack.c.bf16 %v814, %v813
    %v826 = vpack.c.bf16 %v816, %v815
    %v827 = vpack.c.bf16 %v818, %v817
    %v828 = vpack.c.bf16 %v820, %v819
    %v837 = vunpack.c.l.b16 %v821
    %v838 = vunpack.c.h.b16 %v821
    %v839 = vunpack.c.l.b16 %v822
    %v840 = vunpack.c.h.b16 %v822
    %v841 = vunpack.c.l.b16 %v823
    %v842 = vunpack.c.h.b16 %v823
    %v843 = vunpack.c.l.b16 %v824
    %v844 = vunpack.c.h.b16 %v824
    %v845 = vunpack.c.l.b16 %v825
    %v846 = vunpack.c.h.b16 %v825
    %v847 = vunpack.c.l.b16 %v826
    %v848 = vunpack.c.h.b16 %v826
    %v849 = vunpack.c.l.b16 %v827
    %v850 = vunpack.c.h.b16 %v827
    %v851 = vunpack.c.l.b16 %v828
    %v852 = vunpack.c.h.b16 %v828
    %v853 = vpack.c.b16 %v837, %v837
    %v854 = vpack.c.b16 %v838, %v838
    %v855 = vpack.c.b16 %v839, %v839
    %v856 = vpack.c.b16 %v840, %v840
    %v857 = vpack.c.b16 %v841, %v841
    %v858 = vpack.c.b16 %v842, %v842
    %v859 = vpack.c.b16 %v843, %v843
    %v860 = vpack.c.b16 %v844, %v844
    %v861 = vpack.c.b16 %v845, %v845
    %v862 = vpack.c.b16 %v846, %v846
    %v863 = vpack.c.b16 %v847, %v847
    %v864 = vpack.c.b16 %v848, %v848
    %v865 = vpack.c.b16 %v849, %v849
    %v866 = vpack.c.b16 %v850, %v850
    %v867 = vpack.c.b16 %v851, %v851
    %v868 = vpack.c.b16 %v852, %v852
    %885 = vst [vmem:[%s8] sm:$0xf] %v853
    %886 = vst [vmem:[%s8 + $0x4] sm:$0xf] %v854
    %887 = vst [vmem:[%s8 + $0x8] sm:$0xf] %v855
    %888 = vst [vmem:[%s8 + $0xc] sm:$0xf] %v856
    %889 = vst [vmem:[%s8 + $0x10] sm:$0xf] %v857
    %890 = vst [vmem:[%s8 + $0x14] sm:$0xf] %v858
    %891 = vst [vmem:[%s8 + $0x18] sm:$0xf] %v859
    %892 = vst [vmem:[%s8 + $0x1c] sm:$0xf] %v860
    %893 = vst [vmem:[%s8 + $0x20] sm:$0xf] %v861
    %894 = vst [vmem:[%s8 + $0x24] sm:$0xf] %v862
    %895 = vst [vmem:[%s8 + $0x28] sm:$0xf] %v863
    %896 = vst [vmem:[%s8 + $0x2c] sm:$0xf] %v864
    %897 = vst [vmem:[%s8 + $0x30] sm:$0xf] %v865
    %898 = vst [vmem:[%s8 + $0x34] sm:$0xf] %v866
    %899 = vst [vmem:[%s8 + $0x38] sm:$0xf] %v867
    %900 = vst [vmem:[%s8 + $0x3c] sm:$0xf] %v868
  $region41: #{hetero_gnn_forward.10} parent=0 // pred_fallthru
    _
  // Predicated region
  $region42: #{hetero_gnn_forward.10} parent=0 // pred_check
    _
  $region43: #{hetero_gnn_forward.10} parent=0 // pred_check_branch
    %902 = sbr.rel (0) target = $region45
  $region44: #{hetero_gnn_forward.10} parent=0 // pred_region
    _
  $region45: #{hetero_gnn_forward.10} parent=0 // pred_fallthru
    _
  // Predicated region
  $region46: #{hetero_gnn_forward.10} parent=0 // pred_check
    _
  $region47: #{hetero_gnn_forward.10} parent=0 // pred_check_branch
    %904 = sbr.rel (0) target = $region49
  $region48: #{hetero_gnn_forward.10} parent=0 // pred_region
    _
  $region49: #{hetero_gnn_forward.10} parent=0 // pred_fallthru
    _

// kernel: hetero_gnn_forward.11
$region0: #{hetero_gnn_forward.11}
  #allocation0 [shape = 'u32[]', space=smem, size = 0x4, offset = 0x4, fixed_abs, tag = 'smem constant byte address 0x4 - core index']
  #allocation1 [shape = 'u32[144,128]{1,0:T(1,128)}', space=vmem, size = 0x12000, scoped, tag = 'internal scratch']
  #allocation2 [shape = 'f32[1,1]{1,0:T(1,128)S(1)}', space=vmem, size = 0x200, scoped, tag = 'scoped memory for hetero_gnn_forward.11']
  %s0 = inlined_call_operand.vmem [shape: bf16[24,128], index: 0, kind: input, shape index: {}]
  %s1 = inlined_call_operand.vmem [shape: bf16[24,128], index: 1, kind: input, shape index: {}]
  %s2 = inlined_call_operand.vmem [shape: bf16[128,128], index: 2, kind: input, shape index: {}]
  %s3 = inlined_call_operand.vmem [shape: bf16[128,128], index: 3, kind: input, shape index: {}]
  %s4 = inlined_call_operand.vmem [shape: f32[1,128], index: 4, kind: input, shape index: {}]
  %s5 = inlined_call_operand.vmem [shape: f32[1,128], index: 5, kind: input, shape index: {}]
  %s6 = inlined_call_operand.<no memory space> [shape: f32[1,1], index: 6, kind: input, shape index: {}]
  %s7 = inlined_call_operand.vmem [shape: f32[1,24], index: 7, kind: output, shape index: {}]
  %s8 = sld [smem:[#allocation0]]
  $region38: #{hetero_gnn_forward.11} parent=0
    _
  %s10 = ssub.s32 1, %s8
  %s11 = scalar_select 0, %s10, %s8
  %v12 = vstv %s6
  %13 = vst [vmem:[#allocation2] sm:$0x1] %v12
  // Predicated region
  $region2: #{hetero_gnn_forward.11} parent=0 // pred_check
    _
  $region3: #{hetero_gnn_forward.11} parent=0 // pred_check_branch
    %15 = sbr.rel (0) target = $region5
  $region4: #{hetero_gnn_forward.11} parent=0 // pred_region
    _
  $region5: #{hetero_gnn_forward.11} parent=0 // pred_fallthru
    _
  // Predicated region
  $region6: #{hetero_gnn_forward.11} parent=0 // pred_check
    _
  $region7: #{hetero_gnn_forward.11} parent=0 // pred_check_branch
    %17 = sbr.rel (0) target = $region9
  $region8: #{hetero_gnn_forward.11} parent=0 // pred_region
    _
  $region9: #{hetero_gnn_forward.11} parent=0 // pred_fallthru
    _
  // Predicated region
  $region10: #{hetero_gnn_forward.11} parent=0 // pred_check
    _
  $region11: #{hetero_gnn_forward.11} parent=0 // pred_check_branch
    %19 = sbr.rel (0) target = $region13
  $region12: #{hetero_gnn_forward.11} parent=0 // pred_region
    _
  $region13: #{hetero_gnn_forward.11} parent=0 // pred_fallthru
    _
  // Predicated region
  $region14: #{hetero_gnn_forward.11} parent=0 // pred_check
    _
  $region15: #{hetero_gnn_forward.11} parent=0 // pred_check_branch
    %21 = sbr.rel (0) target = $region17
  $region16: #{hetero_gnn_forward.11} parent=0 // pred_region
    _
  $region17: #{hetero_gnn_forward.11} parent=0 // pred_fallthru
    _
  // Predicated region
  $region18: #{hetero_gnn_forward.11} parent=0 // pred_check
    _
  $region19: #{hetero_gnn_forward.11} parent=0 // pred_check_branch
    %23 = sbr.rel (0) target = $region21
  $region20: #{hetero_gnn_forward.11} parent=0 // pred_region
    _
  $region21: #{hetero_gnn_forward.11} parent=0 // pred_fallthru
    _
  // Predicated region
  $region22: #{hetero_gnn_forward.11} parent=0 // pred_check
    _
  $region23: #{hetero_gnn_forward.11} parent=0 // pred_check_branch
    %25 = sbr.rel (0) target = $region25
  $region24: #{hetero_gnn_forward.11} parent=0 // pred_region
    _
  $region25: #{hetero_gnn_forward.11} parent=0 // pred_fallthru
    _
  // Predicated region
  $region26: #{hetero_gnn_forward.11} parent=0 // pred_check
    _
  $region27: #{hetero_gnn_forward.11} parent=0 // pred_check_branch
    %27 = sbr.rel (0) target = $region29
  $region28: #{hetero_gnn_forward.11} parent=0 // pred_region
    _
  $region29: #{hetero_gnn_forward.11} parent=0 // pred_fallthru
    _
  %v29 = vld [vmem:[%s0] sm:$0xf]
  %v30 = vld [vmem:[%s0 + $0x4] sm:$0xf]
  %v31 = vld [vmem:[%s0 + $0x8] sm:$0xf]
  %v32 = vld [vmem:[%s2] sm:$0xf]
  %v33 = vld [vmem:[%s2 + $0x4] sm:$0xf]
  %v34 = vld [vmem:[%s2 + $0x8] sm:$0xf]
  %v35 = vld [vmem:[%s2 + $0xc] sm:$0xf]
  %v36 = vld [vmem:[%s2 + $0x10] sm:$0xf]
  %v37 = vld [vmem:[%s2 + $0x14] sm:$0xf]
  %v38 = vld [vmem:[%s2 + $0x18] sm:$0xf]
  %v39 = vld [vmem:[%s2 + $0x1c] sm:$0xf]
  %v40 = vld [vmem:[%s2 + $0x20] sm:$0xf]
  %v41 = vld [vmem:[%s2 + $0x24] sm:$0xf]
  %v42 = vld [vmem:[%s2 + $0x28] sm:$0xf]
  %v43 = vld [vmem:[%s2 + $0x2c] sm:$0xf]
  %v44 = vld [vmem:[%s2 + $0x30] sm:$0xf]
  %v45 = vld [vmem:[%s2 + $0x34] sm:$0xf]
  %v46 = vld [vmem:[%s2 + $0x38] sm:$0xf]
  %v47 = vld [vmem:[%s2 + $0x3c] sm:$0xf]
  %v48 = vld [vmem:[%s1] sm:$0xf]
  %v49 = vld [vmem:[%s1 + $0x4] sm:$0xf]
  %v50 = vld [vmem:[%s1 + $0x8] sm:$0xf]
  %v51 = vld [vmem:[%s3] sm:$0xf]
  %v52 = vld [vmem:[%s3 + $0x4] sm:$0xf]
  %v53 = vld [vmem:[%s3 + $0x8] sm:$0xf]
  %v54 = vld [vmem:[%s3 + $0xc] sm:$0xf]
  %v55 = vld [vmem:[%s3 + $0x10] sm:$0xf]
  %v56 = vld [vmem:[%s3 + $0x14] sm:$0xf]
  %v57 = vld [vmem:[%s3 + $0x18] sm:$0xf]
  %v58 = vld [vmem:[%s3 + $0x1c] sm:$0xf]
  %v59 = vld [vmem:[%s3 + $0x20] sm:$0xf]
  %v60 = vld [vmem:[%s3 + $0x24] sm:$0xf]
  %v61 = vld [vmem:[%s3 + $0x28] sm:$0xf]
  %v62 = vld [vmem:[%s3 + $0x2c] sm:$0xf]
  %v63 = vld [vmem:[%s3 + $0x30] sm:$0xf]
  %v64 = vld [vmem:[%s3 + $0x34] sm:$0xf]
  %v65 = vld [vmem:[%s3 + $0x38] sm:$0xf]
  %v66 = vld [vmem:[%s3 + $0x3c] sm:$0xf]
  %v70 = vunpack.c.l.b16 %v48
  %v71 = vunpack.c.l.b16 %v49
  %v72 = vunpack.c.l.b16 %v50
  %v73 = vpack.c.b16 %v71, %v70
  %v74 = vpack.c.b16 %v72, %v72
  %v93 = vunpack.c.l.b16 %v51
  %v94 = vunpack.c.l.b16 %v52
  %v95 = vunpack.c.l.b16 %v53
  %v96 = vunpack.c.l.b16 %v54
  %v97 = vunpack.c.l.b16 %v55
  %v98 = vunpack.c.l.b16 %v56
  %v99 = vunpack.c.l.b16 %v57
  %v100 = vunpack.c.l.b16 %v58
  %v101 = vunpack.c.l.b16 %v59
  %v102 = vunpack.c.l.b16 %v60
  %v103 = vunpack.c.l.b16 %v61
  %v104 = vunpack.c.l.b16 %v62
  %v105 = vunpack.c.l.b16 %v63
  %v106 = vunpack.c.l.b16 %v64
  %v107 = vunpack.c.l.b16 %v65
  %v108 = vunpack.c.l.b16 %v66
  %v109 = vpack.c.b16 %v94, %v93
  %v110 = vpack.c.b16 %v96, %v95
  %v111 = vpack.c.b16 %v98, %v97
  %v112 = vpack.c.b16 %v100, %v99
  %v113 = vpack.c.b16 %v102, %v101
  %v114 = vpack.c.b16 %v104, %v103
  %v115 = vpack.c.b16 %v106, %v105
  %v116 = vpack.c.b16 %v108, %v107
  %125 = vmatprep.subr.bf16.mxu0 0
  %126 = vmatpush1.bf16.msra.mxu0 %v109
  %127 = vmatprep.subr.bf16.mxu0 0
  %128 = vmatpush1.bf16.msra.mxu0 %v110
  %129 = vmatprep.subr.bf16.mxu0 0
  %130 = vmatpush1.bf16.msra.mxu0 %v111
  %131 = vmatprep.subr.bf16.mxu0 0
  %132 = vmatpush1.bf16.msra.mxu0 %v112
  %133 = vmatprep.subr.bf16.mxu0 0
  %134 = vmatpush1.bf16.msra.mxu0 %v113
  %135 = vmatprep.subr.bf16.mxu0 0
  %136 = vmatpush1.bf16.msra.mxu0 %v114
  %137 = vmatprep.subr.bf16.mxu0 0
  %138 = vmatpush1.bf16.msra.mxu0 %v115
  %139 = vmatprep.subr.bf16.mxu0 0
  %140 = vmatpush1.bf16.msra.mxu0 %v116
  %141 = vmatprep.subr.bf16.mxu0 0
  %142 = vmatpush1.bf16.msra.mxu0 0
  %143 = vmatprep.subr.bf16.mxu0 0
  %144 = vmatpush1.bf16.msra.mxu0 0
  %145 = vmatprep.subr.bf16.mxu0 0
  %146 = vmatpush1.bf16.msra.mxu0 0
  %147 = vmatprep.subr.bf16.mxu0 0
  %148 = vmatpush1.bf16.msra.mxu0 0
  %149 = vmatprep.subr.bf16.mxu0 0
  %150 = vmatpush1.bf16.msra.mxu0 0
  %151 = vmatprep.subr.bf16.mxu0 0
  %152 = vmatpush1.bf16.msra.mxu0 0
  %153 = vmatprep.subr.bf16.mxu0 0
  %154 = vmatpush1.bf16.msra.mxu0 0
  %155 = vmatprep.subr.bf16.mxu0 0
  %156 = vmatpush1.bf16.msra.mxu0 0
  %157 = vmatprep.mubr.bf16.mxu0 0
  %158 = vmatmul.mubr.bf16.gmra.mrb[0].mxu0 %v73
  %v159 = vpop.f32.mrb[0].mxu0
  %v160 = vadd.f32 0.0, %v159
  %v161 = vpop.f32.mrb[0].mxu0
  %v162 = vpop.f32.mrb[0].mxu0
  %v163 = vadd.f32 0.0, %v162
  %v164 = vpop.f32.mrb[0].mxu0
  %165 = vmatprep.mubr.bf16.mxu0 0
  %166 = vmatmul.mubr.bf16.gmra.mrb[0].mxu0 %v74
  %v167 = vpop.f32.mrb[0].mxu0
  %v168 = vadd.f32 0.0, %v167
  %v169 = vpop.f32.mrb[0].mxu0
  %v170 = vpop.f32.mrb[0].mxu0
  %v171 = vpop.f32.mrb[0].mxu0
  %172 = vdwg.mxu0
  %v176 = vunpack.c.l.b16 %v29
  %v177 = vunpack.c.l.b16 %v30
  %v178 = vunpack.c.l.b16 %v31
  %v179 = vpack.c.b16 %v177, %v176
  %v180 = vpack.c.b16 %v178, %v178
  %v199 = vunpack.c.l.b16 %v32
  %v200 = vunpack.c.l.b16 %v33
  %v201 = vunpack.c.l.b16 %v34
  %v202 = vunpack.c.l.b16 %v35
  %v203 = vunpack.c.l.b16 %v36
  %v204 = vunpack.c.l.b16 %v37
  %v205 = vunpack.c.l.b16 %v38
  %v206 = vunpack.c.l.b16 %v39
  %v207 = vunpack.c.l.b16 %v40
  %v208 = vunpack.c.l.b16 %v41
  %v209 = vunpack.c.l.b16 %v42
  %v210 = vunpack.c.l.b16 %v43
  %v211 = vunpack.c.l.b16 %v44
  %v212 = vunpack.c.l.b16 %v45
  %v213 = vunpack.c.l.b16 %v46
  %v214 = vunpack.c.l.b16 %v47
  %v215 = vpack.c.b16 %v200, %v199
  %v216 = vpack.c.b16 %v202, %v201
  %v217 = vpack.c.b16 %v204, %v203
  %v218 = vpack.c.b16 %v206, %v205
  %v219 = vpack.c.b16 %v208, %v207
  %v220 = vpack.c.b16 %v210, %v209
  %v221 = vpack.c.b16 %v212, %v211
  %v222 = vpack.c.b16 %v214, %v213
  %231 = vmatprep.subr.bf16.mxu0 0
  %232 = vmatpush1.bf16.msra.mxu0 %v215
  %233 = vmatprep.subr.bf16.mxu0 0
  %234 = vmatpush1.bf16.msra.mxu0 %v216
  %235 = vmatprep.subr.bf16.mxu0 0
  %236 = vmatpush1.bf16.msra.mxu0 %v217
  %237 = vmatprep.subr.bf16.mxu0 0
  %238 = vmatpush1.bf16.msra.mxu0 %v218
  %239 = vmatprep.subr.bf16.mxu0 0
  %240 = vmatpush1.bf16.msra.mxu0 %v219
  %241 = vmatprep.subr.bf16.mxu0 0
  %242 = vmatpush1.bf16.msra.mxu0 %v220
  %243 = vmatprep.subr.bf16.mxu0 0
  %244 = vmatpush1.bf16.msra.mxu0 %v221
  %245 = vmatprep.subr.bf16.mxu0 0
  %246 = vmatpush1.bf16.msra.mxu0 %v222
  %247 = vmatprep.subr.bf16.mxu0 0
  %248 = vmatpush1.bf16.msra.mxu0 0
  %249 = vmatprep.subr.bf16.mxu0 0
  %250 = vmatpush1.bf16.msra.mxu0 0
  %251 = vmatprep.subr.bf16.mxu0 0
  %252 = vmatpush1.bf16.msra.mxu0 0
  %253 = vmatprep.subr.bf16.mxu0 0
  %254 = vmatpush1.bf16.msra.mxu0 0
  %255 = vmatprep.subr.bf16.mxu0 0
  %256 = vmatpush1.bf16.msra.mxu0 0
  %257 = vmatprep.subr.bf16.mxu0 0
  %258 = vmatpush1.bf16.msra.mxu0 0
  %259 = vmatprep.subr.bf16.mxu0 0
  %260 = vmatpush1.bf16.msra.mxu0 0
  %261 = vmatprep.subr.bf16.mxu0 0
  %262 = vmatpush1.bf16.msra.mxu0 0
  %263 = vmatprep.mubr.bf16.mxu0 0
  %264 = vmatmul.mubr.bf16.gmra.mrb[0].mxu0 %v179
  %v265 = vpop.f32.mrb[0].mxu0
  %v266 = vadd.f32 %v160, %v265
  %v267 = vpop.f32.mrb[0].mxu0
  %v268 = vpop.f32.mrb[0].mxu0
  %v269 = vadd.f32 %v163, %v268
  %v270 = vpop.f32.mrb[0].mxu0
  %271 = vmatprep.mubr.bf16.mxu0 0
  %272 = vmatmul.mubr.bf16.gmra.mrb[0].mxu0 %v180
  %v273 = vpop.f32.mrb[0].mxu0
  %v274 = vadd.f32 %v168, %v273
  %v275 = vpop.f32.mrb[0].mxu0
  %v276 = vpop.f32.mrb[0].mxu0
  %v277 = vpop.f32.mrb[0].mxu0
  %278 = vdwg.mxu0
  %v279 = vld [vmem:[%s4] sm:$0x1]
  %v281 = vlaneseq
  %v282 = vshrl.u32 %v281, 7
  %v283 = vsub.s32 0, %v282
  %v284 = vrot.slane %v279, %v283
  %v286 = vadd.f32 %v266, %v284
  %v287 = vadd.f32 %v269, %v284
  %v288 = vadd.f32 %v274, %v284
  %v289 = vmax.f32 %v286, 0.0
  %v290 = vmax.f32 %v287, 0.0
  %v291 = vmax.f32 %v288, 0.0
  %v292 = vld [vmem:[%s5] sm:$0x1]
  %v293 = vld [vmem:[#allocation2] sm:$0x1]
  %295 = vset.pattern.permute.xlu0 0
  %296 = vperm.xlu0 %295, %v293
  %v297 = vpop.permute.xlu0 %296
  %v299 = vlaneseq
  %v300 = vshrl.u32 %v299, 7
  %v301 = vsub.s32 0, %v300
  %v302 = vrot.slane %v297, %v301
  %303 = vmatprep.subr.mxu0 0.0
  %304 = vmatpush1.xpose.msra.mxu0 %v289
  %305 = vmatprep.subr.mxu0 0.0
  %306 = vmatpush1.xpose.msra.mxu0 %v290
  %307 = vmatprep.subr.mxu0 0.0
  %308 = vmatpush1.xpose.msra.mxu0 %v291
  %309 = vmatprep.subr.mxu0 0.0
  %310 = vmatpush1.xpose.msra.mxu0 0.0
  %311 = vmatprep.subr.mxu0 0.0
  %312 = vmatpush1.xpose.msra.mxu0 0.0
  %313 = vmatprep.subr.mxu0 0.0
  %314 = vmatpush1.xpose.msra.mxu0 0.0
  %315 = vmatprep.subr.mxu0 0.0
  %316 = vmatpush1.xpose.msra.mxu0 0.0
  %317 = vmatprep.subr.mxu0 0.0
  %318 = vmatpush1.xpose.msra.mxu0 0.0
  %319 = vmatprep.subr.mxu0 0.0
  %320 = vmatpush1.xpose.msra.mxu0 0.0
  %321 = vmatprep.subr.mxu0 0.0
  %322 = vmatpush1.xpose.msra.mxu0 0.0
  %323 = vmatprep.subr.mxu0 0.0
  %324 = vmatpush1.xpose.msra.mxu0 0.0
  %325 = vmatprep.subr.mxu0 0.0
  %326 = vmatpush1.xpose.msra.mxu0 0.0
  %327 = vmatprep.subr.mxu0 0.0
  %328 = vmatpush1.xpose.msra.mxu0 0.0
  %329 = vmatprep.subr.mxu0 0.0
  %330 = vmatpush1.xpose.msra.mxu0 0.0
  %331 = vmatprep.subr.mxu0 0.0
  %332 = vmatpush1.xpose.msra.mxu0 0.0
  %333 = vmatprep.subr.mxu0 0.0
  %334 = vmatpush1.xpose.msra.mxu0 0.0
  %335 = vmatprep.subr.mxu0 0.0
  %336 = vmatpush1.xpose.msra.mxu0 0.0
  %337 = vmatprep.subr.mxu0 0.0
  %338 = vmatpush1.xpose.msra.mxu0 0.0
  %339 = vmatprep.subr.mxu0 0.0
  %340 = vmatpush1.xpose.msra.mxu0 0.0
  %341 = vmatprep.subr.mxu0 0.0
  %342 = vmatpush1.xpose.msra.mxu0 0.0
  %343 = vmatprep.subr.mxu0 0.0
  %344 = vmatpush1.xpose.msra.mxu0 0.0
  %345 = vmatprep.subr.mxu0 0.0
  %346 = vmatpush1.xpose.msra.mxu0 0.0
  %347 = vmatprep.subr.mxu0 0.0
  %348 = vmatpush1.xpose.msra.mxu0 0.0
  %349 = vmatprep.subr.mxu0 0.0
  %350 = vmatpush1.xpose.msra.mxu0 0.0
  %351 = vmatprep.subr.mxu0 0.0
  %352 = vmatpush1.xpose.msra.mxu0 0.0
  %353 = vmatprep.subr.mxu0 0.0
  %354 = vmatpush1.xpose.msra.mxu0 0.0
  %355 = vmatprep.subr.mxu0 0.0
  %356 = vmatpush1.xpose.msra.mxu0 0.0
  %357 = vmatprep.subr.mxu0 0.0
  %358 = vmatpush1.xpose.msra.mxu0 0.0
  %359 = vmatprep.subr.mxu0 0.0
  %360 = vmatpush1.xpose.msra.mxu0 0.0
  %361 = vmatprep.subr.mxu0 0.0
  %362 = vmatpush1.xpose.msra.mxu0 0.0
  %363 = vmatprep.subr.mxu0 0.0
  %364 = vmatpush1.xpose.msra.mxu0 0.0
  %365 = vmatprep.subr.mxu0 0.0
  %366 = vmatpush1.xpose.msra.mxu0 0.0
  %367 = vmatprep.mubr.f32.mxu0 0.0
  %368 = vmatmul.mubr.f32.gmra.mrb[0].mxu0 %v292
  %v369 = vpop.f32.mrb[0].mxu0
  %v370 = vadd.f32 %v302, %v369
  %v371 = vpop.f32.mrb[0].mxu0
  %372 = vdwg.mxu0
  %vm373 = vcmask 188416
  %374 = vst.msk [vmem:[%s7] sm:$0x1] %vm373, %v370
  // Predicated region
  $region30: #{hetero_gnn_forward.11} parent=0 // pred_check
    _
  $region31: #{hetero_gnn_forward.11} parent=0 // pred_check_branch
    %376 = sbr.rel (0) target = $region33
  $region32: #{hetero_gnn_forward.11} parent=0 // pred_region
    _
  $region33: #{hetero_gnn_forward.11} parent=0 // pred_fallthru
    _
  // Predicated region
  $region34: #{hetero_gnn_forward.11} parent=0 // pred_check
    _
  $region35: #{hetero_gnn_forward.11} parent=0 // pred_check_branch
    %378 = sbr.rel (0) target = $region37
  $region36: #{hetero_gnn_forward.11} parent=0 // pred_region
    _
  $region37: #{hetero_gnn_forward.11} parent=0 // pred_fallthru
    _

</llo_original>
